<compile_context>
chip_gen: v5e
topology: v5e:2x2
jax: 0.10.0
libtpu: 0.0.40
codegen_flags: <defaults>
</compile_context>

<pallas_src>
import functools

import jax
import jax.numpy as jnp
from jax.experimental import pallas as pl
from jax.experimental.pallas import tpu as pltpu


# ----------------------------- Pallas kernel --------------------------------
def _lstm_kernel(x_ref, wih0_ref, b0_ref, whh0_ref, wih1_ref, whh1_ref, b1_ref,
                 wfc_ref, bfc_ref, out_ref, *, hidden, seq_len):
    """Full 2-layer LSTM recurrence + final fc in a single invocation.

    x_ref   : (T, B, 1)   raw input (feature size 1), batch padded
    wih0_ref: (1, 4H)     layer-0 input-weight row (I == 1)
    b0_ref  : (1, 4H)     layer-0 fused bias (b_ih + b_hh)
    whh0_ref: (H, 4H)     layer-0 recurrent weights
    wih1_ref: (H, 4H)     layer-1 input weights
    whh1_ref: (H, 4H)     layer-1 recurrent weights
    b1_ref  : (1, 4H)     layer-1 fused bias
    wfc_ref : (H, OUTP)   final fc weights (zero beyond col 0 / row H_real)
    bfc_ref : (1, OUTP)
    out_ref : (B, OUTP)
    Gate column order is (i, f, o, g); all shapes lane/sublane padded.
    """
    H = hidden
    B = x_ref.shape[1]

    whh0 = whh0_ref[...]                                    # (H, 4H)
    wih1 = wih1_ref[...]                                    # (H, 4H)
    whh1 = whh1_ref[...]                                    # (H, 4H)
    # Hoist broadcasts out of the unrolled time loop (no CSE for broadcasts).
    wih0_b = jnp.broadcast_to(wih0_ref[...], (B, 4 * H))    # (B, 4H)
    b0_b = jnp.broadcast_to(b0_ref[...], (B, 4 * H))
    b1_b = jnp.broadcast_to(b1_ref[...], (B, 4 * H))

    def gates_to_hc(gates, c):
        # gate order (i, f, o, g): one sigmoid over 3H lanes, one tanh over H.
        sig = jax.nn.sigmoid(gates[:, :3 * H])
        g_act = jnp.tanh(gates[:, 3 * H:])
        i_g = sig[:, 0 * H:1 * H]
        f_g = sig[:, 1 * H:2 * H]
        o_g = sig[:, 2 * H:3 * H]
        c_new = f_g * c + i_g * g_act
        h_new = o_g * jnp.tanh(c_new)
        return h_new, c_new

    zero = jnp.zeros((B, H), jnp.float32)
    h1, c1, h2, c2 = zero, zero, zero, zero

    # Fully unrolled recurrence (T is small and static).
    for t in range(seq_len):
        # Layer-1 partial product that only needs the PREVIOUS step's h2:
        # issue it first so its MXU work overlaps layer-0's activation math.
        g1_part = jnp.dot(h2, whh1, preferred_element_type=jnp.float32) + b1_b

        # Layer 0: I == 1, so the input projection is a VPU broadcast-FMA.
        g0 = (x_ref[t] * wih0_b + b0_b
              + jnp.dot(h1, whh0, preferred_element_type=jnp.float32))
        h1, c1 = gates_to_hc(g0, c1)

        # Layer 1: only a K = H matmul remains on the serial critical path.
        g1 = g1_part + jnp.dot(h1, wih1, preferred_element_type=jnp.float32)
        h2, c2 = gates_to_hc(g1, c2)

    # fc(out[:, -1, :]); padded rows/cols of wfc are zero so result is exact.
    out_ref[...] = (jnp.dot(h2, wfc_ref[...], preferred_element_type=jnp.float32)
                    + bfc_ref[...])


# ------------------------ Parameter prep (pad/permute) -----------------------
def _permute_pad_gate_rows(w, H, Hp):
    """(4H, ...) in PyTorch gate order (i,f,g,o) -> (4Hp, ...) in (i,f,o,g),
    each gate block zero-padded from H to Hp rows."""
    blocks = [w[0 * H:1 * H], w[1 * H:2 * H], w[3 * H:4 * H], w[2 * H:3 * H]]
    out = []
    for blk in blocks:
        padded = jnp.zeros((Hp,) + blk.shape[1:], blk.dtype).at[:H].set(blk)
        out.append(padded)
    return jnp.concatenate(out, axis=0)


def _pad_axis(w, axis, new_size):
    pads = [(0, 0)] * w.ndim
    pads[axis] = (0, new_size - w.shape[axis])
    return jnp.pad(w, pads)


def prepare_kernel_params(raw, *, hidden, hidden_pad, out_pad=128):
    H, Hp = hidden, hidden_pad
    pp = lambda w: _permute_pad_gate_rows(w, H, Hp)

    wih0 = pp(raw["w_ih_l0"]).T                                   # (1, 4Hp)
    whh0 = _pad_axis(pp(raw["w_hh_l0"]), 1, Hp).T                 # (Hp, 4Hp)
    b0 = pp(raw["b_ih_l0"] + raw["b_hh_l0"])[None, :]             # (1, 4Hp)
    wih1 = _pad_axis(pp(raw["w_ih_l1"]), 1, Hp).T                 # (Hp, 4Hp)
    whh1 = _pad_axis(pp(raw["w_hh_l1"]), 1, Hp).T                 # (Hp, 4Hp)
    b1 = pp(raw["b_ih_l1"] + raw["b_hh_l1"])[None, :]             # (1, 4Hp)

    wfc = jnp.zeros((Hp, out_pad), jnp.float32).at[:H, :1].set(raw["w_fc"].T)
    bfc = jnp.zeros((1, out_pad), jnp.float32).at[:, :1].set(raw["b_fc"][None, :])
    return dict(wih0=wih0, b0=b0, whh0=whh0, wih1=wih1, whh1=whh1, b1=b1,
                wfc=wfc, bfc=bfc)


# --------------------------------- Wrapper -----------------------------------
def make_stock_lstm_forward(raw_params, *, hidden=50, hidden_pad=128,
                            out_pad=128):
    """Prepare (pad/permute/transpose) parameters ONCE, return a jitted forward."""
    kp = prepare_kernel_params(raw_params, hidden=hidden, hidden_pad=hidden_pad,
                               out_pad=out_pad)

    @jax.jit
    def forward(x):
        """x: (B, T, 1) float32, batch_first like nn.LSTM(batch_first=True)."""
        B, T, _ = x.shape
        Bp = max(8, -(-B // 8) * 8)            # pad batch to a sublane multiple

        # Time-major, batch padded; feature dim stays 1 (handled in-kernel).
        x_tm = jnp.transpose(x, (1, 0, 2))                       # (T, B, 1)
        x_tm = jnp.pad(x_tm, ((0, 0), (0, Bp - B), (0, 0)))      # (T, Bp, 1)

        args = (x_tm, kp["wih0"], kp["b0"], kp["whh0"], kp["wih1"],
                kp["whh1"], kp["b1"], kp["wfc"], kp["bfc"])

        # Grid-free call: everything whole-array VMEM resident (~1 MiB), no
        # pipelining / double-buffering needed.
        vmem_spec = pl.BlockSpec(memory_space=pltpu.MemorySpace.VMEM)
        kernel = functools.partial(_lstm_kernel, hidden=hidden_pad, seq_len=T)
        out_p = pl.pallas_call(
            kernel,
            out_shape=jax.ShapeDtypeStruct((Bp, out_pad), jnp.float32),
            in_specs=[vmem_spec] * len(args),
            out_specs=vmem_spec,
        )(*args)
        return out_p[:B, :1]

    return forward


# --------------------------- Parameter creation ------------------------------
def init_params(key, input_size=1, hidden_size=50):
    """Raw parameters in PyTorch layout: weight_ih (4H, in), weight_hh (4H, H)."""
    H, I = hidden_size, input_size
    k = 1.0 / jnp.sqrt(H)
    keys = jax.random.split(key, 10)

    def u(kk, shape):
        return jax.random.uniform(kk, shape, jnp.float32, -k, k)

    return dict(
        w_ih_l0=u(keys[0], (4 * H, I)),
        w_hh_l0=u(keys[1], (4 * H, H)),
        b_ih_l0=u(keys[2], (4 * H,)),
        b_hh_l0=u(keys[3], (4 * H,)),
        w_ih_l1=u(keys[4], (4 * H, H)),
        w_hh_l1=u(keys[5], (4 * H, H)),
        b_ih_l1=u(keys[6], (4 * H,)),
        b_hh_l1=u(keys[7], (4 * H,)),
        w_fc=jax.random.uniform(keys[8], (1, H), jnp.float32, -k, k),
        b_fc=jax.random.uniform(keys[9], (1,), jnp.float32, -k, k),
    )


# --------------------------- Pure-JAX reference ------------------------------
def reference_forward(x, raw, *, hidden=50):
    B, T, I = x.shape
    H = hidden
    wih0, whh0 = raw["w_ih_l0"].T, raw["w_hh_l0"].T
    b0 = (raw["b_ih_l0"] + raw["b_hh_l0"])[None, :]
    wih1, whh1 = raw["w_ih_l1"].T, raw["w_hh_l1"].T
    b1 = (raw["b_ih_l1"] + raw["b_hh_l1"])[None, :]

    def cell(x_in, h, c, wih, whh, b):
        g = x_in @ wih + h @ whh + b
        i = jax.nn.sigmoid(g[:, :H])
        f = jax.nn.sigmoid(g[:, H:2 * H])
        gg = jnp.tanh(g[:, 2 * H:3 * H])
        o = jax.nn.sigmoid(g[:, 3 * H:])
        c = f * c + i * gg
        h = o * jnp.tanh(c)
        return h, c

    def step(carry, x_t):
        h1, c1, h2, c2 = carry
        h1, c1 = cell(x_t, h1, c1, wih0, whh0, b0)
        h2, c2 = cell(h1, h2, c2, wih1, whh1, b1)
        return (h1, c1, h2, c2), None

    init = tuple(jnp.zeros((B, H), jnp.float32) for _ in range(4))
    (_, _, h2, _), _ = jax.lax.scan(step, init, jnp.transpose(x, (1, 0, 2)))
    return h2 @ raw["w_fc"].T + raw["b_fc"][None, :]


# ---------------------------------- Main -------------------------------------
if __name__ == "__main__":
    B, T, I, H = 4, 8, 1, 50
    key = jax.random.PRNGKey(0)
    k_x, k_p = jax.random.split(key)
    x = jax.random.normal(k_x, (B, T, I), jnp.float32)
    raw = init_params(k_p, input_size=I, hidden_size=H)

    forward = make_stock_lstm_forward(raw, hidden=H)
    out = jax.block_until_ready(forward(x))
    ref = jax.block_until_ready(reference_forward(x, raw, hidden=H))

    assert out.shape == (B, 1)
    # Tolerance accounts for MXU f32 matmul lowering precision (bf16 passes).
    assert jnp.allclose(out, ref, atol=5e-3, rtol=5e-3), (out, ref)
    print("KERNEL_OK")
</pallas_src>

<mosaic_0001>
module attributes {stable_mosaic.version = 11 : i64} {
  func.func @_lstm_kernel(%arg0: memref<8x8x1xf32, #tpu.memory_space<vmem>>, %arg1: memref<1x512xf32, #tpu.memory_space<vmem>>, %arg2: memref<1x512xf32, #tpu.memory_space<vmem>>, %arg3: memref<128x512xf32, #tpu.memory_space<vmem>>, %arg4: memref<128x512xf32, #tpu.memory_space<vmem>>, %arg5: memref<128x512xf32, #tpu.memory_space<vmem>>, %arg6: memref<1x512xf32, #tpu.memory_space<vmem>>, %arg7: memref<128x128xf32, #tpu.memory_space<vmem>>, %arg8: memref<1x128xf32, #tpu.memory_space<vmem>>, %arg9: memref<8x128xf32, #tpu.memory_space<vmem>>) attributes {dimension_semantics = [], scalar_prefetch = 0 : i64, scratch_operands = 0 : i64, tpu.core_type = #tpu.core_type<tc>} {
    %c0 = arith.constant 0 : index
    %c0_0 = arith.constant 0 : index
    %0 = vector.load %arg3[%c0, %c0_0] : memref<128x512xf32, #tpu.memory_space<vmem>>, vector<128x512xf32>
    %c0_1 = arith.constant 0 : index
    %c0_2 = arith.constant 0 : index
    %1 = vector.load %arg4[%c0_1, %c0_2] : memref<128x512xf32, #tpu.memory_space<vmem>>, vector<128x512xf32>
    %c0_3 = arith.constant 0 : index
    %c0_4 = arith.constant 0 : index
    %2 = vector.load %arg5[%c0_3, %c0_4] : memref<128x512xf32, #tpu.memory_space<vmem>>, vector<128x512xf32>
    %c0_5 = arith.constant 0 : index
    %c0_6 = arith.constant 0 : index
    %3 = vector.load %arg1[%c0_5, %c0_6] : memref<1x512xf32, #tpu.memory_space<vmem>>, vector<1x512xf32>
    %4 = vector.shape_cast %3 : vector<1x512xf32> to vector<1x512xf32>
    %5 = vector.broadcast %4 : vector<1x512xf32> to vector<8x512xf32>
    %c0_7 = arith.constant 0 : index
    %c0_8 = arith.constant 0 : index
    %6 = vector.load %arg2[%c0_7, %c0_8] : memref<1x512xf32, #tpu.memory_space<vmem>>, vector<1x512xf32>
    %7 = vector.shape_cast %6 : vector<1x512xf32> to vector<1x512xf32>
    %8 = vector.broadcast %7 : vector<1x512xf32> to vector<8x512xf32>
    %c0_9 = arith.constant 0 : index
    %c0_10 = arith.constant 0 : index
    %9 = vector.load %arg6[%c0_9, %c0_10] : memref<1x512xf32, #tpu.memory_space<vmem>>, vector<1x512xf32>
    %10 = vector.shape_cast %9 : vector<1x512xf32> to vector<1x512xf32>
    %11 = vector.broadcast %10 : vector<1x512xf32> to vector<8x512xf32>
    %cst = arith.constant 0.000000e+00 : f32
    %12 = vector.broadcast %cst : f32 to vector<8x128xf32>
    %cst_11 = arith.constant dense<0.000000e+00> : vector<8x512xf32>
    %13 = tpu.matmul %12, %2, %cst_11 {dimension_numbers = #tpu.dot_dimension_numbers<[1], [0], [0], [1], [0, 0, 1, 1], [], []>} : vector<8x128xf32>, vector<128x512xf32>, vector<8x512xf32> -> vector<8x512xf32>
    %14 = arith.addf %13, %11 : vector<8x512xf32>
    %c0_12 = arith.constant 0 : index
    %c0_13 = arith.constant 0 : index
    %c0_14 = arith.constant 0 : index
    %15 = vector.load %arg0[%c0_12, %c0_13, %c0_14] : memref<8x8x1xf32, #tpu.memory_space<vmem>>, vector<1x8x1xf32>
    %16 = vector.shape_cast %15 : vector<1x8x1xf32> to vector<8x1xf32>
    %17 = vector.broadcast %16 : vector<8x1xf32> to vector<8x512xf32>
    %18 = arith.mulf %17, %5 : vector<8x512xf32>
    %19 = arith.addf %18, %8 : vector<8x512xf32>
    %cst_15 = arith.constant dense<0.000000e+00> : vector<8x512xf32>
    %20 = tpu.matmul %12, %0, %cst_15 {dimension_numbers = #tpu.dot_dimension_numbers<[1], [0], [0], [1], [0, 0, 1, 1], [], []>} : vector<8x128xf32>, vector<128x512xf32>, vector<8x512xf32> -> vector<8x512xf32>
    %21 = arith.addf %19, %20 : vector<8x512xf32>
    %22 = vector.extract_strided_slice %21 {offsets = [0, 0], sizes = [8, 384], strides = [1, 1]} : vector<8x512xf32> to vector<8x384xf32>
    %23 = arith.negf %22 : vector<8x384xf32>
    %24 = math.exp %23 : vector<8x384xf32>
    %cst_16 = arith.constant 1.000000e+00 : f32
    %25 = vector.broadcast %cst_16 : f32 to vector<8x384xf32>
    %26 = arith.addf %25, %24 : vector<8x384xf32>
    %27 = arith.divf %25, %26 : vector<8x384xf32>
    %28 = vector.extract_strided_slice %21 {offsets = [0, 384], sizes = [8, 128], strides = [1, 1]} : vector<8x512xf32> to vector<8x128xf32>
    %29 = math.tanh %28 : vector<8x128xf32>
    %30 = vector.extract_strided_slice %27 {offsets = [0, 0], sizes = [8, 128], strides = [1, 1]} : vector<8x384xf32> to vector<8x128xf32>
    %31 = vector.extract_strided_slice %27 {offsets = [0, 128], sizes = [8, 128], strides = [1, 1]} : vector<8x384xf32> to vector<8x128xf32>
    %32 = vector.extract_strided_slice %27 {offsets = [0, 256], sizes = [8, 128], strides = [1, 1]} : vector<8x384xf32> to vector<8x128xf32>
    %33 = arith.mulf %31, %12 : vector<8x128xf32>
    %34 = arith.mulf %30, %29 : vector<8x128xf32>
    %35 = arith.addf %33, %34 : vector<8x128xf32>
    %36 = math.tanh %35 : vector<8x128xf32>
    %37 = arith.mulf %32, %36 : vector<8x128xf32>
    %cst_17 = arith.constant dense<0.000000e+00> : vector<8x512xf32>
    %38 = tpu.matmul %37, %1, %cst_17 {dimension_numbers = #tpu.dot_dimension_numbers<[1], [0], [0], [1], [0, 0, 1, 1], [], []>} : vector<8x128xf32>, vector<128x512xf32>, vector<8x512xf32> -> vector<8x512xf32>
    %39 = arith.addf %14, %38 : vector<8x512xf32>
    %40 = vector.extract_strided_slice %39 {offsets = [0, 0], sizes = [8, 384], strides = [1, 1]} : vector<8x512xf32> to vector<8x384xf32>
    %41 = arith.negf %40 : vector<8x384xf32>
    %42 = math.exp %41 : vector<8x384xf32>
    %cst_18 = arith.constant 1.000000e+00 : f32
    %43 = vector.broadcast %cst_18 : f32 to vector<8x384xf32>
    %44 = arith.addf %43, %42 : vector<8x384xf32>
    %45 = arith.divf %43, %44 : vector<8x384xf32>
    %46 = vector.extract_strided_slice %39 {offsets = [0, 384], sizes = [8, 128], strides = [1, 1]} : vector<8x512xf32> to vector<8x128xf32>
    %47 = math.tanh %46 : vector<8x128xf32>
    %48 = vector.extract_strided_slice %45 {offsets = [0, 0], sizes = [8, 128], strides = [1, 1]} : vector<8x384xf32> to vector<8x128xf32>
    %49 = vector.extract_strided_slice %45 {offsets = [0, 128], sizes = [8, 128], strides = [1, 1]} : vector<8x384xf32> to vector<8x128xf32>
    %50 = vector.extract_strided_slice %45 {offsets = [0, 256], sizes = [8, 128], strides = [1, 1]} : vector<8x384xf32> to vector<8x128xf32>
    %51 = arith.mulf %49, %12 : vector<8x128xf32>
    %52 = arith.mulf %48, %47 : vector<8x128xf32>
    %53 = arith.addf %51, %52 : vector<8x128xf32>
    %54 = math.tanh %53 : vector<8x128xf32>
    %55 = arith.mulf %50, %54 : vector<8x128xf32>
    %cst_19 = arith.constant dense<0.000000e+00> : vector<8x512xf32>
    %56 = tpu.matmul %55, %2, %cst_19 {dimension_numbers = #tpu.dot_dimension_numbers<[1], [0], [0], [1], [0, 0, 1, 1], [], []>} : vector<8x128xf32>, vector<128x512xf32>, vector<8x512xf32> -> vector<8x512xf32>
    %57 = arith.addf %56, %11 : vector<8x512xf32>
    %c1 = arith.constant 1 : index
    %c0_20 = arith.constant 0 : index
    %c0_21 = arith.constant 0 : index
    %58 = vector.load %arg0[%c1, %c0_20, %c0_21] : memref<8x8x1xf32, #tpu.memory_space<vmem>>, vector<1x8x1xf32>
    %59 = vector.shape_cast %58 : vector<1x8x1xf32> to vector<8x1xf32>
    %60 = vector.broadcast %59 : vector<8x1xf32> to vector<8x512xf32>
    %61 = arith.mulf %60, %5 : vector<8x512xf32>
    %62 = arith.addf %61, %8 : vector<8x512xf32>
    %cst_22 = arith.constant dense<0.000000e+00> : vector<8x512xf32>
    %63 = tpu.matmul %37, %0, %cst_22 {dimension_numbers = #tpu.dot_dimension_numbers<[1], [0], [0], [1], [0, 0, 1, 1], [], []>} : vector<8x128xf32>, vector<128x512xf32>, vector<8x512xf32> -> vector<8x512xf32>
    %64 = arith.addf %62, %63 : vector<8x512xf32>
    %65 = vector.extract_strided_slice %64 {offsets = [0, 0], sizes = [8, 384], strides = [1, 1]} : vector<8x512xf32> to vector<8x384xf32>
    %66 = arith.negf %65 : vector<8x384xf32>
    %67 = math.exp %66 : vector<8x384xf32>
    %cst_23 = arith.constant 1.000000e+00 : f32
    %68 = vector.broadcast %cst_23 : f32 to vector<8x384xf32>
    %69 = arith.addf %68, %67 : vector<8x384xf32>
    %70 = arith.divf %68, %69 : vector<8x384xf32>
    %71 = vector.extract_strided_slice %64 {offsets = [0, 384], sizes = [8, 128], strides = [1, 1]} : vector<8x512xf32> to vector<8x128xf32>
    %72 = math.tanh %71 : vector<8x128xf32>
    %73 = vector.extract_strided_slice %70 {offsets = [0, 0], sizes = [8, 128], strides = [1, 1]} : vector<8x384xf32> to vector<8x128xf32>
    %74 = vector.extract_strided_slice %70 {offsets = [0, 128], sizes = [8, 128], strides = [1, 1]} : vector<8x384xf32> to vector<8x128xf32>
    %75 = vector.extract_strided_slice %70 {offsets = [0, 256], sizes = [8, 128], strides = [1, 1]} : vector<8x384xf32> to vector<8x128xf32>
    %76 = arith.mulf %74, %35 : vector<8x128xf32>
    %77 = arith.mulf %73, %72 : vector<8x128xf32>
    %78 = arith.addf %76, %77 : vector<8x128xf32>
    %79 = math.tanh %78 : vector<8x128xf32>
    %80 = arith.mulf %75, %79 : vector<8x128xf32>
    %cst_24 = arith.constant dense<0.000000e+00> : vector<8x512xf32>
    %81 = tpu.matmul %80, %1, %cst_24 {dimension_numbers = #tpu.dot_dimension_numbers<[1], [0], [0], [1], [0, 0, 1, 1], [], []>} : vector<8x128xf32>, vector<128x512xf32>, vector<8x512xf32> -> vector<8x512xf32>
    %82 = arith.addf %57, %81 : vector<8x512xf32>
    %83 = vector.extract_strided_slice %82 {offsets = [0, 0], sizes = [8, 384], strides = [1, 1]} : vector<8x512xf32> to vector<8x384xf32>
    %84 = arith.negf %83 : vector<8x384xf32>
    %85 = math.exp %84 : vector<8x384xf32>
    %cst_25 = arith.constant 1.000000e+00 : f32
    %86 = vector.broadcast %cst_25 : f32 to vector<8x384xf32>
    %87 = arith.addf %86, %85 : vector<8x384xf32>
    %88 = arith.divf %86, %87 : vector<8x384xf32>
    %89 = vector.extract_strided_slice %82 {offsets = [0, 384], sizes = [8, 128], strides = [1, 1]} : vector<8x512xf32> to vector<8x128xf32>
    %90 = math.tanh %89 : vector<8x128xf32>
    %91 = vector.extract_strided_slice %88 {offsets = [0, 0], sizes = [8, 128], strides = [1, 1]} : vector<8x384xf32> to vector<8x128xf32>
    %92 = vector.extract_strided_slice %88 {offsets = [0, 128], sizes = [8, 128], strides = [1, 1]} : vector<8x384xf32> to vector<8x128xf32>
    %93 = vector.extract_strided_slice %88 {offsets = [0, 256], sizes = [8, 128], strides = [1, 1]} : vector<8x384xf32> to vector<8x128xf32>
    %94 = arith.mulf %92, %53 : vector<8x128xf32>
    %95 = arith.mulf %91, %90 : vector<8x128xf32>
    %96 = arith.addf %94, %95 : vector<8x128xf32>
    %97 = math.tanh %96 : vector<8x128xf32>
    %98 = arith.mulf %93, %97 : vector<8x128xf32>
    %cst_26 = arith.constant dense<0.000000e+00> : vector<8x512xf32>
    %99 = tpu.matmul %98, %2, %cst_26 {dimension_numbers = #tpu.dot_dimension_numbers<[1], [0], [0], [1], [0, 0, 1, 1], [], []>} : vector<8x128xf32>, vector<128x512xf32>, vector<8x512xf32> -> vector<8x512xf32>
    %100 = arith.addf %99, %11 : vector<8x512xf32>
    %c2 = arith.constant 2 : index
    %c0_27 = arith.constant 0 : index
    %c0_28 = arith.constant 0 : index
    %101 = vector.load %arg0[%c2, %c0_27, %c0_28] : memref<8x8x1xf32, #tpu.memory_space<vmem>>, vector<1x8x1xf32>
    %102 = vector.shape_cast %101 : vector<1x8x1xf32> to vector<8x1xf32>
    %103 = vector.broadcast %102 : vector<8x1xf32> to vector<8x512xf32>
    %104 = arith.mulf %103, %5 : vector<8x512xf32>
    %105 = arith.addf %104, %8 : vector<8x512xf32>
    %cst_29 = arith.constant dense<0.000000e+00> : vector<8x512xf32>
    %106 = tpu.matmul %80, %0, %cst_29 {dimension_numbers = #tpu.dot_dimension_numbers<[1], [0], [0], [1], [0, 0, 1, 1], [], []>} : vector<8x128xf32>, vector<128x512xf32>, vector<8x512xf32> -> vector<8x512xf32>
    %107 = arith.addf %105, %106 : vector<8x512xf32>
    %108 = vector.extract_strided_slice %107 {offsets = [0, 0], sizes = [8, 384], strides = [1, 1]} : vector<8x512xf32> to vector<8x384xf32>
    %109 = arith.negf %108 : vector<8x384xf32>
    %110 = math.exp %109 : vector<8x384xf32>
    %cst_30 = arith.constant 1.000000e+00 : f32
    %111 = vector.broadcast %cst_30 : f32 to vector<8x384xf32>
    %112 = arith.addf %111, %110 : vector<8x384xf32>
    %113 = arith.divf %111, %112 : vector<8x384xf32>
    %114 = vector.extract_strided_slice %107 {offsets = [0, 384], sizes = [8, 128], strides = [1, 1]} : vector<8x512xf32> to vector<8x128xf32>
    %115 = math.tanh %114 : vector<8x128xf32>
    %116 = vector.extract_strided_slice %113 {offsets = [0, 0], sizes = [8, 128], strides = [1, 1]} : vector<8x384xf32> to vector<8x128xf32>
    %117 = vector.extract_strided_slice %113 {offsets = [0, 128], sizes = [8, 128], strides = [1, 1]} : vector<8x384xf32> to vector<8x128xf32>
    %118 = vector.extract_strided_slice %113 {offsets = [0, 256], sizes = [8, 128], strides = [1, 1]} : vector<8x384xf32> to vector<8x128xf32>
    %119 = arith.mulf %117, %78 : vector<8x128xf32>
    %120 = arith.mulf %116, %115 : vector<8x128xf32>
    %121 = arith.addf %119, %120 : vector<8x128xf32>
    %122 = math.tanh %121 : vector<8x128xf32>
    %123 = arith.mulf %118, %122 : vector<8x128xf32>
    %cst_31 = arith.constant dense<0.000000e+00> : vector<8x512xf32>
    %124 = tpu.matmul %123, %1, %cst_31 {dimension_numbers = #tpu.dot_dimension_numbers<[1], [0], [0], [1], [0, 0, 1, 1], [], []>} : vector<8x128xf32>, vector<128x512xf32>, vector<8x512xf32> -> vector<8x512xf32>
    %125 = arith.addf %100, %124 : vector<8x512xf32>
    %126 = vector.extract_strided_slice %125 {offsets = [0, 0], sizes = [8, 384], strides = [1, 1]} : vector<8x512xf32> to vector<8x384xf32>
    %127 = arith.negf %126 : vector<8x384xf32>
    %128 = math.exp %127 : vector<8x384xf32>
    %cst_32 = arith.constant 1.000000e+00 : f32
    %129 = vector.broadcast %cst_32 : f32 to vector<8x384xf32>
    %130 = arith.addf %129, %128 : vector<8x384xf32>
    %131 = arith.divf %129, %130 : vector<8x384xf32>
    %132 = vector.extract_strided_slice %125 {offsets = [0, 384], sizes = [8, 128], strides = [1, 1]} : vector<8x512xf32> to vector<8x128xf32>
    %133 = math.tanh %132 : vector<8x128xf32>
    %134 = vector.extract_strided_slice %131 {offsets = [0, 0], sizes = [8, 128], strides = [1, 1]} : vector<8x384xf32> to vector<8x128xf32>
    %135 = vector.extract_strided_slice %131 {offsets = [0, 128], sizes = [8, 128], strides = [1, 1]} : vector<8x384xf32> to vector<8x128xf32>
    %136 = vector.extract_strided_slice %131 {offsets = [0, 256], sizes = [8, 128], strides = [1, 1]} : vector<8x384xf32> to vector<8x128xf32>
    %137 = arith.mulf %135, %96 : vector<8x128xf32>
    %138 = arith.mulf %134, %133 : vector<8x128xf32>
    %139 = arith.addf %137, %138 : vector<8x128xf32>
    %140 = math.tanh %139 : vector<8x128xf32>
    %141 = arith.mulf %136, %140 : vector<8x128xf32>
    %cst_33 = arith.constant dense<0.000000e+00> : vector<8x512xf32>
    %142 = tpu.matmul %141, %2, %cst_33 {dimension_numbers = #tpu.dot_dimension_numbers<[1], [0], [0], [1], [0, 0, 1, 1], [], []>} : vector<8x128xf32>, vector<128x512xf32>, vector<8x512xf32> -> vector<8x512xf32>
    %143 = arith.addf %142, %11 : vector<8x512xf32>
    %c3 = arith.constant 3 : index
    %c0_34 = arith.constant 0 : index
    %c0_35 = arith.constant 0 : index
    %144 = vector.load %arg0[%c3, %c0_34, %c0_35] : memref<8x8x1xf32, #tpu.memory_space<vmem>>, vector<1x8x1xf32>
    %145 = vector.shape_cast %144 : vector<1x8x1xf32> to vector<8x1xf32>
    %146 = vector.broadcast %145 : vector<8x1xf32> to vector<8x512xf32>
    %147 = arith.mulf %146, %5 : vector<8x512xf32>
    %148 = arith.addf %147, %8 : vector<8x512xf32>
    %cst_36 = arith.constant dense<0.000000e+00> : vector<8x512xf32>
    %149 = tpu.matmul %123, %0, %cst_36 {dimension_numbers = #tpu.dot_dimension_numbers<[1], [0], [0], [1], [0, 0, 1, 1], [], []>} : vector<8x128xf32>, vector<128x512xf32>, vector<8x512xf32> -> vector<8x512xf32>
    %150 = arith.addf %148, %149 : vector<8x512xf32>
    %151 = vector.extract_strided_slice %150 {offsets = [0, 0], sizes = [8, 384], strides = [1, 1]} : vector<8x512xf32> to vector<8x384xf32>
    %152 = arith.negf %151 : vector<8x384xf32>
    %153 = math.exp %152 : vector<8x384xf32>
    %cst_37 = arith.constant 1.000000e+00 : f32
    %154 = vector.broadcast %cst_37 : f32 to vector<8x384xf32>
    %155 = arith.addf %154, %153 : vector<8x384xf32>
    %156 = arith.divf %154, %155 : vector<8x384xf32>
    %157 = vector.extract_strided_slice %150 {offsets = [0, 384], sizes = [8, 128], strides = [1, 1]} : vector<8x512xf32> to vector<8x128xf32>
    %158 = math.tanh %157 : vector<8x128xf32>
    %159 = vector.extract_strided_slice %156 {offsets = [0, 0], sizes = [8, 128], strides = [1, 1]} : vector<8x384xf32> to vector<8x128xf32>
    %160 = vector.extract_strided_slice %156 {offsets = [0, 128], sizes = [8, 128], strides = [1, 1]} : vector<8x384xf32> to vector<8x128xf32>
    %161 = vector.extract_strided_slice %156 {offsets = [0, 256], sizes = [8, 128], strides = [1, 1]} : vector<8x384xf32> to vector<8x128xf32>
    %162 = arith.mulf %160, %121 : vector<8x128xf32>
    %163 = arith.mulf %159, %158 : vector<8x128xf32>
    %164 = arith.addf %162, %163 : vector<8x128xf32>
    %165 = math.tanh %164 : vector<8x128xf32>
    %166 = arith.mulf %161, %165 : vector<8x128xf32>
    %cst_38 = arith.constant dense<0.000000e+00> : vector<8x512xf32>
    %167 = tpu.matmul %166, %1, %cst_38 {dimension_numbers = #tpu.dot_dimension_numbers<[1], [0], [0], [1], [0, 0, 1, 1], [], []>} : vector<8x128xf32>, vector<128x512xf32>, vector<8x512xf32> -> vector<8x512xf32>
    %168 = arith.addf %143, %167 : vector<8x512xf32>
    %169 = vector.extract_strided_slice %168 {offsets = [0, 0], sizes = [8, 384], strides = [1, 1]} : vector<8x512xf32> to vector<8x384xf32>
    %170 = arith.negf %169 : vector<8x384xf32>
    %171 = math.exp %170 : vector<8x384xf32>
    %cst_39 = arith.constant 1.000000e+00 : f32
    %172 = vector.broadcast %cst_39 : f32 to vector<8x384xf32>
    %173 = arith.addf %172, %171 : vector<8x384xf32>
    %174 = arith.divf %172, %173 : vector<8x384xf32>
    %175 = vector.extract_strided_slice %168 {offsets = [0, 384], sizes = [8, 128], strides = [1, 1]} : vector<8x512xf32> to vector<8x128xf32>
    %176 = math.tanh %175 : vector<8x128xf32>
    %177 = vector.extract_strided_slice %174 {offsets = [0, 0], sizes = [8, 128], strides = [1, 1]} : vector<8x384xf32> to vector<8x128xf32>
    %178 = vector.extract_strided_slice %174 {offsets = [0, 128], sizes = [8, 128], strides = [1, 1]} : vector<8x384xf32> to vector<8x128xf32>
    %179 = vector.extract_strided_slice %174 {offsets = [0, 256], sizes = [8, 128], strides = [1, 1]} : vector<8x384xf32> to vector<8x128xf32>
    %180 = arith.mulf %178, %139 : vector<8x128xf32>
    %181 = arith.mulf %177, %176 : vector<8x128xf32>
    %182 = arith.addf %180, %181 : vector<8x128xf32>
    %183 = math.tanh %182 : vector<8x128xf32>
    %184 = arith.mulf %179, %183 : vector<8x128xf32>
    %cst_40 = arith.constant dense<0.000000e+00> : vector<8x512xf32>
    %185 = tpu.matmul %184, %2, %cst_40 {dimension_numbers = #tpu.dot_dimension_numbers<[1], [0], [0], [1], [0, 0, 1, 1], [], []>} : vector<8x128xf32>, vector<128x512xf32>, vector<8x512xf32> -> vector<8x512xf32>
    %186 = arith.addf %185, %11 : vector<8x512xf32>
    %c4 = arith.constant 4 : index
    %c0_41 = arith.constant 0 : index
    %c0_42 = arith.constant 0 : index
    %187 = vector.load %arg0[%c4, %c0_41, %c0_42] : memref<8x8x1xf32, #tpu.memory_space<vmem>>, vector<1x8x1xf32>
    %188 = vector.shape_cast %187 : vector<1x8x1xf32> to vector<8x1xf32>
    %189 = vector.broadcast %188 : vector<8x1xf32> to vector<8x512xf32>
    %190 = arith.mulf %189, %5 : vector<8x512xf32>
    %191 = arith.addf %190, %8 : vector<8x512xf32>
    %cst_43 = arith.constant dense<0.000000e+00> : vector<8x512xf32>
    %192 = tpu.matmul %166, %0, %cst_43 {dimension_numbers = #tpu.dot_dimension_numbers<[1], [0], [0], [1], [0, 0, 1, 1], [], []>} : vector<8x128xf32>, vector<128x512xf32>, vector<8x512xf32> -> vector<8x512xf32>
    %193 = arith.addf %191, %192 : vector<8x512xf32>
    %194 = vector.extract_strided_slice %193 {offsets = [0, 0], sizes = [8, 384], strides = [1, 1]} : vector<8x512xf32> to vector<8x384xf32>
    %195 = arith.negf %194 : vector<8x384xf32>
    %196 = math.exp %195 : vector<8x384xf32>
    %cst_44 = arith.constant 1.000000e+00 : f32
    %197 = vector.broadcast %cst_44 : f32 to vector<8x384xf32>
    %198 = arith.addf %197, %196 : vector<8x384xf32>
    %199 = arith.divf %197, %198 : vector<8x384xf32>
    %200 = vector.extract_strided_slice %193 {offsets = [0, 384], sizes = [8, 128], strides = [1, 1]} : vector<8x512xf32> to vector<8x128xf32>
    %201 = math.tanh %200 : vector<8x128xf32>
    %202 = vector.extract_strided_slice %199 {offsets = [0, 0], sizes = [8, 128], strides = [1, 1]} : vector<8x384xf32> to vector<8x128xf32>
    %203 = vector.extract_strided_slice %199 {offsets = [0, 128], sizes = [8, 128], strides = [1, 1]} : vector<8x384xf32> to vector<8x128xf32>
    %204 = vector.extract_strided_slice %199 {offsets = [0, 256], sizes = [8, 128], strides = [1, 1]} : vector<8x384xf32> to vector<8x128xf32>
    %205 = arith.mulf %203, %164 : vector<8x128xf32>
    %206 = arith.mulf %202, %201 : vector<8x128xf32>
    %207 = arith.addf %205, %206 : vector<8x128xf32>
    %208 = math.tanh %207 : vector<8x128xf32>
    %209 = arith.mulf %204, %208 : vector<8x128xf32>
    %cst_45 = arith.constant dense<0.000000e+00> : vector<8x512xf32>
    %210 = tpu.matmul %209, %1, %cst_45 {dimension_numbers = #tpu.dot_dimension_numbers<[1], [0], [0], [1], [0, 0, 1, 1], [], []>} : vector<8x128xf32>, vector<128x512xf32>, vector<8x512xf32> -> vector<8x512xf32>
    %211 = arith.addf %186, %210 : vector<8x512xf32>
    %212 = vector.extract_strided_slice %211 {offsets = [0, 0], sizes = [8, 384], strides = [1, 1]} : vector<8x512xf32> to vector<8x384xf32>
    %213 = arith.negf %212 : vector<8x384xf32>
    %214 = math.exp %213 : vector<8x384xf32>
    %cst_46 = arith.constant 1.000000e+00 : f32
    %215 = vector.broadcast %cst_46 : f32 to vector<8x384xf32>
    %216 = arith.addf %215, %214 : vector<8x384xf32>
    %217 = arith.divf %215, %216 : vector<8x384xf32>
    %218 = vector.extract_strided_slice %211 {offsets = [0, 384], sizes = [8, 128], strides = [1, 1]} : vector<8x512xf32> to vector<8x128xf32>
    %219 = math.tanh %218 : vector<8x128xf32>
    %220 = vector.extract_strided_slice %217 {offsets = [0, 0], sizes = [8, 128], strides = [1, 1]} : vector<8x384xf32> to vector<8x128xf32>
    %221 = vector.extract_strided_slice %217 {offsets = [0, 128], sizes = [8, 128], strides = [1, 1]} : vector<8x384xf32> to vector<8x128xf32>
    %222 = vector.extract_strided_slice %217 {offsets = [0, 256], sizes = [8, 128], strides = [1, 1]} : vector<8x384xf32> to vector<8x128xf32>
    %223 = arith.mulf %221, %182 : vector<8x128xf32>
    %224 = arith.mulf %220, %219 : vector<8x128xf32>
    %225 = arith.addf %223, %224 : vector<8x128xf32>
    %226 = math.tanh %225 : vector<8x128xf32>
    %227 = arith.mulf %222, %226 : vector<8x128xf32>
    %cst_47 = arith.constant dense<0.000000e+00> : vector<8x512xf32>
    %228 = tpu.matmul %227, %2, %cst_47 {dimension_numbers = #tpu.dot_dimension_numbers<[1], [0], [0], [1], [0, 0, 1, 1], [], []>} : vector<8x128xf32>, vector<128x512xf32>, vector<8x512xf32> -> vector<8x512xf32>
    %229 = arith.addf %228, %11 : vector<8x512xf32>
    %c5 = arith.constant 5 : index
    %c0_48 = arith.constant 0 : index
    %c0_49 = arith.constant 0 : index
    %230 = vector.load %arg0[%c5, %c0_48, %c0_49] : memref<8x8x1xf32, #tpu.memory_space<vmem>>, vector<1x8x1xf32>
    %231 = vector.shape_cast %230 : vector<1x8x1xf32> to vector<8x1xf32>
    %232 = vector.broadcast %231 : vector<8x1xf32> to vector<8x512xf32>
    %233 = arith.mulf %232, %5 : vector<8x512xf32>
    %234 = arith.addf %233, %8 : vector<8x512xf32>
    %cst_50 = arith.constant dense<0.000000e+00> : vector<8x512xf32>
    %235 = tpu.matmul %209, %0, %cst_50 {dimension_numbers = #tpu.dot_dimension_numbers<[1], [0], [0], [1], [0, 0, 1, 1], [], []>} : vector<8x128xf32>, vector<128x512xf32>, vector<8x512xf32> -> vector<8x512xf32>
    %236 = arith.addf %234, %235 : vector<8x512xf32>
    %237 = vector.extract_strided_slice %236 {offsets = [0, 0], sizes = [8, 384], strides = [1, 1]} : vector<8x512xf32> to vector<8x384xf32>
    %238 = arith.negf %237 : vector<8x384xf32>
    %239 = math.exp %238 : vector<8x384xf32>
    %cst_51 = arith.constant 1.000000e+00 : f32
    %240 = vector.broadcast %cst_51 : f32 to vector<8x384xf32>
    %241 = arith.addf %240, %239 : vector<8x384xf32>
    %242 = arith.divf %240, %241 : vector<8x384xf32>
    %243 = vector.extract_strided_slice %236 {offsets = [0, 384], sizes = [8, 128], strides = [1, 1]} : vector<8x512xf32> to vector<8x128xf32>
    %244 = math.tanh %243 : vector<8x128xf32>
    %245 = vector.extract_strided_slice %242 {offsets = [0, 0], sizes = [8, 128], strides = [1, 1]} : vector<8x384xf32> to vector<8x128xf32>
    %246 = vector.extract_strided_slice %242 {offsets = [0, 128], sizes = [8, 128], strides = [1, 1]} : vector<8x384xf32> to vector<8x128xf32>
    %247 = vector.extract_strided_slice %242 {offsets = [0, 256], sizes = [8, 128], strides = [1, 1]} : vector<8x384xf32> to vector<8x128xf32>
    %248 = arith.mulf %246, %207 : vector<8x128xf32>
    %249 = arith.mulf %245, %244 : vector<8x128xf32>
    %250 = arith.addf %248, %249 : vector<8x128xf32>
    %251 = math.tanh %250 : vector<8x128xf32>
    %252 = arith.mulf %247, %251 : vector<8x128xf32>
    %cst_52 = arith.constant dense<0.000000e+00> : vector<8x512xf32>
    %253 = tpu.matmul %252, %1, %cst_52 {dimension_numbers = #tpu.dot_dimension_numbers<[1], [0], [0], [1], [0, 0, 1, 1], [], []>} : vector<8x128xf32>, vector<128x512xf32>, vector<8x512xf32> -> vector<8x512xf32>
    %254 = arith.addf %229, %253 : vector<8x512xf32>
    %255 = vector.extract_strided_slice %254 {offsets = [0, 0], sizes = [8, 384], strides = [1, 1]} : vector<8x512xf32> to vector<8x384xf32>
    %256 = arith.negf %255 : vector<8x384xf32>
    %257 = math.exp %256 : vector<8x384xf32>
    %cst_53 = arith.constant 1.000000e+00 : f32
    %258 = vector.broadcast %cst_53 : f32 to vector<8x384xf32>
    %259 = arith.addf %258, %257 : vector<8x384xf32>
    %260 = arith.divf %258, %259 : vector<8x384xf32>
    %261 = vector.extract_strided_slice %254 {offsets = [0, 384], sizes = [8, 128], strides = [1, 1]} : vector<8x512xf32> to vector<8x128xf32>
    %262 = math.tanh %261 : vector<8x128xf32>
    %263 = vector.extract_strided_slice %260 {offsets = [0, 0], sizes = [8, 128], strides = [1, 1]} : vector<8x384xf32> to vector<8x128xf32>
    %264 = vector.extract_strided_slice %260 {offsets = [0, 128], sizes = [8, 128], strides = [1, 1]} : vector<8x384xf32> to vector<8x128xf32>
    %265 = vector.extract_strided_slice %260 {offsets = [0, 256], sizes = [8, 128], strides = [1, 1]} : vector<8x384xf32> to vector<8x128xf32>
    %266 = arith.mulf %264, %225 : vector<8x128xf32>
    %267 = arith.mulf %263, %262 : vector<8x128xf32>
    %268 = arith.addf %266, %267 : vector<8x128xf32>
    %269 = math.tanh %268 : vector<8x128xf32>
    %270 = arith.mulf %265, %269 : vector<8x128xf32>
    %cst_54 = arith.constant dense<0.000000e+00> : vector<8x512xf32>
    %271 = tpu.matmul %270, %2, %cst_54 {dimension_numbers = #tpu.dot_dimension_numbers<[1], [0], [0], [1], [0, 0, 1, 1], [], []>} : vector<8x128xf32>, vector<128x512xf32>, vector<8x512xf32> -> vector<8x512xf32>
    %272 = arith.addf %271, %11 : vector<8x512xf32>
    %c6 = arith.constant 6 : index
    %c0_55 = arith.constant 0 : index
    %c0_56 = arith.constant 0 : index
    %273 = vector.load %arg0[%c6, %c0_55, %c0_56] : memref<8x8x1xf32, #tpu.memory_space<vmem>>, vector<1x8x1xf32>
    %274 = vector.shape_cast %273 : vector<1x8x1xf32> to vector<8x1xf32>
    %275 = vector.broadcast %274 : vector<8x1xf32> to vector<8x512xf32>
    %276 = arith.mulf %275, %5 : vector<8x512xf32>
    %277 = arith.addf %276, %8 : vector<8x512xf32>
    %cst_57 = arith.constant dense<0.000000e+00> : vector<8x512xf32>
    %278 = tpu.matmul %252, %0, %cst_57 {dimension_numbers = #tpu.dot_dimension_numbers<[1], [0], [0], [1], [0, 0, 1, 1], [], []>} : vector<8x128xf32>, vector<128x512xf32>, vector<8x512xf32> -> vector<8x512xf32>
    %279 = arith.addf %277, %278 : vector<8x512xf32>
    %280 = vector.extract_strided_slice %279 {offsets = [0, 0], sizes = [8, 384], strides = [1, 1]} : vector<8x512xf32> to vector<8x384xf32>
    %281 = arith.negf %280 : vector<8x384xf32>
    %282 = math.exp %281 : vector<8x384xf32>
    %cst_58 = arith.constant 1.000000e+00 : f32
    %283 = vector.broadcast %cst_58 : f32 to vector<8x384xf32>
    %284 = arith.addf %283, %282 : vector<8x384xf32>
    %285 = arith.divf %283, %284 : vector<8x384xf32>
    %286 = vector.extract_strided_slice %279 {offsets = [0, 384], sizes = [8, 128], strides = [1, 1]} : vector<8x512xf32> to vector<8x128xf32>
    %287 = math.tanh %286 : vector<8x128xf32>
    %288 = vector.extract_strided_slice %285 {offsets = [0, 0], sizes = [8, 128], strides = [1, 1]} : vector<8x384xf32> to vector<8x128xf32>
    %289 = vector.extract_strided_slice %285 {offsets = [0, 128], sizes = [8, 128], strides = [1, 1]} : vector<8x384xf32> to vector<8x128xf32>
    %290 = vector.extract_strided_slice %285 {offsets = [0, 256], sizes = [8, 128], strides = [1, 1]} : vector<8x384xf32> to vector<8x128xf32>
    %291 = arith.mulf %289, %250 : vector<8x128xf32>
    %292 = arith.mulf %288, %287 : vector<8x128xf32>
    %293 = arith.addf %291, %292 : vector<8x128xf32>
    %294 = math.tanh %293 : vector<8x128xf32>
    %295 = arith.mulf %290, %294 : vector<8x128xf32>
    %cst_59 = arith.constant dense<0.000000e+00> : vector<8x512xf32>
    %296 = tpu.matmul %295, %1, %cst_59 {dimension_numbers = #tpu.dot_dimension_numbers<[1], [0], [0], [1], [0, 0, 1, 1], [], []>} : vector<8x128xf32>, vector<128x512xf32>, vector<8x512xf32> -> vector<8x512xf32>
    %297 = arith.addf %272, %296 : vector<8x512xf32>
    %298 = vector.extract_strided_slice %297 {offsets = [0, 0], sizes = [8, 384], strides = [1, 1]} : vector<8x512xf32> to vector<8x384xf32>
    %299 = arith.negf %298 : vector<8x384xf32>
    %300 = math.exp %299 : vector<8x384xf32>
    %cst_60 = arith.constant 1.000000e+00 : f32
    %301 = vector.broadcast %cst_60 : f32 to vector<8x384xf32>
    %302 = arith.addf %301, %300 : vector<8x384xf32>
    %303 = arith.divf %301, %302 : vector<8x384xf32>
    %304 = vector.extract_strided_slice %297 {offsets = [0, 384], sizes = [8, 128], strides = [1, 1]} : vector<8x512xf32> to vector<8x128xf32>
    %305 = math.tanh %304 : vector<8x128xf32>
    %306 = vector.extract_strided_slice %303 {offsets = [0, 0], sizes = [8, 128], strides = [1, 1]} : vector<8x384xf32> to vector<8x128xf32>
    %307 = vector.extract_strided_slice %303 {offsets = [0, 128], sizes = [8, 128], strides = [1, 1]} : vector<8x384xf32> to vector<8x128xf32>
    %308 = vector.extract_strided_slice %303 {offsets = [0, 256], sizes = [8, 128], strides = [1, 1]} : vector<8x384xf32> to vector<8x128xf32>
    %309 = arith.mulf %307, %268 : vector<8x128xf32>
    %310 = arith.mulf %306, %305 : vector<8x128xf32>
    %311 = arith.addf %309, %310 : vector<8x128xf32>
    %312 = math.tanh %311 : vector<8x128xf32>
    %313 = arith.mulf %308, %312 : vector<8x128xf32>
    %cst_61 = arith.constant dense<0.000000e+00> : vector<8x512xf32>
    %314 = tpu.matmul %313, %2, %cst_61 {dimension_numbers = #tpu.dot_dimension_numbers<[1], [0], [0], [1], [0, 0, 1, 1], [], []>} : vector<8x128xf32>, vector<128x512xf32>, vector<8x512xf32> -> vector<8x512xf32>
    %315 = arith.addf %314, %11 : vector<8x512xf32>
    %c7 = arith.constant 7 : index
    %c0_62 = arith.constant 0 : index
    %c0_63 = arith.constant 0 : index
    %316 = vector.load %arg0[%c7, %c0_62, %c0_63] : memref<8x8x1xf32, #tpu.memory_space<vmem>>, vector<1x8x1xf32>
    %317 = vector.shape_cast %316 : vector<1x8x1xf32> to vector<8x1xf32>
    %318 = vector.broadcast %317 : vector<8x1xf32> to vector<8x512xf32>
    %319 = arith.mulf %318, %5 : vector<8x512xf32>
    %320 = arith.addf %319, %8 : vector<8x512xf32>
    %cst_64 = arith.constant dense<0.000000e+00> : vector<8x512xf32>
    %321 = tpu.matmul %295, %0, %cst_64 {dimension_numbers = #tpu.dot_dimension_numbers<[1], [0], [0], [1], [0, 0, 1, 1], [], []>} : vector<8x128xf32>, vector<128x512xf32>, vector<8x512xf32> -> vector<8x512xf32>
    %322 = arith.addf %320, %321 : vector<8x512xf32>
    %323 = vector.extract_strided_slice %322 {offsets = [0, 0], sizes = [8, 384], strides = [1, 1]} : vector<8x512xf32> to vector<8x384xf32>
    %324 = arith.negf %323 : vector<8x384xf32>
    %325 = math.exp %324 : vector<8x384xf32>
    %cst_65 = arith.constant 1.000000e+00 : f32
    %326 = vector.broadcast %cst_65 : f32 to vector<8x384xf32>
    %327 = arith.addf %326, %325 : vector<8x384xf32>
    %328 = arith.divf %326, %327 : vector<8x384xf32>
    %329 = vector.extract_strided_slice %322 {offsets = [0, 384], sizes = [8, 128], strides = [1, 1]} : vector<8x512xf32> to vector<8x128xf32>
    %330 = math.tanh %329 : vector<8x128xf32>
    %331 = vector.extract_strided_slice %328 {offsets = [0, 0], sizes = [8, 128], strides = [1, 1]} : vector<8x384xf32> to vector<8x128xf32>
    %332 = vector.extract_strided_slice %328 {offsets = [0, 128], sizes = [8, 128], strides = [1, 1]} : vector<8x384xf32> to vector<8x128xf32>
    %333 = vector.extract_strided_slice %328 {offsets = [0, 256], sizes = [8, 128], strides = [1, 1]} : vector<8x384xf32> to vector<8x128xf32>
    %334 = arith.mulf %332, %293 : vector<8x128xf32>
    %335 = arith.mulf %331, %330 : vector<8x128xf32>
    %336 = arith.addf %334, %335 : vector<8x128xf32>
    %337 = math.tanh %336 : vector<8x128xf32>
    %338 = arith.mulf %333, %337 : vector<8x128xf32>
    %cst_66 = arith.constant dense<0.000000e+00> : vector<8x512xf32>
    %339 = tpu.matmul %338, %1, %cst_66 {dimension_numbers = #tpu.dot_dimension_numbers<[1], [0], [0], [1], [0, 0, 1, 1], [], []>} : vector<8x128xf32>, vector<128x512xf32>, vector<8x512xf32> -> vector<8x512xf32>
    %340 = arith.addf %315, %339 : vector<8x512xf32>
    %341 = vector.extract_strided_slice %340 {offsets = [0, 0], sizes = [8, 384], strides = [1, 1]} : vector<8x512xf32> to vector<8x384xf32>
    %342 = arith.negf %341 : vector<8x384xf32>
    %343 = math.exp %342 : vector<8x384xf32>
    %cst_67 = arith.constant 1.000000e+00 : f32
    %344 = vector.broadcast %cst_67 : f32 to vector<8x384xf32>
    %345 = arith.addf %344, %343 : vector<8x384xf32>
    %346 = arith.divf %344, %345 : vector<8x384xf32>
    %347 = vector.extract_strided_slice %340 {offsets = [0, 384], sizes = [8, 128], strides = [1, 1]} : vector<8x512xf32> to vector<8x128xf32>
    %348 = math.tanh %347 : vector<8x128xf32>
    %349 = vector.extract_strided_slice %346 {offsets = [0, 0], sizes = [8, 128], strides = [1, 1]} : vector<8x384xf32> to vector<8x128xf32>
    %350 = vector.extract_strided_slice %346 {offsets = [0, 128], sizes = [8, 128], strides = [1, 1]} : vector<8x384xf32> to vector<8x128xf32>
    %351 = vector.extract_strided_slice %346 {offsets = [0, 256], sizes = [8, 128], strides = [1, 1]} : vector<8x384xf32> to vector<8x128xf32>
    %352 = arith.mulf %350, %311 : vector<8x128xf32>
    %353 = arith.mulf %349, %348 : vector<8x128xf32>
    %354 = arith.addf %352, %353 : vector<8x128xf32>
    %355 = math.tanh %354 : vector<8x128xf32>
    %356 = arith.mulf %351, %355 : vector<8x128xf32>
    %c0_68 = arith.constant 0 : index
    %c0_69 = arith.constant 0 : index
    %357 = vector.load %arg7[%c0_68, %c0_69] : memref<128x128xf32, #tpu.memory_space<vmem>>, vector<128x128xf32>
    %cst_70 = arith.constant dense<0.000000e+00> : vector<8x128xf32>
    %358 = tpu.matmul %356, %357, %cst_70 {dimension_numbers = #tpu.dot_dimension_numbers<[1], [0], [0], [1], [0, 0, 1, 1], [], []>} : vector<8x128xf32>, vector<128x128xf32>, vector<8x128xf32> -> vector<8x128xf32>
    %c0_71 = arith.constant 0 : index
    %c0_72 = arith.constant 0 : index
    %359 = vector.load %arg8[%c0_71, %c0_72] : memref<1x128xf32, #tpu.memory_space<vmem>>, vector<1x128xf32>
    %360 = vector.broadcast %359 : vector<1x128xf32> to vector<8x128xf32>
    %361 = arith.addf %358, %360 : vector<8x128xf32>
    %c0_73 = arith.constant 0 : index
    %c0_74 = arith.constant 0 : index
    %362 = vector.load %arg9[%c0_73, %c0_74] : memref<8x128xf32, #tpu.memory_space<vmem>>, vector<8x128xf32>
    tpu.vector_store %arg9[%c0_73, %c0_74], %361 {strides = array<i32>} : memref<8x128xf32, #tpu.memory_space<vmem>>, vector<8x128xf32>,
    return
  }
}

</mosaic_0001>

<llo_original>
// kernel: forward.1
$region0: #{forward.1}
  #allocation0 [shape = 'u32[]', space=smem, size = 0x4, offset = 0x4, fixed_abs, tag = 'smem constant byte address 0x4 - core index']
  #allocation1 [shape = 'u32[72,128]{1,0:T(1,128)}', space=vmem, size = 0x9000, scoped, tag = 'internal scratch']
  %s0 = inlined_call_operand.vmem [shape: f32[8,8,1], index: 0, kind: input, shape index: {}]
  %s1 = inlined_call_operand.vmem [shape: f32[1,512], index: 1, kind: input, shape index: {}]
  %s2 = inlined_call_operand.vmem [shape: f32[1,512], index: 2, kind: input, shape index: {}]
  %s3 = inlined_call_operand.hbm [shape: f32[128,512], index: 3, kind: input, shape index: {}]
  %s4 = inlined_call_operand.hbm [shape: f32[128,512], index: 4, kind: input, shape index: {}]
  %s5 = inlined_call_operand.hbm [shape: f32[128,512], index: 5, kind: input, shape index: {}]
  %s6 = inlined_call_operand.vmem [shape: f32[1,512], index: 6, kind: input, shape index: {}]
  %s7 = inlined_call_operand.vmem [shape: f32[128,128], index: 7, kind: input, shape index: {}]
  %s8 = inlined_call_operand.vmem [shape: f32[1,128], index: 8, kind: input, shape index: {}]
  %s9 = inlined_call_operand.vmem [shape: f32[8,128], index: 9, kind: output, shape index: {}]
  %s10 = sld [smem:[#allocation0]]
  $region58: #{forward.1} parent=0
    _
  %s12 = ssub.s32 1, %s10
  %s13 = scalar_select 0, %s12, %s10
  $region1: #{forward.1} parent=0
    #allocation2 [shape = 'u8[262144]{0}', space=vmem, size = 0x40000, scoped, tag = 'input window, operand 3, single buffered']
    #allocation3 [shape = 's32[1]{0}', space=sflag, size = 0x4, scoped, tag = 'scoped memory for forward.1']
    #allocation4 [shape = 'u8[262144]{0}', space=vmem, size = 0x40000, scoped, tag = 'input window, operand 4, single buffered']
    #allocation5 [shape = 's32[1]{0}', space=sflag, size = 0x4, scoped, tag = 'scoped memory for forward.1']
    #allocation6 [shape = 'u8[262144]{0}', space=vmem, size = 0x40000, scoped, tag = 'input window, operand 5, single buffered']
    %14 = vsyncpa [#allocation3], 0
    %15 = vsyncpa [#allocation5], 0
    // Predicated region
    $region2: #{forward.1} parent=1 // pred_check
      _
    $region3: #{forward.1} parent=1 // pred_check_branch
      %17 = sbr.rel (0) target = $region5
    $region4: #{forward.1} parent=1 // pred_region
      _
    $region5: #{forward.1} parent=1 // pred_fallthru
      _
    // Predicated region
    $region6: #{forward.1} parent=1 // pred_check
      _
    $region7: #{forward.1} parent=1 // pred_check_branch
      %19 = sbr.rel (0) target = $region9
    $region8: #{forward.1} parent=1 // pred_region
      _
    $region9: #{forward.1} parent=1 // pred_fallthru
      _
    // Predicated region
    $region10: #{forward.1} parent=1 // pred_check
      _
    $region11: #{forward.1} parent=1 // pred_check_branch
      %21 = sbr.rel (0) target = $region13
    $region12: #{forward.1} parent=1 // pred_region
      _
    $region13: #{forward.1} parent=1 // pred_fallthru
      _
    // Predicated region
    $region14: #{forward.1} parent=1 // pred_check
      _
    $region15: #{forward.1} parent=1 // pred_check_branch
      %23 = sbr.rel (0) target = $region17
    $region16: #{forward.1} parent=1 // pred_region
      %25 = vsyncadd [#allocation3], 0
      %s26 = sshll.u32 %s3, 4
      %s27 = int_to_ptr.hbm [resolvable:$true] %s26
      %s28 = sshll.u32 [#allocation2], 4
      %s29 = int_to_ptr.vmem [resolvable:$true] %s28
      %34 = dma.hbm_to_vmem [thread:$0]  %s27, 8192, %s29, [#allocation3], 512, 512, 32
    $region17: #{forward.1} parent=1 // pred_fallthru
      _
    // Predicated region
    $region18: #{forward.1} parent=1 // pred_check
      _
    $region19: #{forward.1} parent=1 // pred_check_branch
      %36 = sbr.rel (0) target = $region21
    $region20: #{forward.1} parent=1 // pred_region
      %38 = vsyncadd [#allocation5], 0
      %s39 = sshll.u32 %s4, 4
      %s40 = int_to_ptr.hbm [resolvable:$true] %s39
      %s41 = sshll.u32 [#allocation4], 4
      %s42 = int_to_ptr.vmem [resolvable:$true] %s41
      %47 = dma.hbm_to_vmem [thread:$0]  %s40, 8192, %s42, [#allocation5], 512, 512, 32
    $region21: #{forward.1} parent=1 // pred_fallthru
      _
    // Predicated region
    $region22: #{forward.1} parent=1 // pred_check
      _
    $region23: #{forward.1} parent=1 // pred_check_branch
      %49 = sbr.rel (0) target = $region25
    $region24: #{forward.1} parent=1 // pred_region
      %51 = vsyncadd [#allocation5], 0
      %s52 = sshll.u32 %s5, 4
      %s53 = int_to_ptr.hbm [resolvable:$true] %s52
      %s54 = sshll.u32 [#allocation6], 4
      %s55 = int_to_ptr.vmem [resolvable:$true] %s54
      %60 = dma.hbm_to_vmem [thread:$0]  %s53, 8192, %s55, [#allocation5], 512, 512, 32
    $region25: #{forward.1} parent=1 // pred_fallthru
      _
    // Predicated region
    $region26: #{forward.1} parent=1 // pred_check
      _
    $region27: #{forward.1} parent=1 // pred_check_branch
      %62 = sbr.rel (0) target = $region29
    $region28: #{forward.1} parent=1 // pred_region
      _
    $region29: #{forward.1} parent=1 // pred_fallthru
      _
    // Predicated region
    $region30: #{forward.1} parent=1 // pred_check
      _
    $region31: #{forward.1} parent=1 // pred_check_branch
      %64 = sbr.rel (0) target = $region33
    $region32: #{forward.1} parent=1 // pred_region
      _
    $region33: #{forward.1} parent=1 // pred_fallthru
      _
    // Predicated region
    $region34: #{forward.1} parent=1 // pred_check
      _
    $region35: #{forward.1} parent=1 // pred_check_branch
      %66 = sbr.rel (0) target = $region37
    $region36: #{forward.1} parent=1 // pred_region
      _
    $region37: #{forward.1} parent=1 // pred_fallthru
      _
    // Predicated region
    $region38: #{forward.1} parent=1 // pred_check
      _
    $region39: #{forward.1} parent=1 // pred_check_branch
      %68 = sbr.rel (0) target = $region41
    $region40: #{forward.1} parent=1 // pred_region
      %70 = dma.done [#allocation3], 8192
    $region41: #{forward.1} parent=1 // pred_fallthru
      _
    // Predicated region
    $region42: #{forward.1} parent=1 // pred_check
      _
    $region43: #{forward.1} parent=1 // pred_check_branch
      %72 = sbr.rel (0) target = $region45
    $region44: #{forward.1} parent=1 // pred_region
      %74 = dma.done [#allocation5], 8192
    $region45: #{forward.1} parent=1 // pred_fallthru
      _
    // Predicated region
    $region46: #{forward.1} parent=1 // pred_check
      _
    $region47: #{forward.1} parent=1 // pred_check_branch
      %76 = sbr.rel (0) target = $region49
    $region48: #{forward.1} parent=1 // pred_region
      %78 = dma.done [#allocation5], 8192
    $region49: #{forward.1} parent=1 // pred_fallthru
      _
    %v79 = vld [vmem:[#allocation2] sm:$0xff]
    %v80 = vld [vmem:[#allocation2 + $0x8] sm:$0xff]
    %v81 = vld [vmem:[#allocation2 + $0x10] sm:$0xff]
    %v82 = vld [vmem:[#allocation2 + $0x18] sm:$0xff]
    %v83 = vld [vmem:[#allocation2 + $0x20] sm:$0xff]
    %v84 = vld [vmem:[#allocation2 + $0x28] sm:$0xff]
    %v85 = vld [vmem:[#allocation2 + $0x30] sm:$0xff]
    %v86 = vld [vmem:[#allocation2 + $0x38] sm:$0xff]
    %v87 = vld [vmem:[#allocation2 + $0x40] sm:$0xff]
    %v88 = vld [vmem:[#allocation2 + $0x48] sm:$0xff]
    %v89 = vld [vmem:[#allocation2 + $0x50] sm:$0xff]
    %v90 = vld [vmem:[#allocation2 + $0x58] sm:$0xff]
    %v91 = vld [vmem:[#allocation2 + $0x60] sm:$0xff]
    %v92 = vld [vmem:[#allocation2 + $0x68] sm:$0xff]
    %v93 = vld [vmem:[#allocation2 + $0x70] sm:$0xff]
    %v94 = vld [vmem:[#allocation2 + $0x78] sm:$0xff]
    %v95 = vld [vmem:[#allocation2 + $0x80] sm:$0xff]
    %v96 = vld [vmem:[#allocation2 + $0x88] sm:$0xff]
    %v97 = vld [vmem:[#allocation2 + $0x90] sm:$0xff]
    %v98 = vld [vmem:[#allocation2 + $0x98] sm:$0xff]
    %v99 = vld [vmem:[#allocation2 + $0xa0] sm:$0xff]
    %v100 = vld [vmem:[#allocation2 + $0xa8] sm:$0xff]
    %v101 = vld [vmem:[#allocation2 + $0xb0] sm:$0xff]
    %v102 = vld [vmem:[#allocation2 + $0xb8] sm:$0xff]
    %v103 = vld [vmem:[#allocation2 + $0xc0] sm:$0xff]
    %v104 = vld [vmem:[#allocation2 + $0xc8] sm:$0xff]
    %v105 = vld [vmem:[#allocation2 + $0xd0] sm:$0xff]
    %v106 = vld [vmem:[#allocation2 + $0xd8] sm:$0xff]
    %v107 = vld [vmem:[#allocation2 + $0xe0] sm:$0xff]
    %v108 = vld [vmem:[#allocation2 + $0xe8] sm:$0xff]
    %v109 = vld [vmem:[#allocation2 + $0xf0] sm:$0xff]
    %v110 = vld [vmem:[#allocation2 + $0xf8] sm:$0xff]
    %v111 = vld [vmem:[#allocation2 + $0x100] sm:$0xff]
    %v112 = vld [vmem:[#allocation2 + $0x108] sm:$0xff]
    %v113 = vld [vmem:[#allocation2 + $0x110] sm:$0xff]
    %v114 = vld [vmem:[#allocation2 + $0x118] sm:$0xff]
    %v115 = vld [vmem:[#allocation2 + $0x120] sm:$0xff]
    %v116 = vld [vmem:[#allocation2 + $0x128] sm:$0xff]
    %v117 = vld [vmem:[#allocation2 + $0x130] sm:$0xff]
    %v118 = vld [vmem:[#allocation2 + $0x138] sm:$0xff]
    %v119 = vld [vmem:[#allocation2 + $0x140] sm:$0xff]
    %v120 = vld [vmem:[#allocation2 + $0x148] sm:$0xff]
    %v121 = vld [vmem:[#allocation2 + $0x150] sm:$0xff]
    %v122 = vld [vmem:[#allocation2 + $0x158] sm:$0xff]
    %v123 = vld [vmem:[#allocation2 + $0x160] sm:$0xff]
    %v124 = vld [vmem:[#allocation2 + $0x168] sm:$0xff]
    %v125 = vld [vmem:[#allocation2 + $0x170] sm:$0xff]
    %v126 = vld [vmem:[#allocation2 + $0x178] sm:$0xff]
    %v127 = vld [vmem:[#allocation2 + $0x180] sm:$0xff]
    %v128 = vld [vmem:[#allocation2 + $0x188] sm:$0xff]
    %v129 = vld [vmem:[#allocation2 + $0x190] sm:$0xff]
    %v130 = vld [vmem:[#allocation2 + $0x198] sm:$0xff]
    %v131 = vld [vmem:[#allocation2 + $0x1a0] sm:$0xff]
    %v132 = vld [vmem:[#allocation2 + $0x1a8] sm:$0xff]
    %v133 = vld [vmem:[#allocation2 + $0x1b0] sm:$0xff]
    %v134 = vld [vmem:[#allocation2 + $0x1b8] sm:$0xff]
    %v135 = vld [vmem:[#allocation2 + $0x1c0] sm:$0xff]
    %v136 = vld [vmem:[#allocation2 + $0x1c8] sm:$0xff]
    %v137 = vld [vmem:[#allocation2 + $0x1d0] sm:$0xff]
    %v138 = vld [vmem:[#allocation2 + $0x1d8] sm:$0xff]
    %v139 = vld [vmem:[#allocation2 + $0x1e0] sm:$0xff]
    %v140 = vld [vmem:[#allocation2 + $0x1e8] sm:$0xff]
    %v141 = vld [vmem:[#allocation2 + $0x1f0] sm:$0xff]
    %v142 = vld [vmem:[#allocation2 + $0x1f8] sm:$0xff]
    %v143 = vld [vmem:[#allocation4] sm:$0xff]
    %v144 = vld [vmem:[#allocation4 + $0x8] sm:$0xff]
    %v145 = vld [vmem:[#allocation4 + $0x10] sm:$0xff]
    %v146 = vld [vmem:[#allocation4 + $0x18] sm:$0xff]
    %v147 = vld [vmem:[#allocation4 + $0x20] sm:$0xff]
    %v148 = vld [vmem:[#allocation4 + $0x28] sm:$0xff]
    %v149 = vld [vmem:[#allocation4 + $0x30] sm:$0xff]
    %v150 = vld [vmem:[#allocation4 + $0x38] sm:$0xff]
    %v151 = vld [vmem:[#allocation4 + $0x40] sm:$0xff]
    %v152 = vld [vmem:[#allocation4 + $0x48] sm:$0xff]
    %v153 = vld [vmem:[#allocation4 + $0x50] sm:$0xff]
    %v154 = vld [vmem:[#allocation4 + $0x58] sm:$0xff]
    %v155 = vld [vmem:[#allocation4 + $0x60] sm:$0xff]
    %v156 = vld [vmem:[#allocation4 + $0x68] sm:$0xff]
    %v157 = vld [vmem:[#allocation4 + $0x70] sm:$0xff]
    %v158 = vld [vmem:[#allocation4 + $0x78] sm:$0xff]
    %v159 = vld [vmem:[#allocation4 + $0x80] sm:$0xff]
    %v160 = vld [vmem:[#allocation4 + $0x88] sm:$0xff]
    %v161 = vld [vmem:[#allocation4 + $0x90] sm:$0xff]
    %v162 = vld [vmem:[#allocation4 + $0x98] sm:$0xff]
    %v163 = vld [vmem:[#allocation4 + $0xa0] sm:$0xff]
    %v164 = vld [vmem:[#allocation4 + $0xa8] sm:$0xff]
    %v165 = vld [vmem:[#allocation4 + $0xb0] sm:$0xff]
    %v166 = vld [vmem:[#allocation4 + $0xb8] sm:$0xff]
    %v167 = vld [vmem:[#allocation4 + $0xc0] sm:$0xff]
    %v168 = vld [vmem:[#allocation4 + $0xc8] sm:$0xff]
    %v169 = vld [vmem:[#allocation4 + $0xd0] sm:$0xff]
    %v170 = vld [vmem:[#allocation4 + $0xd8] sm:$0xff]
    %v171 = vld [vmem:[#allocation4 + $0xe0] sm:$0xff]
    %v172 = vld [vmem:[#allocation4 + $0xe8] sm:$0xff]
    %v173 = vld [vmem:[#allocation4 + $0xf0] sm:$0xff]
    %v174 = vld [vmem:[#allocation4 + $0xf8] sm:$0xff]
    %v175 = vld [vmem:[#allocation4 + $0x100] sm:$0xff]
    %v176 = vld [vmem:[#allocation4 + $0x108] sm:$0xff]
    %v177 = vld [vmem:[#allocation4 + $0x110] sm:$0xff]
    %v178 = vld [vmem:[#allocation4 + $0x118] sm:$0xff]
    %v179 = vld [vmem:[#allocation4 + $0x120] sm:$0xff]
    %v180 = vld [vmem:[#allocation4 + $0x128] sm:$0xff]
    %v181 = vld [vmem:[#allocation4 + $0x130] sm:$0xff]
    %v182 = vld [vmem:[#allocation4 + $0x138] sm:$0xff]
    %v183 = vld [vmem:[#allocation4 + $0x140] sm:$0xff]
    %v184 = vld [vmem:[#allocation4 + $0x148] sm:$0xff]
    %v185 = vld [vmem:[#allocation4 + $0x150] sm:$0xff]
    %v186 = vld [vmem:[#allocation4 + $0x158] sm:$0xff]
    %v187 = vld [vmem:[#allocation4 + $0x160] sm:$0xff]
    %v188 = vld [vmem:[#allocation4 + $0x168] sm:$0xff]
    %v189 = vld [vmem:[#allocation4 + $0x170] sm:$0xff]
    %v190 = vld [vmem:[#allocation4 + $0x178] sm:$0xff]
    %v191 = vld [vmem:[#allocation4 + $0x180] sm:$0xff]
    %v192 = vld [vmem:[#allocation4 + $0x188] sm:$0xff]
    %v193 = vld [vmem:[#allocation4 + $0x190] sm:$0xff]
    %v194 = vld [vmem:[#allocation4 + $0x198] sm:$0xff]
    %v195 = vld [vmem:[#allocation4 + $0x1a0] sm:$0xff]
    %v196 = vld [vmem:[#allocation4 + $0x1a8] sm:$0xff]
    %v197 = vld [vmem:[#allocation4 + $0x1b0] sm:$0xff]
    %v198 = vld [vmem:[#allocation4 + $0x1b8] sm:$0xff]
    %v199 = vld [vmem:[#allocation4 + $0x1c0] sm:$0xff]
    %v200 = vld [vmem:[#allocation4 + $0x1c8] sm:$0xff]
    %v201 = vld [vmem:[#allocation4 + $0x1d0] sm:$0xff]
    %v202 = vld [vmem:[#allocation4 + $0x1d8] sm:$0xff]
    %v203 = vld [vmem:[#allocation4 + $0x1e0] sm:$0xff]
    %v204 = vld [vmem:[#allocation4 + $0x1e8] sm:$0xff]
    %v205 = vld [vmem:[#allocation4 + $0x1f0] sm:$0xff]
    %v206 = vld [vmem:[#allocation4 + $0x1f8] sm:$0xff]
    %v207 = vld [vmem:[#allocation6] sm:$0xff]
    %v208 = vld [vmem:[#allocation6 + $0x8] sm:$0xff]
    %v209 = vld [vmem:[#allocation6 + $0x10] sm:$0xff]
    %v210 = vld [vmem:[#allocation6 + $0x18] sm:$0xff]
    %v211 = vld [vmem:[#allocation6 + $0x20] sm:$0xff]
    %v212 = vld [vmem:[#allocation6 + $0x28] sm:$0xff]
    %v213 = vld [vmem:[#allocation6 + $0x30] sm:$0xff]
    %v214 = vld [vmem:[#allocation6 + $0x38] sm:$0xff]
    %v215 = vld [vmem:[#allocation6 + $0x40] sm:$0xff]
    %v216 = vld [vmem:[#allocation6 + $0x48] sm:$0xff]
    %v217 = vld [vmem:[#allocation6 + $0x50] sm:$0xff]
    %v218 = vld [vmem:[#allocation6 + $0x58] sm:$0xff]
    %v219 = vld [vmem:[#allocation6 + $0x60] sm:$0xff]
    %v220 = vld [vmem:[#allocation6 + $0x68] sm:$0xff]
    %v221 = vld [vmem:[#allocation6 + $0x70] sm:$0xff]
    %v222 = vld [vmem:[#allocation6 + $0x78] sm:$0xff]
    %v223 = vld [vmem:[#allocation6 + $0x80] sm:$0xff]
    %v224 = vld [vmem:[#allocation6 + $0x88] sm:$0xff]
    %v225 = vld [vmem:[#allocation6 + $0x90] sm:$0xff]
    %v226 = vld [vmem:[#allocation6 + $0x98] sm:$0xff]
    %v227 = vld [vmem:[#allocation6 + $0xa0] sm:$0xff]
    %v228 = vld [vmem:[#allocation6 + $0xa8] sm:$0xff]
    %v229 = vld [vmem:[#allocation6 + $0xb0] sm:$0xff]
    %v230 = vld [vmem:[#allocation6 + $0xb8] sm:$0xff]
    %v231 = vld [vmem:[#allocation6 + $0xc0] sm:$0xff]
    %v232 = vld [vmem:[#allocation6 + $0xc8] sm:$0xff]
    %v233 = vld [vmem:[#allocation6 + $0xd0] sm:$0xff]
    %v234 = vld [vmem:[#allocation6 + $0xd8] sm:$0xff]
    %v235 = vld [vmem:[#allocation6 + $0xe0] sm:$0xff]
    %v236 = vld [vmem:[#allocation6 + $0xe8] sm:$0xff]
    %v237 = vld [vmem:[#allocation6 + $0xf0] sm:$0xff]
    %v238 = vld [vmem:[#allocation6 + $0xf8] sm:$0xff]
    %v239 = vld [vmem:[#allocation6 + $0x100] sm:$0xff]
    %v240 = vld [vmem:[#allocation6 + $0x108] sm:$0xff]
    %v241 = vld [vmem:[#allocation6 + $0x110] sm:$0xff]
    %v242 = vld [vmem:[#allocation6 + $0x118] sm:$0xff]
    %v243 = vld [vmem:[#allocation6 + $0x120] sm:$0xff]
    %v244 = vld [vmem:[#allocation6 + $0x128] sm:$0xff]
    %v245 = vld [vmem:[#allocation6 + $0x130] sm:$0xff]
    %v246 = vld [vmem:[#allocation6 + $0x138] sm:$0xff]
    %v247 = vld [vmem:[#allocation6 + $0x140] sm:$0xff]
    %v248 = vld [vmem:[#allocation6 + $0x148] sm:$0xff]
    %v249 = vld [vmem:[#allocation6 + $0x150] sm:$0xff]
    %v250 = vld [vmem:[#allocation6 + $0x158] sm:$0xff]
    %v251 = vld [vmem:[#allocation6 + $0x160] sm:$0xff]
    %v252 = vld [vmem:[#allocation6 + $0x168] sm:$0xff]
    %v253 = vld [vmem:[#allocation6 + $0x170] sm:$0xff]
    %v254 = vld [vmem:[#allocation6 + $0x178] sm:$0xff]
    %v255 = vld [vmem:[#allocation6 + $0x180] sm:$0xff]
    %v256 = vld [vmem:[#allocation6 + $0x188] sm:$0xff]
    %v257 = vld [vmem:[#allocation6 + $0x190] sm:$0xff]
    %v258 = vld [vmem:[#allocation6 + $0x198] sm:$0xff]
    %v259 = vld [vmem:[#allocation6 + $0x1a0] sm:$0xff]
    %v260 = vld [vmem:[#allocation6 + $0x1a8] sm:$0xff]
    %v261 = vld [vmem:[#allocation6 + $0x1b0] sm:$0xff]
    %v262 = vld [vmem:[#allocation6 + $0x1b8] sm:$0xff]
    %v263 = vld [vmem:[#allocation6 + $0x1c0] sm:$0xff]
    %v264 = vld [vmem:[#allocation6 + $0x1c8] sm:$0xff]
    %v265 = vld [vmem:[#allocation6 + $0x1d0] sm:$0xff]
    %v266 = vld [vmem:[#allocation6 + $0x1d8] sm:$0xff]
    %v267 = vld [vmem:[#allocation6 + $0x1e0] sm:$0xff]
    %v268 = vld [vmem:[#allocation6 + $0x1e8] sm:$0xff]
    %v269 = vld [vmem:[#allocation6 + $0x1f0] sm:$0xff]
    %v270 = vld [vmem:[#allocation6 + $0x1f8] sm:$0xff]
    %v271 = vld [vmem:[%s1] sm:$0xf]
    %v273 = vperm.slane %v271, 0
    %v274 = vperm.slane %v271, 1
    %v275 = vperm.slane %v271, 2
    %v276 = vperm.slane %v271, 3
    %v281 = vld [vmem:[%s2] sm:$0xf]
    %v283 = vperm.slane %v281, 0
    %v284 = vperm.slane %v281, 1
    %v285 = vperm.slane %v281, 2
    %v286 = vperm.slane %v281, 3
    %v291 = vld [vmem:[%s6] sm:$0xf]
    %v293 = vperm.slane %v291, 0
    %v294 = vperm.slane %v291, 1
    %v295 = vperm.slane %v291, 2
    %v296 = vperm.slane %v291, 3
    %301 = vmatpush.msra.mxu0 %v267
    %302 = vmatpush.msra.mxu0 %v263
    %303 = vmatpush.msra.mxu0 %v259
    %304 = vmatpush.msra.mxu0 %v255
    %305 = vmatpush.msra.mxu0 %v251
    %306 = vmatpush.msra.mxu0 %v247
    %307 = vmatpush.msra.mxu0 %v243
    %308 = vmatpush.msra.mxu0 %v239
    %309 = vmatpush.msra.mxu0 %v235
    %310 = vmatpush.msra.mxu0 %v231
    %311 = vmatpush.msra.mxu0 %v227
    %312 = vmatpush.msra.mxu0 %v223
    %313 = vmatpush.msra.mxu0 %v219
    %314 = vmatpush.msra.mxu0 %v215
    %315 = vmatpush.msra.mxu0 %v211
    %316 = vmatpush.msra.mxu0 %v207
    %317 = vmatmul.f32.gmra.mxu0 0.0
    %v318 = vpop.f32.mrf.mxu0
    %v319 = vadd.f32 %v293, %v318
    %320 = vdwg.mxu0
    %321 = vmatpush.msra.mxu0 %v268
    %322 = vmatpush.msra.mxu0 %v264
    %323 = vmatpush.msra.mxu0 %v260
    %324 = vmatpush.msra.mxu0 %v256
    %325 = vmatpush.msra.mxu0 %v252
    %326 = vmatpush.msra.mxu0 %v248
    %327 = vmatpush.msra.mxu0 %v244
    %328 = vmatpush.msra.mxu0 %v240
    %329 = vmatpush.msra.mxu0 %v236
    %330 = vmatpush.msra.mxu0 %v232
    %331 = vmatpush.msra.mxu0 %v228
    %332 = vmatpush.msra.mxu0 %v224
    %333 = vmatpush.msra.mxu0 %v220
    %334 = vmatpush.msra.mxu0 %v216
    %335 = vmatpush.msra.mxu0 %v212
    %336 = vmatpush.msra.mxu0 %v208
    %337 = vmatmul.f32.gmra.mxu0 0.0
    %v338 = vpop.f32.mrf.mxu0
    %v339 = vadd.f32 %v294, %v338
    %340 = vdwg.mxu0
    %341 = vmatpush.msra.mxu0 %v269
    %342 = vmatpush.msra.mxu0 %v265
    %343 = vmatpush.msra.mxu0 %v261
    %344 = vmatpush.msra.mxu0 %v257
    %345 = vmatpush.msra.mxu0 %v253
    %346 = vmatpush.msra.mxu0 %v249
    %347 = vmatpush.msra.mxu0 %v245
    %348 = vmatpush.msra.mxu0 %v241
    %349 = vmatpush.msra.mxu0 %v237
    %350 = vmatpush.msra.mxu0 %v233
    %351 = vmatpush.msra.mxu0 %v229
    %352 = vmatpush.msra.mxu0 %v225
    %353 = vmatpush.msra.mxu0 %v221
    %354 = vmatpush.msra.mxu0 %v217
    %355 = vmatpush.msra.mxu0 %v213
    %356 = vmatpush.msra.mxu0 %v209
    %357 = vmatmul.f32.gmra.mxu0 0.0
    %v358 = vpop.f32.mrf.mxu0
    %v359 = vadd.f32 %v295, %v358
    %360 = vdwg.mxu0
    %361 = vmatpush.msra.mxu0 %v270
    %362 = vmatpush.msra.mxu0 %v266
    %363 = vmatpush.msra.mxu0 %v262
    %364 = vmatpush.msra.mxu0 %v258
    %365 = vmatpush.msra.mxu0 %v254
    %366 = vmatpush.msra.mxu0 %v250
    %367 = vmatpush.msra.mxu0 %v246
    %368 = vmatpush.msra.mxu0 %v242
    %369 = vmatpush.msra.mxu0 %v238
    %370 = vmatpush.msra.mxu0 %v234
    %371 = vmatpush.msra.mxu0 %v230
    %372 = vmatpush.msra.mxu0 %v226
    %373 = vmatpush.msra.mxu0 %v222
    %374 = vmatpush.msra.mxu0 %v218
    %375 = vmatpush.msra.mxu0 %v214
    %376 = vmatpush.msra.mxu0 %v210
    %377 = vmatmul.f32.gmra.mxu0 0.0
    %v378 = vpop.f32.mrf.mxu0
    %v379 = vadd.f32 %v296, %v378
    %380 = vdwg.mxu0
    %v381 = vld [vmem:[%s0] sm:$0xff]
    %383 = vset.pattern.permute.xlu0 0
    %384 = vperm.xlu0 %383, %v381
    %v385 = vpop.permute.xlu0 %384
    %v387 = vmul.f32 %v385, %v273
    %v388 = vmul.f32 %v385, %v274
    %v389 = vmul.f32 %v385, %v275
    %v390 = vmul.f32 %v385, %v276
    %v391 = vadd.f32 %v387, %v283
    %v392 = vadd.f32 %v388, %v284
    %v393 = vadd.f32 %v389, %v285
    %v394 = vadd.f32 %v390, %v286
    %395 = vmatpush.msra.mxu0 %v139
    %396 = vmatpush.msra.mxu0 %v135
    %397 = vmatpush.msra.mxu0 %v131
    %398 = vmatpush.msra.mxu0 %v127
    %399 = vmatpush.msra.mxu0 %v123
    %400 = vmatpush.msra.mxu0 %v119
    %401 = vmatpush.msra.mxu0 %v115
    %402 = vmatpush.msra.mxu0 %v111
    %403 = vmatpush.msra.mxu0 %v107
    %404 = vmatpush.msra.mxu0 %v103
    %405 = vmatpush.msra.mxu0 %v99
    %406 = vmatpush.msra.mxu0 %v95
    %407 = vmatpush.msra.mxu0 %v91
    %408 = vmatpush.msra.mxu0 %v87
    %409 = vmatpush.msra.mxu0 %v83
    %410 = vmatpush.msra.mxu0 %v79
    %411 = vmatmul.f32.gmra.mxu0 0.0
    %v412 = vpop.f32.mrf.mxu0
    %v413 = vadd.f32 0.0, %v412
    %414 = vdwg.mxu0
    %415 = vmatpush.msra.mxu0 %v140
    %416 = vmatpush.msra.mxu0 %v136
    %417 = vmatpush.msra.mxu0 %v132
    %418 = vmatpush.msra.mxu0 %v128
    %419 = vmatpush.msra.mxu0 %v124
    %420 = vmatpush.msra.mxu0 %v120
    %421 = vmatpush.msra.mxu0 %v116
    %422 = vmatpush.msra.mxu0 %v112
    %423 = vmatpush.msra.mxu0 %v108
    %424 = vmatpush.msra.mxu0 %v104
    %425 = vmatpush.msra.mxu0 %v100
    %426 = vmatpush.msra.mxu0 %v96
    %427 = vmatpush.msra.mxu0 %v92
    %428 = vmatpush.msra.mxu0 %v88
    %429 = vmatpush.msra.mxu0 %v84
    %430 = vmatpush.msra.mxu0 %v80
    %431 = vmatmul.f32.gmra.mxu0 0.0
    %v432 = vpop.f32.mrf.mxu0
    %v433 = vadd.f32 0.0, %v432
    %434 = vdwg.mxu0
    %435 = vmatpush.msra.mxu0 %v141
    %436 = vmatpush.msra.mxu0 %v137
    %437 = vmatpush.msra.mxu0 %v133
    %438 = vmatpush.msra.mxu0 %v129
    %439 = vmatpush.msra.mxu0 %v125
    %440 = vmatpush.msra.mxu0 %v121
    %441 = vmatpush.msra.mxu0 %v117
    %442 = vmatpush.msra.mxu0 %v113
    %443 = vmatpush.msra.mxu0 %v109
    %444 = vmatpush.msra.mxu0 %v105
    %445 = vmatpush.msra.mxu0 %v101
    %446 = vmatpush.msra.mxu0 %v97
    %447 = vmatpush.msra.mxu0 %v93
    %448 = vmatpush.msra.mxu0 %v89
    %449 = vmatpush.msra.mxu0 %v85
    %450 = vmatpush.msra.mxu0 %v81
    %451 = vmatmul.f32.gmra.mxu0 0.0
    %v452 = vpop.f32.mrf.mxu0
    %v453 = vadd.f32 0.0, %v452
    %454 = vdwg.mxu0
    %455 = vmatpush.msra.mxu0 %v142
    %456 = vmatpush.msra.mxu0 %v138
    %457 = vmatpush.msra.mxu0 %v134
    %458 = vmatpush.msra.mxu0 %v130
    %459 = vmatpush.msra.mxu0 %v126
    %460 = vmatpush.msra.mxu0 %v122
    %461 = vmatpush.msra.mxu0 %v118
    %462 = vmatpush.msra.mxu0 %v114
    %463 = vmatpush.msra.mxu0 %v110
    %464 = vmatpush.msra.mxu0 %v106
    %465 = vmatpush.msra.mxu0 %v102
    %466 = vmatpush.msra.mxu0 %v98
    %467 = vmatpush.msra.mxu0 %v94
    %468 = vmatpush.msra.mxu0 %v90
    %469 = vmatpush.msra.mxu0 %v86
    %470 = vmatpush.msra.mxu0 %v82
    %471 = vmatmul.f32.gmra.mxu0 0.0
    %v472 = vpop.f32.mrf.mxu0
    %v473 = vadd.f32 0.0, %v472
    %474 = vdwg.mxu0
    %v475 = vadd.f32 %v391, %v413
    %v476 = vadd.f32 %v392, %v433
    %v477 = vadd.f32 %v393, %v453
    %v478 = vadd.f32 %v394, %v473
    %v479 = vxor.u32 %v475, 2147483648
    %v480 = vxor.u32 %v476, 2147483648
    %v481 = vxor.u32 %v477, 2147483648
    %v482 = vmul.f32 %v479, 1.442695
    %v483 = vpow.pop %v482
    %v484 = vmul.f32 %v480, 1.442695
    %v485 = vpow.pop %v484
    %v486 = vmul.f32 %v481, 1.442695
    %v487 = vpow.pop %v486
    %v488 = vadd.f32 %v483, 1.0
    %v489 = vadd.f32 %v485, 1.0
    %v490 = vadd.f32 %v487, 1.0
    %v491 = vrcp.pop %v488
    %v492 = vmul.f32 %v488, %v491
    %v493 = vsub.f32 1.0, %v492
    %v494 = vmul.f32 %v491, %v493
    %v495 = vadd.f32 %v491, %v494
    %vm496 = vweird.f32 %v488
    %vm497 = vweird.f32 %v491
    %vm498 = vmor %vm496, %vm497
    %v499 = vsel %vm498, %v491, %v495
    %v500 = vand.u32 2147483647, %v488
    %vm501 = vcmp.eq.f32.partialorder %v500, 8.507059e+37
    %v502 = vand.u32 %v488, 2147483648
    %v503 = vor.u32 1.1754944e-38, %v502
    %v504 = vsel %vm501, %v503, %v499
    %v505 = vmul.f32 1.0, %v504
    %v506 = vrcp.pop %v489
    %v507 = vmul.f32 %v489, %v506
    %v508 = vsub.f32 1.0, %v507
    %v509 = vmul.f32 %v506, %v508
    %v510 = vadd.f32 %v506, %v509
    %vm511 = vweird.f32 %v489
    %vm512 = vweird.f32 %v506
    %vm513 = vmor %vm511, %vm512
    %v514 = vsel %vm513, %v506, %v510
    %v515 = vand.u32 2147483647, %v489
    %vm516 = vcmp.eq.f32.partialorder %v515, 8.507059e+37
    %v517 = vand.u32 %v489, 2147483648
    %v518 = vor.u32 1.1754944e-38, %v517
    %v519 = vsel %vm516, %v518, %v514
    %v520 = vmul.f32 1.0, %v519
    %v521 = vrcp.pop %v490
    %v522 = vmul.f32 %v490, %v521
    %v523 = vsub.f32 1.0, %v522
    %v524 = vmul.f32 %v521, %v523
    %v525 = vadd.f32 %v521, %v524
    %vm526 = vweird.f32 %v490
    %vm527 = vweird.f32 %v521
    %vm528 = vmor %vm526, %vm527
    %v529 = vsel %vm528, %v521, %v525
    %v530 = vand.u32 2147483647, %v490
    %vm531 = vcmp.eq.f32.partialorder %v530, 8.507059e+37
    %v532 = vand.u32 %v490, 2147483648
    %v533 = vor.u32 1.1754944e-38, %v532
    %v534 = vsel %vm531, %v533, %v529
    %v535 = vmul.f32 1.0, %v534
    %v536 = vtanh.pop %v478
    %v537 = vmul.f32 %v520, 0.0
    %v538 = vmul.f32 %v505, %v536
    %v539 = vadd.f32 %v537, %v538
    %v540 = vtanh.pop %v539
    %v541 = vmul.f32 %v535, %v540
    %542 = vmatpush.msra.mxu0 %v203
    %543 = vmatpush.msra.mxu0 %v199
    %544 = vmatpush.msra.mxu0 %v195
    %545 = vmatpush.msra.mxu0 %v191
    %546 = vmatpush.msra.mxu0 %v187
    %547 = vmatpush.msra.mxu0 %v183
    %548 = vmatpush.msra.mxu0 %v179
    %549 = vmatpush.msra.mxu0 %v175
    %550 = vmatpush.msra.mxu0 %v171
    %551 = vmatpush.msra.mxu0 %v167
    %552 = vmatpush.msra.mxu0 %v163
    %553 = vmatpush.msra.mxu0 %v159
    %554 = vmatpush.msra.mxu0 %v155
    %555 = vmatpush.msra.mxu0 %v151
    %556 = vmatpush.msra.mxu0 %v147
    %557 = vmatpush.msra.mxu0 %v143
    %558 = vmatmul.f32.gmra.mxu0 %v541
    %v559 = vpop.f32.mrf.mxu0
    %v560 = vadd.f32 0.0, %v559
    %561 = vdwg.mxu0
    %562 = vmatpush.msra.mxu0 %v204
    %563 = vmatpush.msra.mxu0 %v200
    %564 = vmatpush.msra.mxu0 %v196
    %565 = vmatpush.msra.mxu0 %v192
    %566 = vmatpush.msra.mxu0 %v188
    %567 = vmatpush.msra.mxu0 %v184
    %568 = vmatpush.msra.mxu0 %v180
    %569 = vmatpush.msra.mxu0 %v176
    %570 = vmatpush.msra.mxu0 %v172
    %571 = vmatpush.msra.mxu0 %v168
    %572 = vmatpush.msra.mxu0 %v164
    %573 = vmatpush.msra.mxu0 %v160
    %574 = vmatpush.msra.mxu0 %v156
    %575 = vmatpush.msra.mxu0 %v152
    %576 = vmatpush.msra.mxu0 %v148
    %577 = vmatpush.msra.mxu0 %v144
    %578 = vmatmul.f32.gmra.mxu0 %v541
    %v579 = vpop.f32.mrf.mxu0
    %v580 = vadd.f32 0.0, %v579
    %581 = vdwg.mxu0
    %582 = vmatpush.msra.mxu0 %v205
    %583 = vmatpush.msra.mxu0 %v201
    %584 = vmatpush.msra.mxu0 %v197
    %585 = vmatpush.msra.mxu0 %v193
    %586 = vmatpush.msra.mxu0 %v189
    %587 = vmatpush.msra.mxu0 %v185
    %588 = vmatpush.msra.mxu0 %v181
    %589 = vmatpush.msra.mxu0 %v177
    %590 = vmatpush.msra.mxu0 %v173
    %591 = vmatpush.msra.mxu0 %v169
    %592 = vmatpush.msra.mxu0 %v165
    %593 = vmatpush.msra.mxu0 %v161
    %594 = vmatpush.msra.mxu0 %v157
    %595 = vmatpush.msra.mxu0 %v153
    %596 = vmatpush.msra.mxu0 %v149
    %597 = vmatpush.msra.mxu0 %v145
    %598 = vmatmul.f32.gmra.mxu0 %v541
    %v599 = vpop.f32.mrf.mxu0
    %v600 = vadd.f32 0.0, %v599
    %601 = vdwg.mxu0
    %602 = vmatpush.msra.mxu0 %v206
    %603 = vmatpush.msra.mxu0 %v202
    %604 = vmatpush.msra.mxu0 %v198
    %605 = vmatpush.msra.mxu0 %v194
    %606 = vmatpush.msra.mxu0 %v190
    %607 = vmatpush.msra.mxu0 %v186
    %608 = vmatpush.msra.mxu0 %v182
    %609 = vmatpush.msra.mxu0 %v178
    %610 = vmatpush.msra.mxu0 %v174
    %611 = vmatpush.msra.mxu0 %v170
    %612 = vmatpush.msra.mxu0 %v166
    %613 = vmatpush.msra.mxu0 %v162
    %614 = vmatpush.msra.mxu0 %v158
    %615 = vmatpush.msra.mxu0 %v154
    %616 = vmatpush.msra.mxu0 %v150
    %617 = vmatpush.msra.mxu0 %v146
    %618 = vmatmul.f32.gmra.mxu0 %v541
    %v619 = vpop.f32.mrf.mxu0
    %v620 = vadd.f32 0.0, %v619
    %621 = vdwg.mxu0
    %v622 = vadd.f32 %v319, %v560
    %v623 = vadd.f32 %v339, %v580
    %v624 = vadd.f32 %v359, %v600
    %v625 = vadd.f32 %v379, %v620
    %v626 = vxor.u32 %v622, 2147483648
    %v627 = vxor.u32 %v623, 2147483648
    %v628 = vxor.u32 %v624, 2147483648
    %v629 = vmul.f32 %v626, 1.442695
    %v630 = vpow.pop %v629
    %v631 = vmul.f32 %v627, 1.442695
    %v632 = vpow.pop %v631
    %v633 = vmul.f32 %v628, 1.442695
    %v634 = vpow.pop %v633
    %v635 = vadd.f32 %v630, 1.0
    %v636 = vadd.f32 %v632, 1.0
    %v637 = vadd.f32 %v634, 1.0
    %v638 = vrcp.pop %v635
    %v639 = vmul.f32 %v635, %v638
    %v640 = vsub.f32 1.0, %v639
    %v641 = vmul.f32 %v638, %v640
    %v642 = vadd.f32 %v638, %v641
    %vm643 = vweird.f32 %v635
    %vm644 = vweird.f32 %v638
    %vm645 = vmor %vm643, %vm644
    %v646 = vsel %vm645, %v638, %v642
    %v647 = vand.u32 2147483647, %v635
    %vm648 = vcmp.eq.f32.partialorder %v647, 8.507059e+37
    %v649 = vand.u32 %v635, 2147483648
    %v650 = vor.u32 1.1754944e-38, %v649
    %v651 = vsel %vm648, %v650, %v646
    %v652 = vmul.f32 1.0, %v651
    %v653 = vrcp.pop %v636
    %v654 = vmul.f32 %v636, %v653
    %v655 = vsub.f32 1.0, %v654
    %v656 = vmul.f32 %v653, %v655
    %v657 = vadd.f32 %v653, %v656
    %vm658 = vweird.f32 %v636
    %vm659 = vweird.f32 %v653
    %vm660 = vmor %vm658, %vm659
    %v661 = vsel %vm660, %v653, %v657
    %v662 = vand.u32 2147483647, %v636
    %vm663 = vcmp.eq.f32.partialorder %v662, 8.507059e+37
    %v664 = vand.u32 %v636, 2147483648
    %v665 = vor.u32 1.1754944e-38, %v664
    %v666 = vsel %vm663, %v665, %v661
    %v667 = vmul.f32 1.0, %v666
    %v668 = vrcp.pop %v637
    %v669 = vmul.f32 %v637, %v668
    %v670 = vsub.f32 1.0, %v669
    %v671 = vmul.f32 %v668, %v670
    %v672 = vadd.f32 %v668, %v671
    %vm673 = vweird.f32 %v637
    %vm674 = vweird.f32 %v668
    %vm675 = vmor %vm673, %vm674
    %v676 = vsel %vm675, %v668, %v672
    %v677 = vand.u32 2147483647, %v637
    %vm678 = vcmp.eq.f32.partialorder %v677, 8.507059e+37
    %v679 = vand.u32 %v637, 2147483648
    %v680 = vor.u32 1.1754944e-38, %v679
    %v681 = vsel %vm678, %v680, %v676
    %v682 = vmul.f32 1.0, %v681
    %v683 = vtanh.pop %v625
    %v684 = vmul.f32 %v667, 0.0
    %v685 = vmul.f32 %v652, %v683
    %v686 = vadd.f32 %v684, %v685
    %v687 = vtanh.pop %v686
    %v688 = vmul.f32 %v682, %v687
    %689 = vmatpush.msra.mxu0 %v267
    %690 = vmatpush.msra.mxu0 %v263
    %691 = vmatpush.msra.mxu0 %v259
    %692 = vmatpush.msra.mxu0 %v255
    %693 = vmatpush.msra.mxu0 %v251
    %694 = vmatpush.msra.mxu0 %v247
    %695 = vmatpush.msra.mxu0 %v243
    %696 = vmatpush.msra.mxu0 %v239
    %697 = vmatpush.msra.mxu0 %v235
    %698 = vmatpush.msra.mxu0 %v231
    %699 = vmatpush.msra.mxu0 %v227
    %700 = vmatpush.msra.mxu0 %v223
    %701 = vmatpush.msra.mxu0 %v219
    %702 = vmatpush.msra.mxu0 %v215
    %703 = vmatpush.msra.mxu0 %v211
    %704 = vmatpush.msra.mxu0 %v207
    %705 = vmatmul.f32.gmra.mxu0 %v688
    %v706 = vpop.f32.mrf.mxu0
    %v707 = vadd.f32 %v293, %v706
    %708 = vdwg.mxu0
    %709 = vmatpush.msra.mxu0 %v268
    %710 = vmatpush.msra.mxu0 %v264
    %711 = vmatpush.msra.mxu0 %v260
    %712 = vmatpush.msra.mxu0 %v256
    %713 = vmatpush.msra.mxu0 %v252
    %714 = vmatpush.msra.mxu0 %v248
    %715 = vmatpush.msra.mxu0 %v244
    %716 = vmatpush.msra.mxu0 %v240
    %717 = vmatpush.msra.mxu0 %v236
    %718 = vmatpush.msra.mxu0 %v232
    %719 = vmatpush.msra.mxu0 %v228
    %720 = vmatpush.msra.mxu0 %v224
    %721 = vmatpush.msra.mxu0 %v220
    %722 = vmatpush.msra.mxu0 %v216
    %723 = vmatpush.msra.mxu0 %v212
    %724 = vmatpush.msra.mxu0 %v208
    %725 = vmatmul.f32.gmra.mxu0 %v688
    %v726 = vpop.f32.mrf.mxu0
    %v727 = vadd.f32 %v294, %v726
    %728 = vdwg.mxu0
    %729 = vmatpush.msra.mxu0 %v269
    %730 = vmatpush.msra.mxu0 %v265
    %731 = vmatpush.msra.mxu0 %v261
    %732 = vmatpush.msra.mxu0 %v257
    %733 = vmatpush.msra.mxu0 %v253
    %734 = vmatpush.msra.mxu0 %v249
    %735 = vmatpush.msra.mxu0 %v245
    %736 = vmatpush.msra.mxu0 %v241
    %737 = vmatpush.msra.mxu0 %v237
    %738 = vmatpush.msra.mxu0 %v233
    %739 = vmatpush.msra.mxu0 %v229
    %740 = vmatpush.msra.mxu0 %v225
    %741 = vmatpush.msra.mxu0 %v221
    %742 = vmatpush.msra.mxu0 %v217
    %743 = vmatpush.msra.mxu0 %v213
    %744 = vmatpush.msra.mxu0 %v209
    %745 = vmatmul.f32.gmra.mxu0 %v688
    %v746 = vpop.f32.mrf.mxu0
    %v747 = vadd.f32 %v295, %v746
    %748 = vdwg.mxu0
    %749 = vmatpush.msra.mxu0 %v270
    %750 = vmatpush.msra.mxu0 %v266
    %751 = vmatpush.msra.mxu0 %v262
    %752 = vmatpush.msra.mxu0 %v258
    %753 = vmatpush.msra.mxu0 %v254
    %754 = vmatpush.msra.mxu0 %v250
    %755 = vmatpush.msra.mxu0 %v246
    %756 = vmatpush.msra.mxu0 %v242
    %757 = vmatpush.msra.mxu0 %v238
    %758 = vmatpush.msra.mxu0 %v234
    %759 = vmatpush.msra.mxu0 %v230
    %760 = vmatpush.msra.mxu0 %v226
    %761 = vmatpush.msra.mxu0 %v222
    %762 = vmatpush.msra.mxu0 %v218
    %763 = vmatpush.msra.mxu0 %v214
    %764 = vmatpush.msra.mxu0 %v210
    %765 = vmatmul.f32.gmra.mxu0 %v688
    %v766 = vpop.f32.mrf.mxu0
    %v767 = vadd.f32 %v296, %v766
    %768 = vdwg.mxu0
    %s769 = scalar_lea.vmem %s0, 8
    %v770 = vld [vmem:[%s769] sm:$0xff]
    %772 = vset.pattern.permute.xlu0 0
    %773 = vperm.xlu0 %772, %v770
    %v774 = vpop.permute.xlu0 %773
    %v776 = vmul.f32 %v774, %v273
    %v777 = vmul.f32 %v774, %v274
    %v778 = vmul.f32 %v774, %v275
    %v779 = vmul.f32 %v774, %v276
    %v780 = vadd.f32 %v776, %v283
    %v781 = vadd.f32 %v777, %v284
    %v782 = vadd.f32 %v778, %v285
    %v783 = vadd.f32 %v779, %v286
    %784 = vmatpush.msra.mxu0 %v139
    %785 = vmatpush.msra.mxu0 %v135
    %786 = vmatpush.msra.mxu0 %v131
    %787 = vmatpush.msra.mxu0 %v127
    %788 = vmatpush.msra.mxu0 %v123
    %789 = vmatpush.msra.mxu0 %v119
    %790 = vmatpush.msra.mxu0 %v115
    %791 = vmatpush.msra.mxu0 %v111
    %792 = vmatpush.msra.mxu0 %v107
    %793 = vmatpush.msra.mxu0 %v103
    %794 = vmatpush.msra.mxu0 %v99
    %795 = vmatpush.msra.mxu0 %v95
    %796 = vmatpush.msra.mxu0 %v91
    %797 = vmatpush.msra.mxu0 %v87
    %798 = vmatpush.msra.mxu0 %v83
    %799 = vmatpush.msra.mxu0 %v79
    %800 = vmatmul.f32.gmra.mxu0 %v541
    %v801 = vpop.f32.mrf.mxu0
    %v802 = vadd.f32 0.0, %v801
    %803 = vdwg.mxu0
    %804 = vmatpush.msra.mxu0 %v140
    %805 = vmatpush.msra.mxu0 %v136
    %806 = vmatpush.msra.mxu0 %v132
    %807 = vmatpush.msra.mxu0 %v128
    %808 = vmatpush.msra.mxu0 %v124
    %809 = vmatpush.msra.mxu0 %v120
    %810 = vmatpush.msra.mxu0 %v116
    %811 = vmatpush.msra.mxu0 %v112
    %812 = vmatpush.msra.mxu0 %v108
    %813 = vmatpush.msra.mxu0 %v104
    %814 = vmatpush.msra.mxu0 %v100
    %815 = vmatpush.msra.mxu0 %v96
    %816 = vmatpush.msra.mxu0 %v92
    %817 = vmatpush.msra.mxu0 %v88
    %818 = vmatpush.msra.mxu0 %v84
    %819 = vmatpush.msra.mxu0 %v80
    %820 = vmatmul.f32.gmra.mxu0 %v541
    %v821 = vpop.f32.mrf.mxu0
    %v822 = vadd.f32 0.0, %v821
    %823 = vdwg.mxu0
    %824 = vmatpush.msra.mxu0 %v141
    %825 = vmatpush.msra.mxu0 %v137
    %826 = vmatpush.msra.mxu0 %v133
    %827 = vmatpush.msra.mxu0 %v129
    %828 = vmatpush.msra.mxu0 %v125
    %829 = vmatpush.msra.mxu0 %v121
    %830 = vmatpush.msra.mxu0 %v117
    %831 = vmatpush.msra.mxu0 %v113
    %832 = vmatpush.msra.mxu0 %v109
    %833 = vmatpush.msra.mxu0 %v105
    %834 = vmatpush.msra.mxu0 %v101
    %835 = vmatpush.msra.mxu0 %v97
    %836 = vmatpush.msra.mxu0 %v93
    %837 = vmatpush.msra.mxu0 %v89
    %838 = vmatpush.msra.mxu0 %v85
    %839 = vmatpush.msra.mxu0 %v81
    %840 = vmatmul.f32.gmra.mxu0 %v541
    %v841 = vpop.f32.mrf.mxu0
    %v842 = vadd.f32 0.0, %v841
    %843 = vdwg.mxu0
    %844 = vmatpush.msra.mxu0 %v142
    %845 = vmatpush.msra.mxu0 %v138
    %846 = vmatpush.msra.mxu0 %v134
    %847 = vmatpush.msra.mxu0 %v130
    %848 = vmatpush.msra.mxu0 %v126
    %849 = vmatpush.msra.mxu0 %v122
    %850 = vmatpush.msra.mxu0 %v118
    %851 = vmatpush.msra.mxu0 %v114
    %852 = vmatpush.msra.mxu0 %v110
    %853 = vmatpush.msra.mxu0 %v106
    %854 = vmatpush.msra.mxu0 %v102
    %855 = vmatpush.msra.mxu0 %v98
    %856 = vmatpush.msra.mxu0 %v94
    %857 = vmatpush.msra.mxu0 %v90
    %858 = vmatpush.msra.mxu0 %v86
    %859 = vmatpush.msra.mxu0 %v82
    %860 = vmatmul.f32.gmra.mxu0 %v541
    %v861 = vpop.f32.mrf.mxu0
    %v862 = vadd.f32 0.0, %v861
    %863 = vdwg.mxu0
    %v864 = vadd.f32 %v780, %v802
    %v865 = vadd.f32 %v781, %v822
    %v866 = vadd.f32 %v782, %v842
    %v867 = vadd.f32 %v783, %v862
    %v868 = vxor.u32 %v864, 2147483648
    %v869 = vxor.u32 %v865, 2147483648
    %v870 = vxor.u32 %v866, 2147483648
    %v871 = vmul.f32 %v868, 1.442695
    %v872 = vpow.pop %v871
    %v873 = vmul.f32 %v869, 1.442695
    %v874 = vpow.pop %v873
    %v875 = vmul.f32 %v870, 1.442695
    %v876 = vpow.pop %v875
    %v877 = vadd.f32 %v872, 1.0
    %v878 = vadd.f32 %v874, 1.0
    %v879 = vadd.f32 %v876, 1.0
    %v880 = vrcp.pop %v877
    %v881 = vmul.f32 %v877, %v880
    %v882 = vsub.f32 1.0, %v881
    %v883 = vmul.f32 %v880, %v882
    %v884 = vadd.f32 %v880, %v883
    %vm885 = vweird.f32 %v877
    %vm886 = vweird.f32 %v880
    %vm887 = vmor %vm885, %vm886
    %v888 = vsel %vm887, %v880, %v884
    %v889 = vand.u32 2147483647, %v877
    %vm890 = vcmp.eq.f32.partialorder %v889, 8.507059e+37
    %v891 = vand.u32 %v877, 2147483648
    %v892 = vor.u32 1.1754944e-38, %v891
    %v893 = vsel %vm890, %v892, %v888
    %v894 = vmul.f32 1.0, %v893
    %v895 = vrcp.pop %v878
    %v896 = vmul.f32 %v878, %v895
    %v897 = vsub.f32 1.0, %v896
    %v898 = vmul.f32 %v895, %v897
    %v899 = vadd.f32 %v895, %v898
    %vm900 = vweird.f32 %v878
    %vm901 = vweird.f32 %v895
    %vm902 = vmor %vm900, %vm901
    %v903 = vsel %vm902, %v895, %v899
    %v904 = vand.u32 2147483647, %v878
    %vm905 = vcmp.eq.f32.partialorder %v904, 8.507059e+37
    %v906 = vand.u32 %v878, 2147483648
    %v907 = vor.u32 1.1754944e-38, %v906
    %v908 = vsel %vm905, %v907, %v903
    %v909 = vmul.f32 1.0, %v908
    %v910 = vrcp.pop %v879
    %v911 = vmul.f32 %v879, %v910
    %v912 = vsub.f32 1.0, %v911
    %v913 = vmul.f32 %v910, %v912
    %v914 = vadd.f32 %v910, %v913
    %vm915 = vweird.f32 %v879
    %vm916 = vweird.f32 %v910
    %vm917 = vmor %vm915, %vm916
    %v918 = vsel %vm917, %v910, %v914
    %v919 = vand.u32 2147483647, %v879
    %vm920 = vcmp.eq.f32.partialorder %v919, 8.507059e+37
    %v921 = vand.u32 %v879, 2147483648
    %v922 = vor.u32 1.1754944e-38, %v921
    %v923 = vsel %vm920, %v922, %v918
    %v924 = vmul.f32 1.0, %v923
    %v925 = vtanh.pop %v867
    %v926 = vmul.f32 %v909, %v539
    %v927 = vmul.f32 %v894, %v925
    %v928 = vadd.f32 %v926, %v927
    %v929 = vtanh.pop %v928
    %v930 = vmul.f32 %v924, %v929
    %931 = vmatpush.msra.mxu0 %v203
    %932 = vmatpush.msra.mxu0 %v199
    %933 = vmatpush.msra.mxu0 %v195
    %934 = vmatpush.msra.mxu0 %v191
    %935 = vmatpush.msra.mxu0 %v187
    %936 = vmatpush.msra.mxu0 %v183
    %937 = vmatpush.msra.mxu0 %v179
    %938 = vmatpush.msra.mxu0 %v175
    %939 = vmatpush.msra.mxu0 %v171
    %940 = vmatpush.msra.mxu0 %v167
    %941 = vmatpush.msra.mxu0 %v163
    %942 = vmatpush.msra.mxu0 %v159
    %943 = vmatpush.msra.mxu0 %v155
    %944 = vmatpush.msra.mxu0 %v151
    %945 = vmatpush.msra.mxu0 %v147
    %946 = vmatpush.msra.mxu0 %v143
    %947 = vmatmul.f32.gmra.mxu0 %v930
    %v948 = vpop.f32.mrf.mxu0
    %v949 = vadd.f32 0.0, %v948
    %950 = vdwg.mxu0
    %951 = vmatpush.msra.mxu0 %v204
    %952 = vmatpush.msra.mxu0 %v200
    %953 = vmatpush.msra.mxu0 %v196
    %954 = vmatpush.msra.mxu0 %v192
    %955 = vmatpush.msra.mxu0 %v188
    %956 = vmatpush.msra.mxu0 %v184
    %957 = vmatpush.msra.mxu0 %v180
    %958 = vmatpush.msra.mxu0 %v176
    %959 = vmatpush.msra.mxu0 %v172
    %960 = vmatpush.msra.mxu0 %v168
    %961 = vmatpush.msra.mxu0 %v164
    %962 = vmatpush.msra.mxu0 %v160
    %963 = vmatpush.msra.mxu0 %v156
    %964 = vmatpush.msra.mxu0 %v152
    %965 = vmatpush.msra.mxu0 %v148
    %966 = vmatpush.msra.mxu0 %v144
    %967 = vmatmul.f32.gmra.mxu0 %v930
    %v968 = vpop.f32.mrf.mxu0
    %v969 = vadd.f32 0.0, %v968
    %970 = vdwg.mxu0
    %971 = vmatpush.msra.mxu0 %v205
    %972 = vmatpush.msra.mxu0 %v201
    %973 = vmatpush.msra.mxu0 %v197
    %974 = vmatpush.msra.mxu0 %v193
    %975 = vmatpush.msra.mxu0 %v189
    %976 = vmatpush.msra.mxu0 %v185
    %977 = vmatpush.msra.mxu0 %v181
    %978 = vmatpush.msra.mxu0 %v177
    %979 = vmatpush.msra.mxu0 %v173
    %980 = vmatpush.msra.mxu0 %v169
    %981 = vmatpush.msra.mxu0 %v165
    %982 = vmatpush.msra.mxu0 %v161
    %983 = vmatpush.msra.mxu0 %v157
    %984 = vmatpush.msra.mxu0 %v153
    %985 = vmatpush.msra.mxu0 %v149
    %986 = vmatpush.msra.mxu0 %v145
    %987 = vmatmul.f32.gmra.mxu0 %v930
    %v988 = vpop.f32.mrf.mxu0
    %v989 = vadd.f32 0.0, %v988
    %990 = vdwg.mxu0
    %991 = vmatpush.msra.mxu0 %v206
    %992 = vmatpush.msra.mxu0 %v202
    %993 = vmatpush.msra.mxu0 %v198
    %994 = vmatpush.msra.mxu0 %v194
    %995 = vmatpush.msra.mxu0 %v190
    %996 = vmatpush.msra.mxu0 %v186
    %997 = vmatpush.msra.mxu0 %v182
    %998 = vmatpush.msra.mxu0 %v178
    %999 = vmatpush.msra.mxu0 %v174
    %1000 = vmatpush.msra.mxu0 %v170
    %1001 = vmatpush.msra.mxu0 %v166
    %1002 = vmatpush.msra.mxu0 %v162
    %1003 = vmatpush.msra.mxu0 %v158
    %1004 = vmatpush.msra.mxu0 %v154
    %1005 = vmatpush.msra.mxu0 %v150
    %1006 = vmatpush.msra.mxu0 %v146
    %1007 = vmatmul.f32.gmra.mxu0 %v930
    %v1008 = vpop.f32.mrf.mxu0
    %v1009 = vadd.f32 0.0, %v1008
    %1010 = vdwg.mxu0
    %v1011 = vadd.f32 %v707, %v949
    %v1012 = vadd.f32 %v727, %v969
    %v1013 = vadd.f32 %v747, %v989
    %v1014 = vadd.f32 %v767, %v1009
    %v1015 = vxor.u32 %v1011, 2147483648
    %v1016 = vxor.u32 %v1012, 2147483648
    %v1017 = vxor.u32 %v1013, 2147483648
    %v1018 = vmul.f32 %v1015, 1.442695
    %v1019 = vpow.pop %v1018
    %v1020 = vmul.f32 %v1016, 1.442695
    %v1021 = vpow.pop %v1020
    %v1022 = vmul.f32 %v1017, 1.442695
    %v1023 = vpow.pop %v1022
    %v1024 = vadd.f32 %v1019, 1.0
    %v1025 = vadd.f32 %v1021, 1.0
    %v1026 = vadd.f32 %v1023, 1.0
    %v1027 = vrcp.pop %v1024
    %v1028 = vmul.f32 %v1024, %v1027
    %v1029 = vsub.f32 1.0, %v1028
    %v1030 = vmul.f32 %v1027, %v1029
    %v1031 = vadd.f32 %v1027, %v1030
    %vm1032 = vweird.f32 %v1024
    %vm1033 = vweird.f32 %v1027
    %vm1034 = vmor %vm1032, %vm1033
    %v1035 = vsel %vm1034, %v1027, %v1031
    %v1036 = vand.u32 2147483647, %v1024
    %vm1037 = vcmp.eq.f32.partialorder %v1036, 8.507059e+37
    %v1038 = vand.u32 %v1024, 2147483648
    %v1039 = vor.u32 1.1754944e-38, %v1038
    %v1040 = vsel %vm1037, %v1039, %v1035
    %v1041 = vmul.f32 1.0, %v1040
    %v1042 = vrcp.pop %v1025
    %v1043 = vmul.f32 %v1025, %v1042
    %v1044 = vsub.f32 1.0, %v1043
    %v1045 = vmul.f32 %v1042, %v1044
    %v1046 = vadd.f32 %v1042, %v1045
    %vm1047 = vweird.f32 %v1025
    %vm1048 = vweird.f32 %v1042
    %vm1049 = vmor %vm1047, %vm1048
    %v1050 = vsel %vm1049, %v1042, %v1046
    %v1051 = vand.u32 2147483647, %v1025
    %vm1052 = vcmp.eq.f32.partialorder %v1051, 8.507059e+37
    %v1053 = vand.u32 %v1025, 2147483648
    %v1054 = vor.u32 1.1754944e-38, %v1053
    %v1055 = vsel %vm1052, %v1054, %v1050
    %v1056 = vmul.f32 1.0, %v1055
    %v1057 = vrcp.pop %v1026
    %v1058 = vmul.f32 %v1026, %v1057
    %v1059 = vsub.f32 1.0, %v1058
    %v1060 = vmul.f32 %v1057, %v1059
    %v1061 = vadd.f32 %v1057, %v1060
    %vm1062 = vweird.f32 %v1026
    %vm1063 = vweird.f32 %v1057
    %vm1064 = vmor %vm1062, %vm1063
    %v1065 = vsel %vm1064, %v1057, %v1061
    %v1066 = vand.u32 2147483647, %v1026
    %vm1067 = vcmp.eq.f32.partialorder %v1066, 8.507059e+37
    %v1068 = vand.u32 %v1026, 2147483648
    %v1069 = vor.u32 1.1754944e-38, %v1068
    %v1070 = vsel %vm1067, %v1069, %v1065
    %v1071 = vmul.f32 1.0, %v1070
    %v1072 = vtanh.pop %v1014
    %v1073 = vmul.f32 %v1056, %v686
    %v1074 = vmul.f32 %v1041, %v1072
    %v1075 = vadd.f32 %v1073, %v1074
    %v1076 = vtanh.pop %v1075
    %v1077 = vmul.f32 %v1071, %v1076
    %1078 = vmatpush.msra.mxu0 %v267
    %1079 = vmatpush.msra.mxu0 %v263
    %1080 = vmatpush.msra.mxu0 %v259
    %1081 = vmatpush.msra.mxu0 %v255
    %1082 = vmatpush.msra.mxu0 %v251
    %1083 = vmatpush.msra.mxu0 %v247
    %1084 = vmatpush.msra.mxu0 %v243
    %1085 = vmatpush.msra.mxu0 %v239
    %1086 = vmatpush.msra.mxu0 %v235
    %1087 = vmatpush.msra.mxu0 %v231
    %1088 = vmatpush.msra.mxu0 %v227
    %1089 = vmatpush.msra.mxu0 %v223
    %1090 = vmatpush.msra.mxu0 %v219
    %1091 = vmatpush.msra.mxu0 %v215
    %1092 = vmatpush.msra.mxu0 %v211
    %1093 = vmatpush.msra.mxu0 %v207
    %1094 = vmatmul.f32.gmra.mxu0 %v1077
    %v1095 = vpop.f32.mrf.mxu0
    %v1096 = vadd.f32 %v293, %v1095
    %1097 = vdwg.mxu0
    %1098 = vmatpush.msra.mxu0 %v268
    %1099 = vmatpush.msra.mxu0 %v264
    %1100 = vmatpush.msra.mxu0 %v260
    %1101 = vmatpush.msra.mxu0 %v256
    %1102 = vmatpush.msra.mxu0 %v252
    %1103 = vmatpush.msra.mxu0 %v248
    %1104 = vmatpush.msra.mxu0 %v244
    %1105 = vmatpush.msra.mxu0 %v240
    %1106 = vmatpush.msra.mxu0 %v236
    %1107 = vmatpush.msra.mxu0 %v232
    %1108 = vmatpush.msra.mxu0 %v228
    %1109 = vmatpush.msra.mxu0 %v224
    %1110 = vmatpush.msra.mxu0 %v220
    %1111 = vmatpush.msra.mxu0 %v216
    %1112 = vmatpush.msra.mxu0 %v212
    %1113 = vmatpush.msra.mxu0 %v208
    %1114 = vmatmul.f32.gmra.mxu0 %v1077
    %v1115 = vpop.f32.mrf.mxu0
    %v1116 = vadd.f32 %v294, %v1115
    %1117 = vdwg.mxu0
    %1118 = vmatpush.msra.mxu0 %v269
    %1119 = vmatpush.msra.mxu0 %v265
    %1120 = vmatpush.msra.mxu0 %v261
    %1121 = vmatpush.msra.mxu0 %v257
    %1122 = vmatpush.msra.mxu0 %v253
    %1123 = vmatpush.msra.mxu0 %v249
    %1124 = vmatpush.msra.mxu0 %v245
    %1125 = vmatpush.msra.mxu0 %v241
    %1126 = vmatpush.msra.mxu0 %v237
    %1127 = vmatpush.msra.mxu0 %v233
    %1128 = vmatpush.msra.mxu0 %v229
    %1129 = vmatpush.msra.mxu0 %v225
    %1130 = vmatpush.msra.mxu0 %v221
    %1131 = vmatpush.msra.mxu0 %v217
    %1132 = vmatpush.msra.mxu0 %v213
    %1133 = vmatpush.msra.mxu0 %v209
    %1134 = vmatmul.f32.gmra.mxu0 %v1077
    %v1135 = vpop.f32.mrf.mxu0
    %v1136 = vadd.f32 %v295, %v1135
    %1137 = vdwg.mxu0
    %1138 = vmatpush.msra.mxu0 %v270
    %1139 = vmatpush.msra.mxu0 %v266
    %1140 = vmatpush.msra.mxu0 %v262
    %1141 = vmatpush.msra.mxu0 %v258
    %1142 = vmatpush.msra.mxu0 %v254
    %1143 = vmatpush.msra.mxu0 %v250
    %1144 = vmatpush.msra.mxu0 %v246
    %1145 = vmatpush.msra.mxu0 %v242
    %1146 = vmatpush.msra.mxu0 %v238
    %1147 = vmatpush.msra.mxu0 %v234
    %1148 = vmatpush.msra.mxu0 %v230
    %1149 = vmatpush.msra.mxu0 %v226
    %1150 = vmatpush.msra.mxu0 %v222
    %1151 = vmatpush.msra.mxu0 %v218
    %1152 = vmatpush.msra.mxu0 %v214
    %1153 = vmatpush.msra.mxu0 %v210
    %1154 = vmatmul.f32.gmra.mxu0 %v1077
    %v1155 = vpop.f32.mrf.mxu0
    %v1156 = vadd.f32 %v296, %v1155
    %1157 = vdwg.mxu0
    %s1158 = scalar_lea.vmem %s0, 16
    %v1159 = vld [vmem:[%s1158] sm:$0xff]
    %1161 = vset.pattern.permute.xlu0 0
    %1162 = vperm.xlu0 %1161, %v1159
    %v1163 = vpop.permute.xlu0 %1162
    %v1165 = vmul.f32 %v1163, %v273
    %v1166 = vmul.f32 %v1163, %v274
    %v1167 = vmul.f32 %v1163, %v275
    %v1168 = vmul.f32 %v1163, %v276
    %v1169 = vadd.f32 %v1165, %v283
    %v1170 = vadd.f32 %v1166, %v284
    %v1171 = vadd.f32 %v1167, %v285
    %v1172 = vadd.f32 %v1168, %v286
    %1173 = vmatpush.msra.mxu0 %v139
    %1174 = vmatpush.msra.mxu0 %v135
    %1175 = vmatpush.msra.mxu0 %v131
    %1176 = vmatpush.msra.mxu0 %v127
    %1177 = vmatpush.msra.mxu0 %v123
    %1178 = vmatpush.msra.mxu0 %v119
    %1179 = vmatpush.msra.mxu0 %v115
    %1180 = vmatpush.msra.mxu0 %v111
    %1181 = vmatpush.msra.mxu0 %v107
    %1182 = vmatpush.msra.mxu0 %v103
    %1183 = vmatpush.msra.mxu0 %v99
    %1184 = vmatpush.msra.mxu0 %v95
    %1185 = vmatpush.msra.mxu0 %v91
    %1186 = vmatpush.msra.mxu0 %v87
    %1187 = vmatpush.msra.mxu0 %v83
    %1188 = vmatpush.msra.mxu0 %v79
    %1189 = vmatmul.f32.gmra.mxu0 %v930
    %v1190 = vpop.f32.mrf.mxu0
    %v1191 = vadd.f32 0.0, %v1190
    %1192 = vdwg.mxu0
    %1193 = vmatpush.msra.mxu0 %v140
    %1194 = vmatpush.msra.mxu0 %v136
    %1195 = vmatpush.msra.mxu0 %v132
    %1196 = vmatpush.msra.mxu0 %v128
    %1197 = vmatpush.msra.mxu0 %v124
    %1198 = vmatpush.msra.mxu0 %v120
    %1199 = vmatpush.msra.mxu0 %v116
    %1200 = vmatpush.msra.mxu0 %v112
    %1201 = vmatpush.msra.mxu0 %v108
    %1202 = vmatpush.msra.mxu0 %v104
    %1203 = vmatpush.msra.mxu0 %v100
    %1204 = vmatpush.msra.mxu0 %v96
    %1205 = vmatpush.msra.mxu0 %v92
    %1206 = vmatpush.msra.mxu0 %v88
    %1207 = vmatpush.msra.mxu0 %v84
    %1208 = vmatpush.msra.mxu0 %v80
    %1209 = vmatmul.f32.gmra.mxu0 %v930
    %v1210 = vpop.f32.mrf.mxu0
    %v1211 = vadd.f32 0.0, %v1210
    %1212 = vdwg.mxu0
    %1213 = vmatpush.msra.mxu0 %v141
    %1214 = vmatpush.msra.mxu0 %v137
    %1215 = vmatpush.msra.mxu0 %v133
    %1216 = vmatpush.msra.mxu0 %v129
    %1217 = vmatpush.msra.mxu0 %v125
    %1218 = vmatpush.msra.mxu0 %v121
    %1219 = vmatpush.msra.mxu0 %v117
    %1220 = vmatpush.msra.mxu0 %v113
    %1221 = vmatpush.msra.mxu0 %v109
    %1222 = vmatpush.msra.mxu0 %v105
    %1223 = vmatpush.msra.mxu0 %v101
    %1224 = vmatpush.msra.mxu0 %v97
    %1225 = vmatpush.msra.mxu0 %v93
    %1226 = vmatpush.msra.mxu0 %v89
    %1227 = vmatpush.msra.mxu0 %v85
    %1228 = vmatpush.msra.mxu0 %v81
    %1229 = vmatmul.f32.gmra.mxu0 %v930
    %v1230 = vpop.f32.mrf.mxu0
    %v1231 = vadd.f32 0.0, %v1230
    %1232 = vdwg.mxu0
    %1233 = vmatpush.msra.mxu0 %v142
    %1234 = vmatpush.msra.mxu0 %v138
    %1235 = vmatpush.msra.mxu0 %v134
    %1236 = vmatpush.msra.mxu0 %v130
    %1237 = vmatpush.msra.mxu0 %v126
    %1238 = vmatpush.msra.mxu0 %v122
    %1239 = vmatpush.msra.mxu0 %v118
    %1240 = vmatpush.msra.mxu0 %v114
    %1241 = vmatpush.msra.mxu0 %v110
    %1242 = vmatpush.msra.mxu0 %v106
    %1243 = vmatpush.msra.mxu0 %v102
    %1244 = vmatpush.msra.mxu0 %v98
    %1245 = vmatpush.msra.mxu0 %v94
    %1246 = vmatpush.msra.mxu0 %v90
    %1247 = vmatpush.msra.mxu0 %v86
    %1248 = vmatpush.msra.mxu0 %v82
    %1249 = vmatmul.f32.gmra.mxu0 %v930
    %v1250 = vpop.f32.mrf.mxu0
    %v1251 = vadd.f32 0.0, %v1250
    %1252 = vdwg.mxu0
    %v1253 = vadd.f32 %v1169, %v1191
    %v1254 = vadd.f32 %v1170, %v1211
    %v1255 = vadd.f32 %v1171, %v1231
    %v1256 = vadd.f32 %v1172, %v1251
    %v1257 = vxor.u32 %v1253, 2147483648
    %v1258 = vxor.u32 %v1254, 2147483648
    %v1259 = vxor.u32 %v1255, 2147483648
    %v1260 = vmul.f32 %v1257, 1.442695
    %v1261 = vpow.pop %v1260
    %v1262 = vmul.f32 %v1258, 1.442695
    %v1263 = vpow.pop %v1262
    %v1264 = vmul.f32 %v1259, 1.442695
    %v1265 = vpow.pop %v1264
    %v1266 = vadd.f32 %v1261, 1.0
    %v1267 = vadd.f32 %v1263, 1.0
    %v1268 = vadd.f32 %v1265, 1.0
    %v1269 = vrcp.pop %v1266
    %v1270 = vmul.f32 %v1266, %v1269
    %v1271 = vsub.f32 1.0, %v1270
    %v1272 = vmul.f32 %v1269, %v1271
    %v1273 = vadd.f32 %v1269, %v1272
    %vm1274 = vweird.f32 %v1266
    %vm1275 = vweird.f32 %v1269
    %vm1276 = vmor %vm1274, %vm1275
    %v1277 = vsel %vm1276, %v1269, %v1273
    %v1278 = vand.u32 2147483647, %v1266
    %vm1279 = vcmp.eq.f32.partialorder %v1278, 8.507059e+37
    %v1280 = vand.u32 %v1266, 2147483648
    %v1281 = vor.u32 1.1754944e-38, %v1280
    %v1282 = vsel %vm1279, %v1281, %v1277
    %v1283 = vmul.f32 1.0, %v1282
    %v1284 = vrcp.pop %v1267
    %v1285 = vmul.f32 %v1267, %v1284
    %v1286 = vsub.f32 1.0, %v1285
    %v1287 = vmul.f32 %v1284, %v1286
    %v1288 = vadd.f32 %v1284, %v1287
    %vm1289 = vweird.f32 %v1267
    %vm1290 = vweird.f32 %v1284
    %vm1291 = vmor %vm1289, %vm1290
    %v1292 = vsel %vm1291, %v1284, %v1288
    %v1293 = vand.u32 2147483647, %v1267
    %vm1294 = vcmp.eq.f32.partialorder %v1293, 8.507059e+37
    %v1295 = vand.u32 %v1267, 2147483648
    %v1296 = vor.u32 1.1754944e-38, %v1295
    %v1297 = vsel %vm1294, %v1296, %v1292
    %v1298 = vmul.f32 1.0, %v1297
    %v1299 = vrcp.pop %v1268
    %v1300 = vmul.f32 %v1268, %v1299
    %v1301 = vsub.f32 1.0, %v1300
    %v1302 = vmul.f32 %v1299, %v1301
    %v1303 = vadd.f32 %v1299, %v1302
    %vm1304 = vweird.f32 %v1268
    %vm1305 = vweird.f32 %v1299
    %vm1306 = vmor %vm1304, %vm1305
    %v1307 = vsel %vm1306, %v1299, %v1303
    %v1308 = vand.u32 2147483647, %v1268
    %vm1309 = vcmp.eq.f32.partialorder %v1308, 8.507059e+37
    %v1310 = vand.u32 %v1268, 2147483648
    %v1311 = vor.u32 1.1754944e-38, %v1310
    %v1312 = vsel %vm1309, %v1311, %v1307
    %v1313 = vmul.f32 1.0, %v1312
    %v1314 = vtanh.pop %v1256
    %v1315 = vmul.f32 %v1298, %v928
    %v1316 = vmul.f32 %v1283, %v1314
    %v1317 = vadd.f32 %v1315, %v1316
    %v1318 = vtanh.pop %v1317
    %v1319 = vmul.f32 %v1313, %v1318
    %1320 = vmatpush.msra.mxu0 %v203
    %1321 = vmatpush.msra.mxu0 %v199
    %1322 = vmatpush.msra.mxu0 %v195
    %1323 = vmatpush.msra.mxu0 %v191
    %1324 = vmatpush.msra.mxu0 %v187
    %1325 = vmatpush.msra.mxu0 %v183
    %1326 = vmatpush.msra.mxu0 %v179
    %1327 = vmatpush.msra.mxu0 %v175
    %1328 = vmatpush.msra.mxu0 %v171
    %1329 = vmatpush.msra.mxu0 %v167
    %1330 = vmatpush.msra.mxu0 %v163
    %1331 = vmatpush.msra.mxu0 %v159
    %1332 = vmatpush.msra.mxu0 %v155
    %1333 = vmatpush.msra.mxu0 %v151
    %1334 = vmatpush.msra.mxu0 %v147
    %1335 = vmatpush.msra.mxu0 %v143
    %1336 = vmatmul.f32.gmra.mxu0 %v1319
    %v1337 = vpop.f32.mrf.mxu0
    %v1338 = vadd.f32 0.0, %v1337
    %1339 = vdwg.mxu0
    %1340 = vmatpush.msra.mxu0 %v204
    %1341 = vmatpush.msra.mxu0 %v200
    %1342 = vmatpush.msra.mxu0 %v196
    %1343 = vmatpush.msra.mxu0 %v192
    %1344 = vmatpush.msra.mxu0 %v188
    %1345 = vmatpush.msra.mxu0 %v184
    %1346 = vmatpush.msra.mxu0 %v180
    %1347 = vmatpush.msra.mxu0 %v176
    %1348 = vmatpush.msra.mxu0 %v172
    %1349 = vmatpush.msra.mxu0 %v168
    %1350 = vmatpush.msra.mxu0 %v164
    %1351 = vmatpush.msra.mxu0 %v160
    %1352 = vmatpush.msra.mxu0 %v156
    %1353 = vmatpush.msra.mxu0 %v152
    %1354 = vmatpush.msra.mxu0 %v148
    %1355 = vmatpush.msra.mxu0 %v144
    %1356 = vmatmul.f32.gmra.mxu0 %v1319
    %v1357 = vpop.f32.mrf.mxu0
    %v1358 = vadd.f32 0.0, %v1357
    %1359 = vdwg.mxu0
    %1360 = vmatpush.msra.mxu0 %v205
    %1361 = vmatpush.msra.mxu0 %v201
    %1362 = vmatpush.msra.mxu0 %v197
    %1363 = vmatpush.msra.mxu0 %v193
    %1364 = vmatpush.msra.mxu0 %v189
    %1365 = vmatpush.msra.mxu0 %v185
    %1366 = vmatpush.msra.mxu0 %v181
    %1367 = vmatpush.msra.mxu0 %v177
    %1368 = vmatpush.msra.mxu0 %v173
    %1369 = vmatpush.msra.mxu0 %v169
    %1370 = vmatpush.msra.mxu0 %v165
    %1371 = vmatpush.msra.mxu0 %v161
    %1372 = vmatpush.msra.mxu0 %v157
    %1373 = vmatpush.msra.mxu0 %v153
    %1374 = vmatpush.msra.mxu0 %v149
    %1375 = vmatpush.msra.mxu0 %v145
    %1376 = vmatmul.f32.gmra.mxu0 %v1319
    %v1377 = vpop.f32.mrf.mxu0
    %v1378 = vadd.f32 0.0, %v1377
    %1379 = vdwg.mxu0
    %1380 = vmatpush.msra.mxu0 %v206
    %1381 = vmatpush.msra.mxu0 %v202
    %1382 = vmatpush.msra.mxu0 %v198
    %1383 = vmatpush.msra.mxu0 %v194
    %1384 = vmatpush.msra.mxu0 %v190
    %1385 = vmatpush.msra.mxu0 %v186
    %1386 = vmatpush.msra.mxu0 %v182
    %1387 = vmatpush.msra.mxu0 %v178
    %1388 = vmatpush.msra.mxu0 %v174
    %1389 = vmatpush.msra.mxu0 %v170
    %1390 = vmatpush.msra.mxu0 %v166
    %1391 = vmatpush.msra.mxu0 %v162
    %1392 = vmatpush.msra.mxu0 %v158
    %1393 = vmatpush.msra.mxu0 %v154
    %1394 = vmatpush.msra.mxu0 %v150
    %1395 = vmatpush.msra.mxu0 %v146
    %1396 = vmatmul.f32.gmra.mxu0 %v1319
    %v1397 = vpop.f32.mrf.mxu0
    %v1398 = vadd.f32 0.0, %v1397
    %1399 = vdwg.mxu0
    %v1400 = vadd.f32 %v1096, %v1338
    %v1401 = vadd.f32 %v1116, %v1358
    %v1402 = vadd.f32 %v1136, %v1378
    %v1403 = vadd.f32 %v1156, %v1398
    %v1404 = vxor.u32 %v1400, 2147483648
    %v1405 = vxor.u32 %v1401, 2147483648
    %v1406 = vxor.u32 %v1402, 2147483648
    %v1407 = vmul.f32 %v1404, 1.442695
    %v1408 = vpow.pop %v1407
    %v1409 = vmul.f32 %v1405, 1.442695
    %v1410 = vpow.pop %v1409
    %v1411 = vmul.f32 %v1406, 1.442695
    %v1412 = vpow.pop %v1411
    %v1413 = vadd.f32 %v1408, 1.0
    %v1414 = vadd.f32 %v1410, 1.0
    %v1415 = vadd.f32 %v1412, 1.0
    %v1416 = vrcp.pop %v1413
    %v1417 = vmul.f32 %v1413, %v1416
    %v1418 = vsub.f32 1.0, %v1417
    %v1419 = vmul.f32 %v1416, %v1418
    %v1420 = vadd.f32 %v1416, %v1419
    %vm1421 = vweird.f32 %v1413
    %vm1422 = vweird.f32 %v1416
    %vm1423 = vmor %vm1421, %vm1422
    %v1424 = vsel %vm1423, %v1416, %v1420
    %v1425 = vand.u32 2147483647, %v1413
    %vm1426 = vcmp.eq.f32.partialorder %v1425, 8.507059e+37
    %v1427 = vand.u32 %v1413, 2147483648
    %v1428 = vor.u32 1.1754944e-38, %v1427
    %v1429 = vsel %vm1426, %v1428, %v1424
    %v1430 = vmul.f32 1.0, %v1429
    %v1431 = vrcp.pop %v1414
    %v1432 = vmul.f32 %v1414, %v1431
    %v1433 = vsub.f32 1.0, %v1432
    %v1434 = vmul.f32 %v1431, %v1433
    %v1435 = vadd.f32 %v1431, %v1434
    %vm1436 = vweird.f32 %v1414
    %vm1437 = vweird.f32 %v1431
    %vm1438 = vmor %vm1436, %vm1437
    %v1439 = vsel %vm1438, %v1431, %v1435
    %v1440 = vand.u32 2147483647, %v1414
    %vm1441 = vcmp.eq.f32.partialorder %v1440, 8.507059e+37
    %v1442 = vand.u32 %v1414, 2147483648
    %v1443 = vor.u32 1.1754944e-38, %v1442
    %v1444 = vsel %vm1441, %v1443, %v1439
    %v1445 = vmul.f32 1.0, %v1444
    %v1446 = vrcp.pop %v1415
    %v1447 = vmul.f32 %v1415, %v1446
    %v1448 = vsub.f32 1.0, %v1447
    %v1449 = vmul.f32 %v1446, %v1448
    %v1450 = vadd.f32 %v1446, %v1449
    %vm1451 = vweird.f32 %v1415
    %vm1452 = vweird.f32 %v1446
    %vm1453 = vmor %vm1451, %vm1452
    %v1454 = vsel %vm1453, %v1446, %v1450
    %v1455 = vand.u32 2147483647, %v1415
    %vm1456 = vcmp.eq.f32.partialorder %v1455, 8.507059e+37
    %v1457 = vand.u32 %v1415, 2147483648
    %v1458 = vor.u32 1.1754944e-38, %v1457
    %v1459 = vsel %vm1456, %v1458, %v1454
    %v1460 = vmul.f32 1.0, %v1459
    %v1461 = vtanh.pop %v1403
    %v1462 = vmul.f32 %v1445, %v1075
    %v1463 = vmul.f32 %v1430, %v1461
    %v1464 = vadd.f32 %v1462, %v1463
    %v1465 = vtanh.pop %v1464
    %v1466 = vmul.f32 %v1460, %v1465
    %1467 = vmatpush.msra.mxu0 %v267
    %1468 = vmatpush.msra.mxu0 %v263
    %1469 = vmatpush.msra.mxu0 %v259
    %1470 = vmatpush.msra.mxu0 %v255
    %1471 = vmatpush.msra.mxu0 %v251
    %1472 = vmatpush.msra.mxu0 %v247
    %1473 = vmatpush.msra.mxu0 %v243
    %1474 = vmatpush.msra.mxu0 %v239
    %1475 = vmatpush.msra.mxu0 %v235
    %1476 = vmatpush.msra.mxu0 %v231
    %1477 = vmatpush.msra.mxu0 %v227
    %1478 = vmatpush.msra.mxu0 %v223
    %1479 = vmatpush.msra.mxu0 %v219
    %1480 = vmatpush.msra.mxu0 %v215
    %1481 = vmatpush.msra.mxu0 %v211
    %1482 = vmatpush.msra.mxu0 %v207
    %1483 = vmatmul.f32.gmra.mxu0 %v1466
    %v1484 = vpop.f32.mrf.mxu0
    %v1485 = vadd.f32 %v293, %v1484
    %1486 = vdwg.mxu0
    %1487 = vmatpush.msra.mxu0 %v268
    %1488 = vmatpush.msra.mxu0 %v264
    %1489 = vmatpush.msra.mxu0 %v260
    %1490 = vmatpush.msra.mxu0 %v256
    %1491 = vmatpush.msra.mxu0 %v252
    %1492 = vmatpush.msra.mxu0 %v248
    %1493 = vmatpush.msra.mxu0 %v244
    %1494 = vmatpush.msra.mxu0 %v240
    %1495 = vmatpush.msra.mxu0 %v236
    %1496 = vmatpush.msra.mxu0 %v232
    %1497 = vmatpush.msra.mxu0 %v228
    %1498 = vmatpush.msra.mxu0 %v224
    %1499 = vmatpush.msra.mxu0 %v220
    %1500 = vmatpush.msra.mxu0 %v216
    %1501 = vmatpush.msra.mxu0 %v212
    %1502 = vmatpush.msra.mxu0 %v208
    %1503 = vmatmul.f32.gmra.mxu0 %v1466
    %v1504 = vpop.f32.mrf.mxu0
    %v1505 = vadd.f32 %v294, %v1504
    %1506 = vdwg.mxu0
    %1507 = vmatpush.msra.mxu0 %v269
    %1508 = vmatpush.msra.mxu0 %v265
    %1509 = vmatpush.msra.mxu0 %v261
    %1510 = vmatpush.msra.mxu0 %v257
    %1511 = vmatpush.msra.mxu0 %v253
    %1512 = vmatpush.msra.mxu0 %v249
    %1513 = vmatpush.msra.mxu0 %v245
    %1514 = vmatpush.msra.mxu0 %v241
    %1515 = vmatpush.msra.mxu0 %v237
    %1516 = vmatpush.msra.mxu0 %v233
    %1517 = vmatpush.msra.mxu0 %v229
    %1518 = vmatpush.msra.mxu0 %v225
    %1519 = vmatpush.msra.mxu0 %v221
    %1520 = vmatpush.msra.mxu0 %v217
    %1521 = vmatpush.msra.mxu0 %v213
    %1522 = vmatpush.msra.mxu0 %v209
    %1523 = vmatmul.f32.gmra.mxu0 %v1466
    %v1524 = vpop.f32.mrf.mxu0
    %v1525 = vadd.f32 %v295, %v1524
    %1526 = vdwg.mxu0
    %1527 = vmatpush.msra.mxu0 %v270
    %1528 = vmatpush.msra.mxu0 %v266
    %1529 = vmatpush.msra.mxu0 %v262
    %1530 = vmatpush.msra.mxu0 %v258
    %1531 = vmatpush.msra.mxu0 %v254
    %1532 = vmatpush.msra.mxu0 %v250
    %1533 = vmatpush.msra.mxu0 %v246
    %1534 = vmatpush.msra.mxu0 %v242
    %1535 = vmatpush.msra.mxu0 %v238
    %1536 = vmatpush.msra.mxu0 %v234
    %1537 = vmatpush.msra.mxu0 %v230
    %1538 = vmatpush.msra.mxu0 %v226
    %1539 = vmatpush.msra.mxu0 %v222
    %1540 = vmatpush.msra.mxu0 %v218
    %1541 = vmatpush.msra.mxu0 %v214
    %1542 = vmatpush.msra.mxu0 %v210
    %1543 = vmatmul.f32.gmra.mxu0 %v1466
    %v1544 = vpop.f32.mrf.mxu0
    %v1545 = vadd.f32 %v296, %v1544
    %1546 = vdwg.mxu0
    %s1547 = scalar_lea.vmem %s0, 24
    %v1548 = vld [vmem:[%s1547] sm:$0xff]
    %1550 = vset.pattern.permute.xlu0 0
    %1551 = vperm.xlu0 %1550, %v1548
    %v1552 = vpop.permute.xlu0 %1551
    %v1554 = vmul.f32 %v1552, %v273
    %v1555 = vmul.f32 %v1552, %v274
    %v1556 = vmul.f32 %v1552, %v275
    %v1557 = vmul.f32 %v1552, %v276
    %v1558 = vadd.f32 %v1554, %v283
    %v1559 = vadd.f32 %v1555, %v284
    %v1560 = vadd.f32 %v1556, %v285
    %v1561 = vadd.f32 %v1557, %v286
    %1562 = vmatpush.msra.mxu0 %v139
    %1563 = vmatpush.msra.mxu0 %v135
    %1564 = vmatpush.msra.mxu0 %v131
    %1565 = vmatpush.msra.mxu0 %v127
    %1566 = vmatpush.msra.mxu0 %v123
    %1567 = vmatpush.msra.mxu0 %v119
    %1568 = vmatpush.msra.mxu0 %v115
    %1569 = vmatpush.msra.mxu0 %v111
    %1570 = vmatpush.msra.mxu0 %v107
    %1571 = vmatpush.msra.mxu0 %v103
    %1572 = vmatpush.msra.mxu0 %v99
    %1573 = vmatpush.msra.mxu0 %v95
    %1574 = vmatpush.msra.mxu0 %v91
    %1575 = vmatpush.msra.mxu0 %v87
    %1576 = vmatpush.msra.mxu0 %v83
    %1577 = vmatpush.msra.mxu0 %v79
    %1578 = vmatmul.f32.gmra.mxu0 %v1319
    %v1579 = vpop.f32.mrf.mxu0
    %v1580 = vadd.f32 0.0, %v1579
    %1581 = vdwg.mxu0
    %1582 = vmatpush.msra.mxu0 %v140
    %1583 = vmatpush.msra.mxu0 %v136
    %1584 = vmatpush.msra.mxu0 %v132
    %1585 = vmatpush.msra.mxu0 %v128
    %1586 = vmatpush.msra.mxu0 %v124
    %1587 = vmatpush.msra.mxu0 %v120
    %1588 = vmatpush.msra.mxu0 %v116
    %1589 = vmatpush.msra.mxu0 %v112
    %1590 = vmatpush.msra.mxu0 %v108
    %1591 = vmatpush.msra.mxu0 %v104
    %1592 = vmatpush.msra.mxu0 %v100
    %1593 = vmatpush.msra.mxu0 %v96
    %1594 = vmatpush.msra.mxu0 %v92
    %1595 = vmatpush.msra.mxu0 %v88
    %1596 = vmatpush.msra.mxu0 %v84
    %1597 = vmatpush.msra.mxu0 %v80
    %1598 = vmatmul.f32.gmra.mxu0 %v1319
    %v1599 = vpop.f32.mrf.mxu0
    %v1600 = vadd.f32 0.0, %v1599
    %1601 = vdwg.mxu0
    %1602 = vmatpush.msra.mxu0 %v141
    %1603 = vmatpush.msra.mxu0 %v137
    %1604 = vmatpush.msra.mxu0 %v133
    %1605 = vmatpush.msra.mxu0 %v129
    %1606 = vmatpush.msra.mxu0 %v125
    %1607 = vmatpush.msra.mxu0 %v121
    %1608 = vmatpush.msra.mxu0 %v117
    %1609 = vmatpush.msra.mxu0 %v113
    %1610 = vmatpush.msra.mxu0 %v109
    %1611 = vmatpush.msra.mxu0 %v105
    %1612 = vmatpush.msra.mxu0 %v101
    %1613 = vmatpush.msra.mxu0 %v97
    %1614 = vmatpush.msra.mxu0 %v93
    %1615 = vmatpush.msra.mxu0 %v89
    %1616 = vmatpush.msra.mxu0 %v85
    %1617 = vmatpush.msra.mxu0 %v81
    %1618 = vmatmul.f32.gmra.mxu0 %v1319
    %v1619 = vpop.f32.mrf.mxu0
    %v1620 = vadd.f32 0.0, %v1619
    %1621 = vdwg.mxu0
    %1622 = vmatpush.msra.mxu0 %v142
    %1623 = vmatpush.msra.mxu0 %v138
    %1624 = vmatpush.msra.mxu0 %v134
    %1625 = vmatpush.msra.mxu0 %v130
    %1626 = vmatpush.msra.mxu0 %v126
    %1627 = vmatpush.msra.mxu0 %v122
    %1628 = vmatpush.msra.mxu0 %v118
    %1629 = vmatpush.msra.mxu0 %v114
    %1630 = vmatpush.msra.mxu0 %v110
    %1631 = vmatpush.msra.mxu0 %v106
    %1632 = vmatpush.msra.mxu0 %v102
    %1633 = vmatpush.msra.mxu0 %v98
    %1634 = vmatpush.msra.mxu0 %v94
    %1635 = vmatpush.msra.mxu0 %v90
    %1636 = vmatpush.msra.mxu0 %v86
    %1637 = vmatpush.msra.mxu0 %v82
    %1638 = vmatmul.f32.gmra.mxu0 %v1319
    %v1639 = vpop.f32.mrf.mxu0
    %v1640 = vadd.f32 0.0, %v1639
    %1641 = vdwg.mxu0
    %v1642 = vadd.f32 %v1558, %v1580
    %v1643 = vadd.f32 %v1559, %v1600
    %v1644 = vadd.f32 %v1560, %v1620
    %v1645 = vadd.f32 %v1561, %v1640
    %v1646 = vxor.u32 %v1642, 2147483648
    %v1647 = vxor.u32 %v1643, 2147483648
    %v1648 = vxor.u32 %v1644, 2147483648
    %v1649 = vmul.f32 %v1646, 1.442695
    %v1650 = vpow.pop %v1649
    %v1651 = vmul.f32 %v1647, 1.442695
    %v1652 = vpow.pop %v1651
    %v1653 = vmul.f32 %v1648, 1.442695
    %v1654 = vpow.pop %v1653
    %v1655 = vadd.f32 %v1650, 1.0
    %v1656 = vadd.f32 %v1652, 1.0
    %v1657 = vadd.f32 %v1654, 1.0
    %v1658 = vrcp.pop %v1655
    %v1659 = vmul.f32 %v1655, %v1658
    %v1660 = vsub.f32 1.0, %v1659
    %v1661 = vmul.f32 %v1658, %v1660
    %v1662 = vadd.f32 %v1658, %v1661
    %vm1663 = vweird.f32 %v1655
    %vm1664 = vweird.f32 %v1658
    %vm1665 = vmor %vm1663, %vm1664
    %v1666 = vsel %vm1665, %v1658, %v1662
    %v1667 = vand.u32 2147483647, %v1655
    %vm1668 = vcmp.eq.f32.partialorder %v1667, 8.507059e+37
    %v1669 = vand.u32 %v1655, 2147483648
    %v1670 = vor.u32 1.1754944e-38, %v1669
    %v1671 = vsel %vm1668, %v1670, %v1666
    %v1672 = vmul.f32 1.0, %v1671
    %v1673 = vrcp.pop %v1656
    %v1674 = vmul.f32 %v1656, %v1673
    %v1675 = vsub.f32 1.0, %v1674
    %v1676 = vmul.f32 %v1673, %v1675
    %v1677 = vadd.f32 %v1673, %v1676
    %vm1678 = vweird.f32 %v1656
    %vm1679 = vweird.f32 %v1673
    %vm1680 = vmor %vm1678, %vm1679
    %v1681 = vsel %vm1680, %v1673, %v1677
    %v1682 = vand.u32 2147483647, %v1656
    %vm1683 = vcmp.eq.f32.partialorder %v1682, 8.507059e+37
    %v1684 = vand.u32 %v1656, 2147483648
    %v1685 = vor.u32 1.1754944e-38, %v1684
    %v1686 = vsel %vm1683, %v1685, %v1681
    %v1687 = vmul.f32 1.0, %v1686
    %v1688 = vrcp.pop %v1657
    %v1689 = vmul.f32 %v1657, %v1688
    %v1690 = vsub.f32 1.0, %v1689
    %v1691 = vmul.f32 %v1688, %v1690
    %v1692 = vadd.f32 %v1688, %v1691
    %vm1693 = vweird.f32 %v1657
    %vm1694 = vweird.f32 %v1688
    %vm1695 = vmor %vm1693, %vm1694
    %v1696 = vsel %vm1695, %v1688, %v1692
    %v1697 = vand.u32 2147483647, %v1657
    %vm1698 = vcmp.eq.f32.partialorder %v1697, 8.507059e+37
    %v1699 = vand.u32 %v1657, 2147483648
    %v1700 = vor.u32 1.1754944e-38, %v1699
    %v1701 = vsel %vm1698, %v1700, %v1696
    %v1702 = vmul.f32 1.0, %v1701
    %v1703 = vtanh.pop %v1645
    %v1704 = vmul.f32 %v1687, %v1317
    %v1705 = vmul.f32 %v1672, %v1703
    %v1706 = vadd.f32 %v1704, %v1705
    %v1707 = vtanh.pop %v1706
    %v1708 = vmul.f32 %v1702, %v1707
    %1709 = vmatpush.msra.mxu0 %v203
    %1710 = vmatpush.msra.mxu0 %v199
    %1711 = vmatpush.msra.mxu0 %v195
    %1712 = vmatpush.msra.mxu0 %v191
    %1713 = vmatpush.msra.mxu0 %v187
    %1714 = vmatpush.msra.mxu0 %v183
    %1715 = vmatpush.msra.mxu0 %v179
    %1716 = vmatpush.msra.mxu0 %v175
    %1717 = vmatpush.msra.mxu0 %v171
    %1718 = vmatpush.msra.mxu0 %v167
    %1719 = vmatpush.msra.mxu0 %v163
    %1720 = vmatpush.msra.mxu0 %v159
    %1721 = vmatpush.msra.mxu0 %v155
    %1722 = vmatpush.msra.mxu0 %v151
    %1723 = vmatpush.msra.mxu0 %v147
    %1724 = vmatpush.msra.mxu0 %v143
    %1725 = vmatmul.f32.gmra.mxu0 %v1708
    %v1726 = vpop.f32.mrf.mxu0
    %v1727 = vadd.f32 0.0, %v1726
    %1728 = vdwg.mxu0
    %1729 = vmatpush.msra.mxu0 %v204
    %1730 = vmatpush.msra.mxu0 %v200
    %1731 = vmatpush.msra.mxu0 %v196
    %1732 = vmatpush.msra.mxu0 %v192
    %1733 = vmatpush.msra.mxu0 %v188
    %1734 = vmatpush.msra.mxu0 %v184
    %1735 = vmatpush.msra.mxu0 %v180
    %1736 = vmatpush.msra.mxu0 %v176
    %1737 = vmatpush.msra.mxu0 %v172
    %1738 = vmatpush.msra.mxu0 %v168
    %1739 = vmatpush.msra.mxu0 %v164
    %1740 = vmatpush.msra.mxu0 %v160
    %1741 = vmatpush.msra.mxu0 %v156
    %1742 = vmatpush.msra.mxu0 %v152
    %1743 = vmatpush.msra.mxu0 %v148
    %1744 = vmatpush.msra.mxu0 %v144
    %1745 = vmatmul.f32.gmra.mxu0 %v1708
    %v1746 = vpop.f32.mrf.mxu0
    %v1747 = vadd.f32 0.0, %v1746
    %1748 = vdwg.mxu0
    %1749 = vmatpush.msra.mxu0 %v205
    %1750 = vmatpush.msra.mxu0 %v201
    %1751 = vmatpush.msra.mxu0 %v197
    %1752 = vmatpush.msra.mxu0 %v193
    %1753 = vmatpush.msra.mxu0 %v189
    %1754 = vmatpush.msra.mxu0 %v185
    %1755 = vmatpush.msra.mxu0 %v181
    %1756 = vmatpush.msra.mxu0 %v177
    %1757 = vmatpush.msra.mxu0 %v173
    %1758 = vmatpush.msra.mxu0 %v169
    %1759 = vmatpush.msra.mxu0 %v165
    %1760 = vmatpush.msra.mxu0 %v161
    %1761 = vmatpush.msra.mxu0 %v157
    %1762 = vmatpush.msra.mxu0 %v153
    %1763 = vmatpush.msra.mxu0 %v149
    %1764 = vmatpush.msra.mxu0 %v145
    %1765 = vmatmul.f32.gmra.mxu0 %v1708
    %v1766 = vpop.f32.mrf.mxu0
    %v1767 = vadd.f32 0.0, %v1766
    %1768 = vdwg.mxu0
    %1769 = vmatpush.msra.mxu0 %v206
    %1770 = vmatpush.msra.mxu0 %v202
    %1771 = vmatpush.msra.mxu0 %v198
    %1772 = vmatpush.msra.mxu0 %v194
    %1773 = vmatpush.msra.mxu0 %v190
    %1774 = vmatpush.msra.mxu0 %v186
    %1775 = vmatpush.msra.mxu0 %v182
    %1776 = vmatpush.msra.mxu0 %v178
    %1777 = vmatpush.msra.mxu0 %v174
    %1778 = vmatpush.msra.mxu0 %v170
    %1779 = vmatpush.msra.mxu0 %v166
    %1780 = vmatpush.msra.mxu0 %v162
    %1781 = vmatpush.msra.mxu0 %v158
    %1782 = vmatpush.msra.mxu0 %v154
    %1783 = vmatpush.msra.mxu0 %v150
    %1784 = vmatpush.msra.mxu0 %v146
    %1785 = vmatmul.f32.gmra.mxu0 %v1708
    %v1786 = vpop.f32.mrf.mxu0
    %v1787 = vadd.f32 0.0, %v1786
    %1788 = vdwg.mxu0
    %v1789 = vadd.f32 %v1485, %v1727
    %v1790 = vadd.f32 %v1505, %v1747
    %v1791 = vadd.f32 %v1525, %v1767
    %v1792 = vadd.f32 %v1545, %v1787
    %v1793 = vxor.u32 %v1789, 2147483648
    %v1794 = vxor.u32 %v1790, 2147483648
    %v1795 = vxor.u32 %v1791, 2147483648
    %v1796 = vmul.f32 %v1793, 1.442695
    %v1797 = vpow.pop %v1796
    %v1798 = vmul.f32 %v1794, 1.442695
    %v1799 = vpow.pop %v1798
    %v1800 = vmul.f32 %v1795, 1.442695
    %v1801 = vpow.pop %v1800
    %v1802 = vadd.f32 %v1797, 1.0
    %v1803 = vadd.f32 %v1799, 1.0
    %v1804 = vadd.f32 %v1801, 1.0
    %v1805 = vrcp.pop %v1802
    %v1806 = vmul.f32 %v1802, %v1805
    %v1807 = vsub.f32 1.0, %v1806
    %v1808 = vmul.f32 %v1805, %v1807
    %v1809 = vadd.f32 %v1805, %v1808
    %vm1810 = vweird.f32 %v1802
    %vm1811 = vweird.f32 %v1805
    %vm1812 = vmor %vm1810, %vm1811
    %v1813 = vsel %vm1812, %v1805, %v1809
    %v1814 = vand.u32 2147483647, %v1802
    %vm1815 = vcmp.eq.f32.partialorder %v1814, 8.507059e+37
    %v1816 = vand.u32 %v1802, 2147483648
    %v1817 = vor.u32 1.1754944e-38, %v1816
    %v1818 = vsel %vm1815, %v1817, %v1813
    %v1819 = vmul.f32 1.0, %v1818
    %v1820 = vrcp.pop %v1803
    %v1821 = vmul.f32 %v1803, %v1820
    %v1822 = vsub.f32 1.0, %v1821
    %v1823 = vmul.f32 %v1820, %v1822
    %v1824 = vadd.f32 %v1820, %v1823
    %vm1825 = vweird.f32 %v1803
    %vm1826 = vweird.f32 %v1820
    %vm1827 = vmor %vm1825, %vm1826
    %v1828 = vsel %vm1827, %v1820, %v1824
    %v1829 = vand.u32 2147483647, %v1803
    %vm1830 = vcmp.eq.f32.partialorder %v1829, 8.507059e+37
    %v1831 = vand.u32 %v1803, 2147483648
    %v1832 = vor.u32 1.1754944e-38, %v1831
    %v1833 = vsel %vm1830, %v1832, %v1828
    %v1834 = vmul.f32 1.0, %v1833
    %v1835 = vrcp.pop %v1804
    %v1836 = vmul.f32 %v1804, %v1835
    %v1837 = vsub.f32 1.0, %v1836
    %v1838 = vmul.f32 %v1835, %v1837
    %v1839 = vadd.f32 %v1835, %v1838
    %vm1840 = vweird.f32 %v1804
    %vm1841 = vweird.f32 %v1835
    %vm1842 = vmor %vm1840, %vm1841
    %v1843 = vsel %vm1842, %v1835, %v1839
    %v1844 = vand.u32 2147483647, %v1804
    %vm1845 = vcmp.eq.f32.partialorder %v1844, 8.507059e+37
    %v1846 = vand.u32 %v1804, 2147483648
    %v1847 = vor.u32 1.1754944e-38, %v1846
    %v1848 = vsel %vm1845, %v1847, %v1843
    %v1849 = vmul.f32 1.0, %v1848
    %v1850 = vtanh.pop %v1792
    %v1851 = vmul.f32 %v1834, %v1464
    %v1852 = vmul.f32 %v1819, %v1850
    %v1853 = vadd.f32 %v1851, %v1852
    %v1854 = vtanh.pop %v1853
    %v1855 = vmul.f32 %v1849, %v1854
    %1856 = vmatpush.msra.mxu0 %v267
    %1857 = vmatpush.msra.mxu0 %v263
    %1858 = vmatpush.msra.mxu0 %v259
    %1859 = vmatpush.msra.mxu0 %v255
    %1860 = vmatpush.msra.mxu0 %v251
    %1861 = vmatpush.msra.mxu0 %v247
    %1862 = vmatpush.msra.mxu0 %v243
    %1863 = vmatpush.msra.mxu0 %v239
    %1864 = vmatpush.msra.mxu0 %v235
    %1865 = vmatpush.msra.mxu0 %v231
    %1866 = vmatpush.msra.mxu0 %v227
    %1867 = vmatpush.msra.mxu0 %v223
    %1868 = vmatpush.msra.mxu0 %v219
    %1869 = vmatpush.msra.mxu0 %v215
    %1870 = vmatpush.msra.mxu0 %v211
    %1871 = vmatpush.msra.mxu0 %v207
    %1872 = vmatmul.f32.gmra.mxu0 %v1855
    %v1873 = vpop.f32.mrf.mxu0
    %v1874 = vadd.f32 %v293, %v1873
    %1875 = vdwg.mxu0
    %1876 = vmatpush.msra.mxu0 %v268
    %1877 = vmatpush.msra.mxu0 %v264
    %1878 = vmatpush.msra.mxu0 %v260
    %1879 = vmatpush.msra.mxu0 %v256
    %1880 = vmatpush.msra.mxu0 %v252
    %1881 = vmatpush.msra.mxu0 %v248
    %1882 = vmatpush.msra.mxu0 %v244
    %1883 = vmatpush.msra.mxu0 %v240
    %1884 = vmatpush.msra.mxu0 %v236
    %1885 = vmatpush.msra.mxu0 %v232
    %1886 = vmatpush.msra.mxu0 %v228
    %1887 = vmatpush.msra.mxu0 %v224
    %1888 = vmatpush.msra.mxu0 %v220
    %1889 = vmatpush.msra.mxu0 %v216
    %1890 = vmatpush.msra.mxu0 %v212
    %1891 = vmatpush.msra.mxu0 %v208
    %1892 = vmatmul.f32.gmra.mxu0 %v1855
    %v1893 = vpop.f32.mrf.mxu0
    %v1894 = vadd.f32 %v294, %v1893
    %1895 = vdwg.mxu0
    %1896 = vmatpush.msra.mxu0 %v269
    %1897 = vmatpush.msra.mxu0 %v265
    %1898 = vmatpush.msra.mxu0 %v261
    %1899 = vmatpush.msra.mxu0 %v257
    %1900 = vmatpush.msra.mxu0 %v253
    %1901 = vmatpush.msra.mxu0 %v249
    %1902 = vmatpush.msra.mxu0 %v245
    %1903 = vmatpush.msra.mxu0 %v241
    %1904 = vmatpush.msra.mxu0 %v237
    %1905 = vmatpush.msra.mxu0 %v233
    %1906 = vmatpush.msra.mxu0 %v229
    %1907 = vmatpush.msra.mxu0 %v225
    %1908 = vmatpush.msra.mxu0 %v221
    %1909 = vmatpush.msra.mxu0 %v217
    %1910 = vmatpush.msra.mxu0 %v213
    %1911 = vmatpush.msra.mxu0 %v209
    %1912 = vmatmul.f32.gmra.mxu0 %v1855
    %v1913 = vpop.f32.mrf.mxu0
    %v1914 = vadd.f32 %v295, %v1913
    %1915 = vdwg.mxu0
    %1916 = vmatpush.msra.mxu0 %v270
    %1917 = vmatpush.msra.mxu0 %v266
    %1918 = vmatpush.msra.mxu0 %v262
    %1919 = vmatpush.msra.mxu0 %v258
    %1920 = vmatpush.msra.mxu0 %v254
    %1921 = vmatpush.msra.mxu0 %v250
    %1922 = vmatpush.msra.mxu0 %v246
    %1923 = vmatpush.msra.mxu0 %v242
    %1924 = vmatpush.msra.mxu0 %v238
    %1925 = vmatpush.msra.mxu0 %v234
    %1926 = vmatpush.msra.mxu0 %v230
    %1927 = vmatpush.msra.mxu0 %v226
    %1928 = vmatpush.msra.mxu0 %v222
    %1929 = vmatpush.msra.mxu0 %v218
    %1930 = vmatpush.msra.mxu0 %v214
    %1931 = vmatpush.msra.mxu0 %v210
    %1932 = vmatmul.f32.gmra.mxu0 %v1855
    %v1933 = vpop.f32.mrf.mxu0
    %v1934 = vadd.f32 %v296, %v1933
    %1935 = vdwg.mxu0
    %s1936 = scalar_lea.vmem %s0, 32
    %v1937 = vld [vmem:[%s1936] sm:$0xff]
    %1939 = vset.pattern.permute.xlu0 0
    %1940 = vperm.xlu0 %1939, %v1937
    %v1941 = vpop.permute.xlu0 %1940
    %v1943 = vmul.f32 %v1941, %v273
    %v1944 = vmul.f32 %v1941, %v274
    %v1945 = vmul.f32 %v1941, %v275
    %v1946 = vmul.f32 %v1941, %v276
    %v1947 = vadd.f32 %v1943, %v283
    %v1948 = vadd.f32 %v1944, %v284
    %v1949 = vadd.f32 %v1945, %v285
    %v1950 = vadd.f32 %v1946, %v286
    %1951 = vmatpush.msra.mxu0 %v139
    %1952 = vmatpush.msra.mxu0 %v135
    %1953 = vmatpush.msra.mxu0 %v131
    %1954 = vmatpush.msra.mxu0 %v127
    %1955 = vmatpush.msra.mxu0 %v123
    %1956 = vmatpush.msra.mxu0 %v119
    %1957 = vmatpush.msra.mxu0 %v115
    %1958 = vmatpush.msra.mxu0 %v111
    %1959 = vmatpush.msra.mxu0 %v107
    %1960 = vmatpush.msra.mxu0 %v103
    %1961 = vmatpush.msra.mxu0 %v99
    %1962 = vmatpush.msra.mxu0 %v95
    %1963 = vmatpush.msra.mxu0 %v91
    %1964 = vmatpush.msra.mxu0 %v87
    %1965 = vmatpush.msra.mxu0 %v83
    %1966 = vmatpush.msra.mxu0 %v79
    %1967 = vmatmul.f32.gmra.mxu0 %v1708
    %v1968 = vpop.f32.mrf.mxu0
    %v1969 = vadd.f32 0.0, %v1968
    %1970 = vdwg.mxu0
    %1971 = vmatpush.msra.mxu0 %v140
    %1972 = vmatpush.msra.mxu0 %v136
    %1973 = vmatpush.msra.mxu0 %v132
    %1974 = vmatpush.msra.mxu0 %v128
    %1975 = vmatpush.msra.mxu0 %v124
    %1976 = vmatpush.msra.mxu0 %v120
    %1977 = vmatpush.msra.mxu0 %v116
    %1978 = vmatpush.msra.mxu0 %v112
    %1979 = vmatpush.msra.mxu0 %v108
    %1980 = vmatpush.msra.mxu0 %v104
    %1981 = vmatpush.msra.mxu0 %v100
    %1982 = vmatpush.msra.mxu0 %v96
    %1983 = vmatpush.msra.mxu0 %v92
    %1984 = vmatpush.msra.mxu0 %v88
    %1985 = vmatpush.msra.mxu0 %v84
    %1986 = vmatpush.msra.mxu0 %v80
    %1987 = vmatmul.f32.gmra.mxu0 %v1708
    %v1988 = vpop.f32.mrf.mxu0
    %v1989 = vadd.f32 0.0, %v1988
    %1990 = vdwg.mxu0
    %1991 = vmatpush.msra.mxu0 %v141
    %1992 = vmatpush.msra.mxu0 %v137
    %1993 = vmatpush.msra.mxu0 %v133
    %1994 = vmatpush.msra.mxu0 %v129
    %1995 = vmatpush.msra.mxu0 %v125
    %1996 = vmatpush.msra.mxu0 %v121
    %1997 = vmatpush.msra.mxu0 %v117
    %1998 = vmatpush.msra.mxu0 %v113
    %1999 = vmatpush.msra.mxu0 %v109
    %2000 = vmatpush.msra.mxu0 %v105
    %2001 = vmatpush.msra.mxu0 %v101
    %2002 = vmatpush.msra.mxu0 %v97
    %2003 = vmatpush.msra.mxu0 %v93
    %2004 = vmatpush.msra.mxu0 %v89
    %2005 = vmatpush.msra.mxu0 %v85
    %2006 = vmatpush.msra.mxu0 %v81
    %2007 = vmatmul.f32.gmra.mxu0 %v1708
    %v2008 = vpop.f32.mrf.mxu0
    %v2009 = vadd.f32 0.0, %v2008
    %2010 = vdwg.mxu0
    %2011 = vmatpush.msra.mxu0 %v142
    %2012 = vmatpush.msra.mxu0 %v138
    %2013 = vmatpush.msra.mxu0 %v134
    %2014 = vmatpush.msra.mxu0 %v130
    %2015 = vmatpush.msra.mxu0 %v126
    %2016 = vmatpush.msra.mxu0 %v122
    %2017 = vmatpush.msra.mxu0 %v118
    %2018 = vmatpush.msra.mxu0 %v114
    %2019 = vmatpush.msra.mxu0 %v110
    %2020 = vmatpush.msra.mxu0 %v106
    %2021 = vmatpush.msra.mxu0 %v102
    %2022 = vmatpush.msra.mxu0 %v98
    %2023 = vmatpush.msra.mxu0 %v94
    %2024 = vmatpush.msra.mxu0 %v90
    %2025 = vmatpush.msra.mxu0 %v86
    %2026 = vmatpush.msra.mxu0 %v82
    %2027 = vmatmul.f32.gmra.mxu0 %v1708
    %v2028 = vpop.f32.mrf.mxu0
    %v2029 = vadd.f32 0.0, %v2028
    %2030 = vdwg.mxu0
    %v2031 = vadd.f32 %v1947, %v1969
    %v2032 = vadd.f32 %v1948, %v1989
    %v2033 = vadd.f32 %v1949, %v2009
    %v2034 = vadd.f32 %v1950, %v2029
    %v2035 = vxor.u32 %v2031, 2147483648
    %v2036 = vxor.u32 %v2032, 2147483648
    %v2037 = vxor.u32 %v2033, 2147483648
    %v2038 = vmul.f32 %v2035, 1.442695
    %v2039 = vpow.pop %v2038
    %v2040 = vmul.f32 %v2036, 1.442695
    %v2041 = vpow.pop %v2040
    %v2042 = vmul.f32 %v2037, 1.442695
    %v2043 = vpow.pop %v2042
    %v2044 = vadd.f32 %v2039, 1.0
    %v2045 = vadd.f32 %v2041, 1.0
    %v2046 = vadd.f32 %v2043, 1.0
    %v2047 = vrcp.pop %v2044
    %v2048 = vmul.f32 %v2044, %v2047
    %v2049 = vsub.f32 1.0, %v2048
    %v2050 = vmul.f32 %v2047, %v2049
    %v2051 = vadd.f32 %v2047, %v2050
    %vm2052 = vweird.f32 %v2044
    %vm2053 = vweird.f32 %v2047
    %vm2054 = vmor %vm2052, %vm2053
    %v2055 = vsel %vm2054, %v2047, %v2051
    %v2056 = vand.u32 2147483647, %v2044
    %vm2057 = vcmp.eq.f32.partialorder %v2056, 8.507059e+37
    %v2058 = vand.u32 %v2044, 2147483648
    %v2059 = vor.u32 1.1754944e-38, %v2058
    %v2060 = vsel %vm2057, %v2059, %v2055
    %v2061 = vmul.f32 1.0, %v2060
    %v2062 = vrcp.pop %v2045
    %v2063 = vmul.f32 %v2045, %v2062
    %v2064 = vsub.f32 1.0, %v2063
    %v2065 = vmul.f32 %v2062, %v2064
    %v2066 = vadd.f32 %v2062, %v2065
    %vm2067 = vweird.f32 %v2045
    %vm2068 = vweird.f32 %v2062
    %vm2069 = vmor %vm2067, %vm2068
    %v2070 = vsel %vm2069, %v2062, %v2066
    %v2071 = vand.u32 2147483647, %v2045
    %vm2072 = vcmp.eq.f32.partialorder %v2071, 8.507059e+37
    %v2073 = vand.u32 %v2045, 2147483648
    %v2074 = vor.u32 1.1754944e-38, %v2073
    %v2075 = vsel %vm2072, %v2074, %v2070
    %v2076 = vmul.f32 1.0, %v2075
    %v2077 = vrcp.pop %v2046
    %v2078 = vmul.f32 %v2046, %v2077
    %v2079 = vsub.f32 1.0, %v2078
    %v2080 = vmul.f32 %v2077, %v2079
    %v2081 = vadd.f32 %v2077, %v2080
    %vm2082 = vweird.f32 %v2046
    %vm2083 = vweird.f32 %v2077
    %vm2084 = vmor %vm2082, %vm2083
    %v2085 = vsel %vm2084, %v2077, %v2081
    %v2086 = vand.u32 2147483647, %v2046
    %vm2087 = vcmp.eq.f32.partialorder %v2086, 8.507059e+37
    %v2088 = vand.u32 %v2046, 2147483648
    %v2089 = vor.u32 1.1754944e-38, %v2088
    %v2090 = vsel %vm2087, %v2089, %v2085
    %v2091 = vmul.f32 1.0, %v2090
    %v2092 = vtanh.pop %v2034
    %v2093 = vmul.f32 %v2076, %v1706
    %v2094 = vmul.f32 %v2061, %v2092
    %v2095 = vadd.f32 %v2093, %v2094
    %v2096 = vtanh.pop %v2095
    %v2097 = vmul.f32 %v2091, %v2096
    %2098 = vmatpush.msra.mxu0 %v203
    %2099 = vmatpush.msra.mxu0 %v199
    %2100 = vmatpush.msra.mxu0 %v195
    %2101 = vmatpush.msra.mxu0 %v191
    %2102 = vmatpush.msra.mxu0 %v187
    %2103 = vmatpush.msra.mxu0 %v183
    %2104 = vmatpush.msra.mxu0 %v179
    %2105 = vmatpush.msra.mxu0 %v175
    %2106 = vmatpush.msra.mxu0 %v171
    %2107 = vmatpush.msra.mxu0 %v167
    %2108 = vmatpush.msra.mxu0 %v163
    %2109 = vmatpush.msra.mxu0 %v159
    %2110 = vmatpush.msra.mxu0 %v155
    %2111 = vmatpush.msra.mxu0 %v151
    %2112 = vmatpush.msra.mxu0 %v147
    %2113 = vmatpush.msra.mxu0 %v143
    %2114 = vmatmul.f32.gmra.mxu0 %v2097
    %v2115 = vpop.f32.mrf.mxu0
    %v2116 = vadd.f32 0.0, %v2115
    %2117 = vdwg.mxu0
    %2118 = vmatpush.msra.mxu0 %v204
    %2119 = vmatpush.msra.mxu0 %v200
    %2120 = vmatpush.msra.mxu0 %v196
    %2121 = vmatpush.msra.mxu0 %v192
    %2122 = vmatpush.msra.mxu0 %v188
    %2123 = vmatpush.msra.mxu0 %v184
    %2124 = vmatpush.msra.mxu0 %v180
    %2125 = vmatpush.msra.mxu0 %v176
    %2126 = vmatpush.msra.mxu0 %v172
    %2127 = vmatpush.msra.mxu0 %v168
    %2128 = vmatpush.msra.mxu0 %v164
    %2129 = vmatpush.msra.mxu0 %v160
    %2130 = vmatpush.msra.mxu0 %v156
    %2131 = vmatpush.msra.mxu0 %v152
    %2132 = vmatpush.msra.mxu0 %v148
    %2133 = vmatpush.msra.mxu0 %v144
    %2134 = vmatmul.f32.gmra.mxu0 %v2097
    %v2135 = vpop.f32.mrf.mxu0
    %v2136 = vadd.f32 0.0, %v2135
    %2137 = vdwg.mxu0
    %2138 = vmatpush.msra.mxu0 %v205
    %2139 = vmatpush.msra.mxu0 %v201
    %2140 = vmatpush.msra.mxu0 %v197
    %2141 = vmatpush.msra.mxu0 %v193
    %2142 = vmatpush.msra.mxu0 %v189
    %2143 = vmatpush.msra.mxu0 %v185
    %2144 = vmatpush.msra.mxu0 %v181
    %2145 = vmatpush.msra.mxu0 %v177
    %2146 = vmatpush.msra.mxu0 %v173
    %2147 = vmatpush.msra.mxu0 %v169
    %2148 = vmatpush.msra.mxu0 %v165
    %2149 = vmatpush.msra.mxu0 %v161
    %2150 = vmatpush.msra.mxu0 %v157
    %2151 = vmatpush.msra.mxu0 %v153
    %2152 = vmatpush.msra.mxu0 %v149
    %2153 = vmatpush.msra.mxu0 %v145
    %2154 = vmatmul.f32.gmra.mxu0 %v2097
    %v2155 = vpop.f32.mrf.mxu0
    %v2156 = vadd.f32 0.0, %v2155
    %2157 = vdwg.mxu0
    %2158 = vmatpush.msra.mxu0 %v206
    %2159 = vmatpush.msra.mxu0 %v202
    %2160 = vmatpush.msra.mxu0 %v198
    %2161 = vmatpush.msra.mxu0 %v194
    %2162 = vmatpush.msra.mxu0 %v190
    %2163 = vmatpush.msra.mxu0 %v186
    %2164 = vmatpush.msra.mxu0 %v182
    %2165 = vmatpush.msra.mxu0 %v178
    %2166 = vmatpush.msra.mxu0 %v174
    %2167 = vmatpush.msra.mxu0 %v170
    %2168 = vmatpush.msra.mxu0 %v166
    %2169 = vmatpush.msra.mxu0 %v162
    %2170 = vmatpush.msra.mxu0 %v158
    %2171 = vmatpush.msra.mxu0 %v154
    %2172 = vmatpush.msra.mxu0 %v150
    %2173 = vmatpush.msra.mxu0 %v146
    %2174 = vmatmul.f32.gmra.mxu0 %v2097
    %v2175 = vpop.f32.mrf.mxu0
    %v2176 = vadd.f32 0.0, %v2175
    %2177 = vdwg.mxu0
    %v2178 = vadd.f32 %v1874, %v2116
    %v2179 = vadd.f32 %v1894, %v2136
    %v2180 = vadd.f32 %v1914, %v2156
    %v2181 = vadd.f32 %v1934, %v2176
    %v2182 = vxor.u32 %v2178, 2147483648
    %v2183 = vxor.u32 %v2179, 2147483648
    %v2184 = vxor.u32 %v2180, 2147483648
    %v2185 = vmul.f32 %v2182, 1.442695
    %v2186 = vpow.pop %v2185
    %v2187 = vmul.f32 %v2183, 1.442695
    %v2188 = vpow.pop %v2187
    %v2189 = vmul.f32 %v2184, 1.442695
    %v2190 = vpow.pop %v2189
    %v2191 = vadd.f32 %v2186, 1.0
    %v2192 = vadd.f32 %v2188, 1.0
    %v2193 = vadd.f32 %v2190, 1.0
    %v2194 = vrcp.pop %v2191
    %v2195 = vmul.f32 %v2191, %v2194
    %v2196 = vsub.f32 1.0, %v2195
    %v2197 = vmul.f32 %v2194, %v2196
    %v2198 = vadd.f32 %v2194, %v2197
    %vm2199 = vweird.f32 %v2191
    %vm2200 = vweird.f32 %v2194
    %vm2201 = vmor %vm2199, %vm2200
    %v2202 = vsel %vm2201, %v2194, %v2198
    %v2203 = vand.u32 2147483647, %v2191
    %vm2204 = vcmp.eq.f32.partialorder %v2203, 8.507059e+37
    %v2205 = vand.u32 %v2191, 2147483648
    %v2206 = vor.u32 1.1754944e-38, %v2205
    %v2207 = vsel %vm2204, %v2206, %v2202
    %v2208 = vmul.f32 1.0, %v2207
    %v2209 = vrcp.pop %v2192
    %v2210 = vmul.f32 %v2192, %v2209
    %v2211 = vsub.f32 1.0, %v2210
    %v2212 = vmul.f32 %v2209, %v2211
    %v2213 = vadd.f32 %v2209, %v2212
    %vm2214 = vweird.f32 %v2192
    %vm2215 = vweird.f32 %v2209
    %vm2216 = vmor %vm2214, %vm2215
    %v2217 = vsel %vm2216, %v2209, %v2213
    %v2218 = vand.u32 2147483647, %v2192
    %vm2219 = vcmp.eq.f32.partialorder %v2218, 8.507059e+37
    %v2220 = vand.u32 %v2192, 2147483648
    %v2221 = vor.u32 1.1754944e-38, %v2220
    %v2222 = vsel %vm2219, %v2221, %v2217
    %v2223 = vmul.f32 1.0, %v2222
    %v2224 = vrcp.pop %v2193
    %v2225 = vmul.f32 %v2193, %v2224
    %v2226 = vsub.f32 1.0, %v2225
    %v2227 = vmul.f32 %v2224, %v2226
    %v2228 = vadd.f32 %v2224, %v2227
    %vm2229 = vweird.f32 %v2193
    %vm2230 = vweird.f32 %v2224
    %vm2231 = vmor %vm2229, %vm2230
    %v2232 = vsel %vm2231, %v2224, %v2228
    %v2233 = vand.u32 2147483647, %v2193
    %vm2234 = vcmp.eq.f32.partialorder %v2233, 8.507059e+37
    %v2235 = vand.u32 %v2193, 2147483648
    %v2236 = vor.u32 1.1754944e-38, %v2235
    %v2237 = vsel %vm2234, %v2236, %v2232
    %v2238 = vmul.f32 1.0, %v2237
    %v2239 = vtanh.pop %v2181
    %v2240 = vmul.f32 %v2223, %v1853
    %v2241 = vmul.f32 %v2208, %v2239
    %v2242 = vadd.f32 %v2240, %v2241
    %v2243 = vtanh.pop %v2242
    %v2244 = vmul.f32 %v2238, %v2243
    %2245 = vmatpush.msra.mxu0 %v267
    %2246 = vmatpush.msra.mxu0 %v263
    %2247 = vmatpush.msra.mxu0 %v259
    %2248 = vmatpush.msra.mxu0 %v255
    %2249 = vmatpush.msra.mxu0 %v251
    %2250 = vmatpush.msra.mxu0 %v247
    %2251 = vmatpush.msra.mxu0 %v243
    %2252 = vmatpush.msra.mxu0 %v239
    %2253 = vmatpush.msra.mxu0 %v235
    %2254 = vmatpush.msra.mxu0 %v231
    %2255 = vmatpush.msra.mxu0 %v227
    %2256 = vmatpush.msra.mxu0 %v223
    %2257 = vmatpush.msra.mxu0 %v219
    %2258 = vmatpush.msra.mxu0 %v215
    %2259 = vmatpush.msra.mxu0 %v211
    %2260 = vmatpush.msra.mxu0 %v207
    %2261 = vmatmul.f32.gmra.mxu0 %v2244
    %v2262 = vpop.f32.mrf.mxu0
    %v2263 = vadd.f32 %v293, %v2262
    %2264 = vdwg.mxu0
    %2265 = vmatpush.msra.mxu0 %v268
    %2266 = vmatpush.msra.mxu0 %v264
    %2267 = vmatpush.msra.mxu0 %v260
    %2268 = vmatpush.msra.mxu0 %v256
    %2269 = vmatpush.msra.mxu0 %v252
    %2270 = vmatpush.msra.mxu0 %v248
    %2271 = vmatpush.msra.mxu0 %v244
    %2272 = vmatpush.msra.mxu0 %v240
    %2273 = vmatpush.msra.mxu0 %v236
    %2274 = vmatpush.msra.mxu0 %v232
    %2275 = vmatpush.msra.mxu0 %v228
    %2276 = vmatpush.msra.mxu0 %v224
    %2277 = vmatpush.msra.mxu0 %v220
    %2278 = vmatpush.msra.mxu0 %v216
    %2279 = vmatpush.msra.mxu0 %v212
    %2280 = vmatpush.msra.mxu0 %v208
    %2281 = vmatmul.f32.gmra.mxu0 %v2244
    %v2282 = vpop.f32.mrf.mxu0
    %v2283 = vadd.f32 %v294, %v2282
    %2284 = vdwg.mxu0
    %2285 = vmatpush.msra.mxu0 %v269
    %2286 = vmatpush.msra.mxu0 %v265
    %2287 = vmatpush.msra.mxu0 %v261
    %2288 = vmatpush.msra.mxu0 %v257
    %2289 = vmatpush.msra.mxu0 %v253
    %2290 = vmatpush.msra.mxu0 %v249
    %2291 = vmatpush.msra.mxu0 %v245
    %2292 = vmatpush.msra.mxu0 %v241
    %2293 = vmatpush.msra.mxu0 %v237
    %2294 = vmatpush.msra.mxu0 %v233
    %2295 = vmatpush.msra.mxu0 %v229
    %2296 = vmatpush.msra.mxu0 %v225
    %2297 = vmatpush.msra.mxu0 %v221
    %2298 = vmatpush.msra.mxu0 %v217
    %2299 = vmatpush.msra.mxu0 %v213
    %2300 = vmatpush.msra.mxu0 %v209
    %2301 = vmatmul.f32.gmra.mxu0 %v2244
    %v2302 = vpop.f32.mrf.mxu0
    %v2303 = vadd.f32 %v295, %v2302
    %2304 = vdwg.mxu0
    %2305 = vmatpush.msra.mxu0 %v270
    %2306 = vmatpush.msra.mxu0 %v266
    %2307 = vmatpush.msra.mxu0 %v262
    %2308 = vmatpush.msra.mxu0 %v258
    %2309 = vmatpush.msra.mxu0 %v254
    %2310 = vmatpush.msra.mxu0 %v250
    %2311 = vmatpush.msra.mxu0 %v246
    %2312 = vmatpush.msra.mxu0 %v242
    %2313 = vmatpush.msra.mxu0 %v238
    %2314 = vmatpush.msra.mxu0 %v234
    %2315 = vmatpush.msra.mxu0 %v230
    %2316 = vmatpush.msra.mxu0 %v226
    %2317 = vmatpush.msra.mxu0 %v222
    %2318 = vmatpush.msra.mxu0 %v218
    %2319 = vmatpush.msra.mxu0 %v214
    %2320 = vmatpush.msra.mxu0 %v210
    %2321 = vmatmul.f32.gmra.mxu0 %v2244
    %v2322 = vpop.f32.mrf.mxu0
    %v2323 = vadd.f32 %v296, %v2322
    %2324 = vdwg.mxu0
    %s2325 = scalar_lea.vmem %s0, 40
    %v2326 = vld [vmem:[%s2325] sm:$0xff]
    %2328 = vset.pattern.permute.xlu0 0
    %2329 = vperm.xlu0 %2328, %v2326
    %v2330 = vpop.permute.xlu0 %2329
    %v2332 = vmul.f32 %v2330, %v273
    %v2333 = vmul.f32 %v2330, %v274
    %v2334 = vmul.f32 %v2330, %v275
    %v2335 = vmul.f32 %v2330, %v276
    %v2336 = vadd.f32 %v2332, %v283
    %v2337 = vadd.f32 %v2333, %v284
    %v2338 = vadd.f32 %v2334, %v285
    %v2339 = vadd.f32 %v2335, %v286
    %2340 = vmatpush.msra.mxu0 %v139
    %2341 = vmatpush.msra.mxu0 %v135
    %2342 = vmatpush.msra.mxu0 %v131
    %2343 = vmatpush.msra.mxu0 %v127
    %2344 = vmatpush.msra.mxu0 %v123
    %2345 = vmatpush.msra.mxu0 %v119
    %2346 = vmatpush.msra.mxu0 %v115
    %2347 = vmatpush.msra.mxu0 %v111
    %2348 = vmatpush.msra.mxu0 %v107
    %2349 = vmatpush.msra.mxu0 %v103
    %2350 = vmatpush.msra.mxu0 %v99
    %2351 = vmatpush.msra.mxu0 %v95
    %2352 = vmatpush.msra.mxu0 %v91
    %2353 = vmatpush.msra.mxu0 %v87
    %2354 = vmatpush.msra.mxu0 %v83
    %2355 = vmatpush.msra.mxu0 %v79
    %2356 = vmatmul.f32.gmra.mxu0 %v2097
    %v2357 = vpop.f32.mrf.mxu0
    %v2358 = vadd.f32 0.0, %v2357
    %2359 = vdwg.mxu0
    %2360 = vmatpush.msra.mxu0 %v140
    %2361 = vmatpush.msra.mxu0 %v136
    %2362 = vmatpush.msra.mxu0 %v132
    %2363 = vmatpush.msra.mxu0 %v128
    %2364 = vmatpush.msra.mxu0 %v124
    %2365 = vmatpush.msra.mxu0 %v120
    %2366 = vmatpush.msra.mxu0 %v116
    %2367 = vmatpush.msra.mxu0 %v112
    %2368 = vmatpush.msra.mxu0 %v108
    %2369 = vmatpush.msra.mxu0 %v104
    %2370 = vmatpush.msra.mxu0 %v100
    %2371 = vmatpush.msra.mxu0 %v96
    %2372 = vmatpush.msra.mxu0 %v92
    %2373 = vmatpush.msra.mxu0 %v88
    %2374 = vmatpush.msra.mxu0 %v84
    %2375 = vmatpush.msra.mxu0 %v80
    %2376 = vmatmul.f32.gmra.mxu0 %v2097
    %v2377 = vpop.f32.mrf.mxu0
    %v2378 = vadd.f32 0.0, %v2377
    %2379 = vdwg.mxu0
    %2380 = vmatpush.msra.mxu0 %v141
    %2381 = vmatpush.msra.mxu0 %v137
    %2382 = vmatpush.msra.mxu0 %v133
    %2383 = vmatpush.msra.mxu0 %v129
    %2384 = vmatpush.msra.mxu0 %v125
    %2385 = vmatpush.msra.mxu0 %v121
    %2386 = vmatpush.msra.mxu0 %v117
    %2387 = vmatpush.msra.mxu0 %v113
    %2388 = vmatpush.msra.mxu0 %v109
    %2389 = vmatpush.msra.mxu0 %v105
    %2390 = vmatpush.msra.mxu0 %v101
    %2391 = vmatpush.msra.mxu0 %v97
    %2392 = vmatpush.msra.mxu0 %v93
    %2393 = vmatpush.msra.mxu0 %v89
    %2394 = vmatpush.msra.mxu0 %v85
    %2395 = vmatpush.msra.mxu0 %v81
    %2396 = vmatmul.f32.gmra.mxu0 %v2097
    %v2397 = vpop.f32.mrf.mxu0
    %v2398 = vadd.f32 0.0, %v2397
    %2399 = vdwg.mxu0
    %2400 = vmatpush.msra.mxu0 %v142
    %2401 = vmatpush.msra.mxu0 %v138
    %2402 = vmatpush.msra.mxu0 %v134
    %2403 = vmatpush.msra.mxu0 %v130
    %2404 = vmatpush.msra.mxu0 %v126
    %2405 = vmatpush.msra.mxu0 %v122
    %2406 = vmatpush.msra.mxu0 %v118
    %2407 = vmatpush.msra.mxu0 %v114
    %2408 = vmatpush.msra.mxu0 %v110
    %2409 = vmatpush.msra.mxu0 %v106
    %2410 = vmatpush.msra.mxu0 %v102
    %2411 = vmatpush.msra.mxu0 %v98
    %2412 = vmatpush.msra.mxu0 %v94
    %2413 = vmatpush.msra.mxu0 %v90
    %2414 = vmatpush.msra.mxu0 %v86
    %2415 = vmatpush.msra.mxu0 %v82
    %2416 = vmatmul.f32.gmra.mxu0 %v2097
    %v2417 = vpop.f32.mrf.mxu0
    %v2418 = vadd.f32 0.0, %v2417
    %2419 = vdwg.mxu0
    %v2420 = vadd.f32 %v2336, %v2358
    %v2421 = vadd.f32 %v2337, %v2378
    %v2422 = vadd.f32 %v2338, %v2398
    %v2423 = vadd.f32 %v2339, %v2418
    %v2424 = vxor.u32 %v2420, 2147483648
    %v2425 = vxor.u32 %v2421, 2147483648
    %v2426 = vxor.u32 %v2422, 2147483648
    %v2427 = vmul.f32 %v2424, 1.442695
    %v2428 = vpow.pop %v2427
    %v2429 = vmul.f32 %v2425, 1.442695
    %v2430 = vpow.pop %v2429
    %v2431 = vmul.f32 %v2426, 1.442695
    %v2432 = vpow.pop %v2431
    %v2433 = vadd.f32 %v2428, 1.0
    %v2434 = vadd.f32 %v2430, 1.0
    %v2435 = vadd.f32 %v2432, 1.0
    %v2436 = vrcp.pop %v2433
    %v2437 = vmul.f32 %v2433, %v2436
    %v2438 = vsub.f32 1.0, %v2437
    %v2439 = vmul.f32 %v2436, %v2438
    %v2440 = vadd.f32 %v2436, %v2439
    %vm2441 = vweird.f32 %v2433
    %vm2442 = vweird.f32 %v2436
    %vm2443 = vmor %vm2441, %vm2442
    %v2444 = vsel %vm2443, %v2436, %v2440
    %v2445 = vand.u32 2147483647, %v2433
    %vm2446 = vcmp.eq.f32.partialorder %v2445, 8.507059e+37
    %v2447 = vand.u32 %v2433, 2147483648
    %v2448 = vor.u32 1.1754944e-38, %v2447
    %v2449 = vsel %vm2446, %v2448, %v2444
    %v2450 = vmul.f32 1.0, %v2449
    %v2451 = vrcp.pop %v2434
    %v2452 = vmul.f32 %v2434, %v2451
    %v2453 = vsub.f32 1.0, %v2452
    %v2454 = vmul.f32 %v2451, %v2453
    %v2455 = vadd.f32 %v2451, %v2454
    %vm2456 = vweird.f32 %v2434
    %vm2457 = vweird.f32 %v2451
    %vm2458 = vmor %vm2456, %vm2457
    %v2459 = vsel %vm2458, %v2451, %v2455
    %v2460 = vand.u32 2147483647, %v2434
    %vm2461 = vcmp.eq.f32.partialorder %v2460, 8.507059e+37
    %v2462 = vand.u32 %v2434, 2147483648
    %v2463 = vor.u32 1.1754944e-38, %v2462
    %v2464 = vsel %vm2461, %v2463, %v2459
    %v2465 = vmul.f32 1.0, %v2464
    %v2466 = vrcp.pop %v2435
    %v2467 = vmul.f32 %v2435, %v2466
    %v2468 = vsub.f32 1.0, %v2467
    %v2469 = vmul.f32 %v2466, %v2468
    %v2470 = vadd.f32 %v2466, %v2469
    %vm2471 = vweird.f32 %v2435
    %vm2472 = vweird.f32 %v2466
    %vm2473 = vmor %vm2471, %vm2472
    %v2474 = vsel %vm2473, %v2466, %v2470
    %v2475 = vand.u32 2147483647, %v2435
    %vm2476 = vcmp.eq.f32.partialorder %v2475, 8.507059e+37
    %v2477 = vand.u32 %v2435, 2147483648
    %v2478 = vor.u32 1.1754944e-38, %v2477
    %v2479 = vsel %vm2476, %v2478, %v2474
    %v2480 = vmul.f32 1.0, %v2479
    %v2481 = vtanh.pop %v2423
    %v2482 = vmul.f32 %v2465, %v2095
    %v2483 = vmul.f32 %v2450, %v2481
    %v2484 = vadd.f32 %v2482, %v2483
    %v2485 = vtanh.pop %v2484
    %v2486 = vmul.f32 %v2480, %v2485
    %2487 = vmatpush.msra.mxu0 %v203
    %2488 = vmatpush.msra.mxu0 %v199
    %2489 = vmatpush.msra.mxu0 %v195
    %2490 = vmatpush.msra.mxu0 %v191
    %2491 = vmatpush.msra.mxu0 %v187
    %2492 = vmatpush.msra.mxu0 %v183
    %2493 = vmatpush.msra.mxu0 %v179
    %2494 = vmatpush.msra.mxu0 %v175
    %2495 = vmatpush.msra.mxu0 %v171
    %2496 = vmatpush.msra.mxu0 %v167
    %2497 = vmatpush.msra.mxu0 %v163
    %2498 = vmatpush.msra.mxu0 %v159
    %2499 = vmatpush.msra.mxu0 %v155
    %2500 = vmatpush.msra.mxu0 %v151
    %2501 = vmatpush.msra.mxu0 %v147
    %2502 = vmatpush.msra.mxu0 %v143
    %2503 = vmatmul.f32.gmra.mxu0 %v2486
    %v2504 = vpop.f32.mrf.mxu0
    %v2505 = vadd.f32 0.0, %v2504
    %2506 = vdwg.mxu0
    %2507 = vmatpush.msra.mxu0 %v204
    %2508 = vmatpush.msra.mxu0 %v200
    %2509 = vmatpush.msra.mxu0 %v196
    %2510 = vmatpush.msra.mxu0 %v192
    %2511 = vmatpush.msra.mxu0 %v188
    %2512 = vmatpush.msra.mxu0 %v184
    %2513 = vmatpush.msra.mxu0 %v180
    %2514 = vmatpush.msra.mxu0 %v176
    %2515 = vmatpush.msra.mxu0 %v172
    %2516 = vmatpush.msra.mxu0 %v168
    %2517 = vmatpush.msra.mxu0 %v164
    %2518 = vmatpush.msra.mxu0 %v160
    %2519 = vmatpush.msra.mxu0 %v156
    %2520 = vmatpush.msra.mxu0 %v152
    %2521 = vmatpush.msra.mxu0 %v148
    %2522 = vmatpush.msra.mxu0 %v144
    %2523 = vmatmul.f32.gmra.mxu0 %v2486
    %v2524 = vpop.f32.mrf.mxu0
    %v2525 = vadd.f32 0.0, %v2524
    %2526 = vdwg.mxu0
    %2527 = vmatpush.msra.mxu0 %v205
    %2528 = vmatpush.msra.mxu0 %v201
    %2529 = vmatpush.msra.mxu0 %v197
    %2530 = vmatpush.msra.mxu0 %v193
    %2531 = vmatpush.msra.mxu0 %v189
    %2532 = vmatpush.msra.mxu0 %v185
    %2533 = vmatpush.msra.mxu0 %v181
    %2534 = vmatpush.msra.mxu0 %v177
    %2535 = vmatpush.msra.mxu0 %v173
    %2536 = vmatpush.msra.mxu0 %v169
    %2537 = vmatpush.msra.mxu0 %v165
    %2538 = vmatpush.msra.mxu0 %v161
    %2539 = vmatpush.msra.mxu0 %v157
    %2540 = vmatpush.msra.mxu0 %v153
    %2541 = vmatpush.msra.mxu0 %v149
    %2542 = vmatpush.msra.mxu0 %v145
    %2543 = vmatmul.f32.gmra.mxu0 %v2486
    %v2544 = vpop.f32.mrf.mxu0
    %v2545 = vadd.f32 0.0, %v2544
    %2546 = vdwg.mxu0
    %2547 = vmatpush.msra.mxu0 %v206
    %2548 = vmatpush.msra.mxu0 %v202
    %2549 = vmatpush.msra.mxu0 %v198
    %2550 = vmatpush.msra.mxu0 %v194
    %2551 = vmatpush.msra.mxu0 %v190
    %2552 = vmatpush.msra.mxu0 %v186
    %2553 = vmatpush.msra.mxu0 %v182
    %2554 = vmatpush.msra.mxu0 %v178
    %2555 = vmatpush.msra.mxu0 %v174
    %2556 = vmatpush.msra.mxu0 %v170
    %2557 = vmatpush.msra.mxu0 %v166
    %2558 = vmatpush.msra.mxu0 %v162
    %2559 = vmatpush.msra.mxu0 %v158
    %2560 = vmatpush.msra.mxu0 %v154
    %2561 = vmatpush.msra.mxu0 %v150
    %2562 = vmatpush.msra.mxu0 %v146
    %2563 = vmatmul.f32.gmra.mxu0 %v2486
    %v2564 = vpop.f32.mrf.mxu0
    %v2565 = vadd.f32 0.0, %v2564
    %2566 = vdwg.mxu0
    %v2567 = vadd.f32 %v2263, %v2505
    %v2568 = vadd.f32 %v2283, %v2525
    %v2569 = vadd.f32 %v2303, %v2545
    %v2570 = vadd.f32 %v2323, %v2565
    %v2571 = vxor.u32 %v2567, 2147483648
    %v2572 = vxor.u32 %v2568, 2147483648
    %v2573 = vxor.u32 %v2569, 2147483648
    %v2574 = vmul.f32 %v2571, 1.442695
    %v2575 = vpow.pop %v2574
    %v2576 = vmul.f32 %v2572, 1.442695
    %v2577 = vpow.pop %v2576
    %v2578 = vmul.f32 %v2573, 1.442695
    %v2579 = vpow.pop %v2578
    %v2580 = vadd.f32 %v2575, 1.0
    %v2581 = vadd.f32 %v2577, 1.0
    %v2582 = vadd.f32 %v2579, 1.0
    %v2583 = vrcp.pop %v2580
    %v2584 = vmul.f32 %v2580, %v2583
    %v2585 = vsub.f32 1.0, %v2584
    %v2586 = vmul.f32 %v2583, %v2585
    %v2587 = vadd.f32 %v2583, %v2586
    %vm2588 = vweird.f32 %v2580
    %vm2589 = vweird.f32 %v2583
    %vm2590 = vmor %vm2588, %vm2589
    %v2591 = vsel %vm2590, %v2583, %v2587
    %v2592 = vand.u32 2147483647, %v2580
    %vm2593 = vcmp.eq.f32.partialorder %v2592, 8.507059e+37
    %v2594 = vand.u32 %v2580, 2147483648
    %v2595 = vor.u32 1.1754944e-38, %v2594
    %v2596 = vsel %vm2593, %v2595, %v2591
    %v2597 = vmul.f32 1.0, %v2596
    %v2598 = vrcp.pop %v2581
    %v2599 = vmul.f32 %v2581, %v2598
    %v2600 = vsub.f32 1.0, %v2599
    %v2601 = vmul.f32 %v2598, %v2600
    %v2602 = vadd.f32 %v2598, %v2601
    %vm2603 = vweird.f32 %v2581
    %vm2604 = vweird.f32 %v2598
    %vm2605 = vmor %vm2603, %vm2604
    %v2606 = vsel %vm2605, %v2598, %v2602
    %v2607 = vand.u32 2147483647, %v2581
    %vm2608 = vcmp.eq.f32.partialorder %v2607, 8.507059e+37
    %v2609 = vand.u32 %v2581, 2147483648
    %v2610 = vor.u32 1.1754944e-38, %v2609
    %v2611 = vsel %vm2608, %v2610, %v2606
    %v2612 = vmul.f32 1.0, %v2611
    %v2613 = vrcp.pop %v2582
    %v2614 = vmul.f32 %v2582, %v2613
    %v2615 = vsub.f32 1.0, %v2614
    %v2616 = vmul.f32 %v2613, %v2615
    %v2617 = vadd.f32 %v2613, %v2616
    %vm2618 = vweird.f32 %v2582
    %vm2619 = vweird.f32 %v2613
    %vm2620 = vmor %vm2618, %vm2619
    %v2621 = vsel %vm2620, %v2613, %v2617
    %v2622 = vand.u32 2147483647, %v2582
    %vm2623 = vcmp.eq.f32.partialorder %v2622, 8.507059e+37
    %v2624 = vand.u32 %v2582, 2147483648
    %v2625 = vor.u32 1.1754944e-38, %v2624
    %v2626 = vsel %vm2623, %v2625, %v2621
    %v2627 = vmul.f32 1.0, %v2626
    %v2628 = vtanh.pop %v2570
    %v2629 = vmul.f32 %v2612, %v2242
    %v2630 = vmul.f32 %v2597, %v2628
    %v2631 = vadd.f32 %v2629, %v2630
    %v2632 = vtanh.pop %v2631
    %v2633 = vmul.f32 %v2627, %v2632
    %2634 = vmatpush.msra.mxu0 %v267
    %2635 = vmatpush.msra.mxu0 %v263
    %2636 = vmatpush.msra.mxu0 %v259
    %2637 = vmatpush.msra.mxu0 %v255
    %2638 = vmatpush.msra.mxu0 %v251
    %2639 = vmatpush.msra.mxu0 %v247
    %2640 = vmatpush.msra.mxu0 %v243
    %2641 = vmatpush.msra.mxu0 %v239
    %2642 = vmatpush.msra.mxu0 %v235
    %2643 = vmatpush.msra.mxu0 %v231
    %2644 = vmatpush.msra.mxu0 %v227
    %2645 = vmatpush.msra.mxu0 %v223
    %2646 = vmatpush.msra.mxu0 %v219
    %2647 = vmatpush.msra.mxu0 %v215
    %2648 = vmatpush.msra.mxu0 %v211
    %2649 = vmatpush.msra.mxu0 %v207
    %2650 = vmatmul.f32.gmra.mxu0 %v2633
    %v2651 = vpop.f32.mrf.mxu0
    %v2652 = vadd.f32 %v293, %v2651
    %2653 = vdwg.mxu0
    %2654 = vmatpush.msra.mxu0 %v268
    %2655 = vmatpush.msra.mxu0 %v264
    %2656 = vmatpush.msra.mxu0 %v260
    %2657 = vmatpush.msra.mxu0 %v256
    %2658 = vmatpush.msra.mxu0 %v252
    %2659 = vmatpush.msra.mxu0 %v248
    %2660 = vmatpush.msra.mxu0 %v244
    %2661 = vmatpush.msra.mxu0 %v240
    %2662 = vmatpush.msra.mxu0 %v236
    %2663 = vmatpush.msra.mxu0 %v232
    %2664 = vmatpush.msra.mxu0 %v228
    %2665 = vmatpush.msra.mxu0 %v224
    %2666 = vmatpush.msra.mxu0 %v220
    %2667 = vmatpush.msra.mxu0 %v216
    %2668 = vmatpush.msra.mxu0 %v212
    %2669 = vmatpush.msra.mxu0 %v208
    %2670 = vmatmul.f32.gmra.mxu0 %v2633
    %v2671 = vpop.f32.mrf.mxu0
    %v2672 = vadd.f32 %v294, %v2671
    %2673 = vdwg.mxu0
    %2674 = vmatpush.msra.mxu0 %v269
    %2675 = vmatpush.msra.mxu0 %v265
    %2676 = vmatpush.msra.mxu0 %v261
    %2677 = vmatpush.msra.mxu0 %v257
    %2678 = vmatpush.msra.mxu0 %v253
    %2679 = vmatpush.msra.mxu0 %v249
    %2680 = vmatpush.msra.mxu0 %v245
    %2681 = vmatpush.msra.mxu0 %v241
    %2682 = vmatpush.msra.mxu0 %v237
    %2683 = vmatpush.msra.mxu0 %v233
    %2684 = vmatpush.msra.mxu0 %v229
    %2685 = vmatpush.msra.mxu0 %v225
    %2686 = vmatpush.msra.mxu0 %v221
    %2687 = vmatpush.msra.mxu0 %v217
    %2688 = vmatpush.msra.mxu0 %v213
    %2689 = vmatpush.msra.mxu0 %v209
    %2690 = vmatmul.f32.gmra.mxu0 %v2633
    %v2691 = vpop.f32.mrf.mxu0
    %v2692 = vadd.f32 %v295, %v2691
    %2693 = vdwg.mxu0
    %2694 = vmatpush.msra.mxu0 %v270
    %2695 = vmatpush.msra.mxu0 %v266
    %2696 = vmatpush.msra.mxu0 %v262
    %2697 = vmatpush.msra.mxu0 %v258
    %2698 = vmatpush.msra.mxu0 %v254
    %2699 = vmatpush.msra.mxu0 %v250
    %2700 = vmatpush.msra.mxu0 %v246
    %2701 = vmatpush.msra.mxu0 %v242
    %2702 = vmatpush.msra.mxu0 %v238
    %2703 = vmatpush.msra.mxu0 %v234
    %2704 = vmatpush.msra.mxu0 %v230
    %2705 = vmatpush.msra.mxu0 %v226
    %2706 = vmatpush.msra.mxu0 %v222
    %2707 = vmatpush.msra.mxu0 %v218
    %2708 = vmatpush.msra.mxu0 %v214
    %2709 = vmatpush.msra.mxu0 %v210
    %2710 = vmatmul.f32.gmra.mxu0 %v2633
    %v2711 = vpop.f32.mrf.mxu0
    %v2712 = vadd.f32 %v296, %v2711
    %2713 = vdwg.mxu0
    %s2714 = scalar_lea.vmem %s0, 48
    %v2715 = vld [vmem:[%s2714] sm:$0xff]
    %2717 = vset.pattern.permute.xlu0 0
    %2718 = vperm.xlu0 %2717, %v2715
    %v2719 = vpop.permute.xlu0 %2718
    %v2721 = vmul.f32 %v2719, %v273
    %v2722 = vmul.f32 %v2719, %v274
    %v2723 = vmul.f32 %v2719, %v275
    %v2724 = vmul.f32 %v2719, %v276
    %v2725 = vadd.f32 %v2721, %v283
    %v2726 = vadd.f32 %v2722, %v284
    %v2727 = vadd.f32 %v2723, %v285
    %v2728 = vadd.f32 %v2724, %v286
    %2729 = vmatpush.msra.mxu0 %v139
    %2730 = vmatpush.msra.mxu0 %v135
    %2731 = vmatpush.msra.mxu0 %v131
    %2732 = vmatpush.msra.mxu0 %v127
    %2733 = vmatpush.msra.mxu0 %v123
    %2734 = vmatpush.msra.mxu0 %v119
    %2735 = vmatpush.msra.mxu0 %v115
    %2736 = vmatpush.msra.mxu0 %v111
    %2737 = vmatpush.msra.mxu0 %v107
    %2738 = vmatpush.msra.mxu0 %v103
    %2739 = vmatpush.msra.mxu0 %v99
    %2740 = vmatpush.msra.mxu0 %v95
    %2741 = vmatpush.msra.mxu0 %v91
    %2742 = vmatpush.msra.mxu0 %v87
    %2743 = vmatpush.msra.mxu0 %v83
    %2744 = vmatpush.msra.mxu0 %v79
    %2745 = vmatmul.f32.gmra.mxu0 %v2486
    %v2746 = vpop.f32.mrf.mxu0
    %v2747 = vadd.f32 0.0, %v2746
    %2748 = vdwg.mxu0
    %2749 = vmatpush.msra.mxu0 %v140
    %2750 = vmatpush.msra.mxu0 %v136
    %2751 = vmatpush.msra.mxu0 %v132
    %2752 = vmatpush.msra.mxu0 %v128
    %2753 = vmatpush.msra.mxu0 %v124
    %2754 = vmatpush.msra.mxu0 %v120
    %2755 = vmatpush.msra.mxu0 %v116
    %2756 = vmatpush.msra.mxu0 %v112
    %2757 = vmatpush.msra.mxu0 %v108
    %2758 = vmatpush.msra.mxu0 %v104
    %2759 = vmatpush.msra.mxu0 %v100
    %2760 = vmatpush.msra.mxu0 %v96
    %2761 = vmatpush.msra.mxu0 %v92
    %2762 = vmatpush.msra.mxu0 %v88
    %2763 = vmatpush.msra.mxu0 %v84
    %2764 = vmatpush.msra.mxu0 %v80
    %2765 = vmatmul.f32.gmra.mxu0 %v2486
    %v2766 = vpop.f32.mrf.mxu0
    %v2767 = vadd.f32 0.0, %v2766
    %2768 = vdwg.mxu0
    %2769 = vmatpush.msra.mxu0 %v141
    %2770 = vmatpush.msra.mxu0 %v137
    %2771 = vmatpush.msra.mxu0 %v133
    %2772 = vmatpush.msra.mxu0 %v129
    %2773 = vmatpush.msra.mxu0 %v125
    %2774 = vmatpush.msra.mxu0 %v121
    %2775 = vmatpush.msra.mxu0 %v117
    %2776 = vmatpush.msra.mxu0 %v113
    %2777 = vmatpush.msra.mxu0 %v109
    %2778 = vmatpush.msra.mxu0 %v105
    %2779 = vmatpush.msra.mxu0 %v101
    %2780 = vmatpush.msra.mxu0 %v97
    %2781 = vmatpush.msra.mxu0 %v93
    %2782 = vmatpush.msra.mxu0 %v89
    %2783 = vmatpush.msra.mxu0 %v85
    %2784 = vmatpush.msra.mxu0 %v81
    %2785 = vmatmul.f32.gmra.mxu0 %v2486
    %v2786 = vpop.f32.mrf.mxu0
    %v2787 = vadd.f32 0.0, %v2786
    %2788 = vdwg.mxu0
    %2789 = vmatpush.msra.mxu0 %v142
    %2790 = vmatpush.msra.mxu0 %v138
    %2791 = vmatpush.msra.mxu0 %v134
    %2792 = vmatpush.msra.mxu0 %v130
    %2793 = vmatpush.msra.mxu0 %v126
    %2794 = vmatpush.msra.mxu0 %v122
    %2795 = vmatpush.msra.mxu0 %v118
    %2796 = vmatpush.msra.mxu0 %v114
    %2797 = vmatpush.msra.mxu0 %v110
    %2798 = vmatpush.msra.mxu0 %v106
    %2799 = vmatpush.msra.mxu0 %v102
    %2800 = vmatpush.msra.mxu0 %v98
    %2801 = vmatpush.msra.mxu0 %v94
    %2802 = vmatpush.msra.mxu0 %v90
    %2803 = vmatpush.msra.mxu0 %v86
    %2804 = vmatpush.msra.mxu0 %v82
    %2805 = vmatmul.f32.gmra.mxu0 %v2486
    %v2806 = vpop.f32.mrf.mxu0
    %v2807 = vadd.f32 0.0, %v2806
    %2808 = vdwg.mxu0
    %v2809 = vadd.f32 %v2725, %v2747
    %v2810 = vadd.f32 %v2726, %v2767
    %v2811 = vadd.f32 %v2727, %v2787
    %v2812 = vadd.f32 %v2728, %v2807
    %v2813 = vxor.u32 %v2809, 2147483648
    %v2814 = vxor.u32 %v2810, 2147483648
    %v2815 = vxor.u32 %v2811, 2147483648
    %v2816 = vmul.f32 %v2813, 1.442695
    %v2817 = vpow.pop %v2816
    %v2818 = vmul.f32 %v2814, 1.442695
    %v2819 = vpow.pop %v2818
    %v2820 = vmul.f32 %v2815, 1.442695
    %v2821 = vpow.pop %v2820
    %v2822 = vadd.f32 %v2817, 1.0
    %v2823 = vadd.f32 %v2819, 1.0
    %v2824 = vadd.f32 %v2821, 1.0
    %v2825 = vrcp.pop %v2822
    %v2826 = vmul.f32 %v2822, %v2825
    %v2827 = vsub.f32 1.0, %v2826
    %v2828 = vmul.f32 %v2825, %v2827
    %v2829 = vadd.f32 %v2825, %v2828
    %vm2830 = vweird.f32 %v2822
    %vm2831 = vweird.f32 %v2825
    %vm2832 = vmor %vm2830, %vm2831
    %v2833 = vsel %vm2832, %v2825, %v2829
    %v2834 = vand.u32 2147483647, %v2822
    %vm2835 = vcmp.eq.f32.partialorder %v2834, 8.507059e+37
    %v2836 = vand.u32 %v2822, 2147483648
    %v2837 = vor.u32 1.1754944e-38, %v2836
    %v2838 = vsel %vm2835, %v2837, %v2833
    %v2839 = vmul.f32 1.0, %v2838
    %v2840 = vrcp.pop %v2823
    %v2841 = vmul.f32 %v2823, %v2840
    %v2842 = vsub.f32 1.0, %v2841
    %v2843 = vmul.f32 %v2840, %v2842
    %v2844 = vadd.f32 %v2840, %v2843
    %vm2845 = vweird.f32 %v2823
    %vm2846 = vweird.f32 %v2840
    %vm2847 = vmor %vm2845, %vm2846
    %v2848 = vsel %vm2847, %v2840, %v2844
    %v2849 = vand.u32 2147483647, %v2823
    %vm2850 = vcmp.eq.f32.partialorder %v2849, 8.507059e+37
    %v2851 = vand.u32 %v2823, 2147483648
    %v2852 = vor.u32 1.1754944e-38, %v2851
    %v2853 = vsel %vm2850, %v2852, %v2848
    %v2854 = vmul.f32 1.0, %v2853
    %v2855 = vrcp.pop %v2824
    %v2856 = vmul.f32 %v2824, %v2855
    %v2857 = vsub.f32 1.0, %v2856
    %v2858 = vmul.f32 %v2855, %v2857
    %v2859 = vadd.f32 %v2855, %v2858
    %vm2860 = vweird.f32 %v2824
    %vm2861 = vweird.f32 %v2855
    %vm2862 = vmor %vm2860, %vm2861
    %v2863 = vsel %vm2862, %v2855, %v2859
    %v2864 = vand.u32 2147483647, %v2824
    %vm2865 = vcmp.eq.f32.partialorder %v2864, 8.507059e+37
    %v2866 = vand.u32 %v2824, 2147483648
    %v2867 = vor.u32 1.1754944e-38, %v2866
    %v2868 = vsel %vm2865, %v2867, %v2863
    %v2869 = vmul.f32 1.0, %v2868
    %v2870 = vtanh.pop %v2812
    %v2871 = vmul.f32 %v2854, %v2484
    %v2872 = vmul.f32 %v2839, %v2870
    %v2873 = vadd.f32 %v2871, %v2872
    %v2874 = vtanh.pop %v2873
    %v2875 = vmul.f32 %v2869, %v2874
    %2876 = vmatpush.msra.mxu0 %v203
    %2877 = vmatpush.msra.mxu0 %v199
    %2878 = vmatpush.msra.mxu0 %v195
    %2879 = vmatpush.msra.mxu0 %v191
    %2880 = vmatpush.msra.mxu0 %v187
    %2881 = vmatpush.msra.mxu0 %v183
    %2882 = vmatpush.msra.mxu0 %v179
    %2883 = vmatpush.msra.mxu0 %v175
    %2884 = vmatpush.msra.mxu0 %v171
    %2885 = vmatpush.msra.mxu0 %v167
    %2886 = vmatpush.msra.mxu0 %v163
    %2887 = vmatpush.msra.mxu0 %v159
    %2888 = vmatpush.msra.mxu0 %v155
    %2889 = vmatpush.msra.mxu0 %v151
    %2890 = vmatpush.msra.mxu0 %v147
    %2891 = vmatpush.msra.mxu0 %v143
    %2892 = vmatmul.f32.gmra.mxu0 %v2875
    %v2893 = vpop.f32.mrf.mxu0
    %v2894 = vadd.f32 0.0, %v2893
    %2895 = vdwg.mxu0
    %2896 = vmatpush.msra.mxu0 %v204
    %2897 = vmatpush.msra.mxu0 %v200
    %2898 = vmatpush.msra.mxu0 %v196
    %2899 = vmatpush.msra.mxu0 %v192
    %2900 = vmatpush.msra.mxu0 %v188
    %2901 = vmatpush.msra.mxu0 %v184
    %2902 = vmatpush.msra.mxu0 %v180
    %2903 = vmatpush.msra.mxu0 %v176
    %2904 = vmatpush.msra.mxu0 %v172
    %2905 = vmatpush.msra.mxu0 %v168
    %2906 = vmatpush.msra.mxu0 %v164
    %2907 = vmatpush.msra.mxu0 %v160
    %2908 = vmatpush.msra.mxu0 %v156
    %2909 = vmatpush.msra.mxu0 %v152
    %2910 = vmatpush.msra.mxu0 %v148
    %2911 = vmatpush.msra.mxu0 %v144
    %2912 = vmatmul.f32.gmra.mxu0 %v2875
    %v2913 = vpop.f32.mrf.mxu0
    %v2914 = vadd.f32 0.0, %v2913
    %2915 = vdwg.mxu0
    %2916 = vmatpush.msra.mxu0 %v205
    %2917 = vmatpush.msra.mxu0 %v201
    %2918 = vmatpush.msra.mxu0 %v197
    %2919 = vmatpush.msra.mxu0 %v193
    %2920 = vmatpush.msra.mxu0 %v189
    %2921 = vmatpush.msra.mxu0 %v185
    %2922 = vmatpush.msra.mxu0 %v181
    %2923 = vmatpush.msra.mxu0 %v177
    %2924 = vmatpush.msra.mxu0 %v173
    %2925 = vmatpush.msra.mxu0 %v169
    %2926 = vmatpush.msra.mxu0 %v165
    %2927 = vmatpush.msra.mxu0 %v161
    %2928 = vmatpush.msra.mxu0 %v157
    %2929 = vmatpush.msra.mxu0 %v153
    %2930 = vmatpush.msra.mxu0 %v149
    %2931 = vmatpush.msra.mxu0 %v145
    %2932 = vmatmul.f32.gmra.mxu0 %v2875
    %v2933 = vpop.f32.mrf.mxu0
    %v2934 = vadd.f32 0.0, %v2933
    %2935 = vdwg.mxu0
    %2936 = vmatpush.msra.mxu0 %v206
    %2937 = vmatpush.msra.mxu0 %v202
    %2938 = vmatpush.msra.mxu0 %v198
    %2939 = vmatpush.msra.mxu0 %v194
    %2940 = vmatpush.msra.mxu0 %v190
    %2941 = vmatpush.msra.mxu0 %v186
    %2942 = vmatpush.msra.mxu0 %v182
    %2943 = vmatpush.msra.mxu0 %v178
    %2944 = vmatpush.msra.mxu0 %v174
    %2945 = vmatpush.msra.mxu0 %v170
    %2946 = vmatpush.msra.mxu0 %v166
    %2947 = vmatpush.msra.mxu0 %v162
    %2948 = vmatpush.msra.mxu0 %v158
    %2949 = vmatpush.msra.mxu0 %v154
    %2950 = vmatpush.msra.mxu0 %v150
    %2951 = vmatpush.msra.mxu0 %v146
    %2952 = vmatmul.f32.gmra.mxu0 %v2875
    %v2953 = vpop.f32.mrf.mxu0
    %v2954 = vadd.f32 0.0, %v2953
    %2955 = vdwg.mxu0
    %v2956 = vadd.f32 %v2652, %v2894
    %v2957 = vadd.f32 %v2672, %v2914
    %v2958 = vadd.f32 %v2692, %v2934
    %v2959 = vadd.f32 %v2712, %v2954
    %v2960 = vxor.u32 %v2956, 2147483648
    %v2961 = vxor.u32 %v2957, 2147483648
    %v2962 = vxor.u32 %v2958, 2147483648
    %v2963 = vmul.f32 %v2960, 1.442695
    %v2964 = vpow.pop %v2963
    %v2965 = vmul.f32 %v2961, 1.442695
    %v2966 = vpow.pop %v2965
    %v2967 = vmul.f32 %v2962, 1.442695
    %v2968 = vpow.pop %v2967
    %v2969 = vadd.f32 %v2964, 1.0
    %v2970 = vadd.f32 %v2966, 1.0
    %v2971 = vadd.f32 %v2968, 1.0
    %v2972 = vrcp.pop %v2969
    %v2973 = vmul.f32 %v2969, %v2972
    %v2974 = vsub.f32 1.0, %v2973
    %v2975 = vmul.f32 %v2972, %v2974
    %v2976 = vadd.f32 %v2972, %v2975
    %vm2977 = vweird.f32 %v2969
    %vm2978 = vweird.f32 %v2972
    %vm2979 = vmor %vm2977, %vm2978
    %v2980 = vsel %vm2979, %v2972, %v2976
    %v2981 = vand.u32 2147483647, %v2969
    %vm2982 = vcmp.eq.f32.partialorder %v2981, 8.507059e+37
    %v2983 = vand.u32 %v2969, 2147483648
    %v2984 = vor.u32 1.1754944e-38, %v2983
    %v2985 = vsel %vm2982, %v2984, %v2980
    %v2986 = vmul.f32 1.0, %v2985
    %v2987 = vrcp.pop %v2970
    %v2988 = vmul.f32 %v2970, %v2987
    %v2989 = vsub.f32 1.0, %v2988
    %v2990 = vmul.f32 %v2987, %v2989
    %v2991 = vadd.f32 %v2987, %v2990
    %vm2992 = vweird.f32 %v2970
    %vm2993 = vweird.f32 %v2987
    %vm2994 = vmor %vm2992, %vm2993
    %v2995 = vsel %vm2994, %v2987, %v2991
    %v2996 = vand.u32 2147483647, %v2970
    %vm2997 = vcmp.eq.f32.partialorder %v2996, 8.507059e+37
    %v2998 = vand.u32 %v2970, 2147483648
    %v2999 = vor.u32 1.1754944e-38, %v2998
    %v3000 = vsel %vm2997, %v2999, %v2995
    %v3001 = vmul.f32 1.0, %v3000
    %v3002 = vrcp.pop %v2971
    %v3003 = vmul.f32 %v2971, %v3002
    %v3004 = vsub.f32 1.0, %v3003
    %v3005 = vmul.f32 %v3002, %v3004
    %v3006 = vadd.f32 %v3002, %v3005
    %vm3007 = vweird.f32 %v2971
    %vm3008 = vweird.f32 %v3002
    %vm3009 = vmor %vm3007, %vm3008
    %v3010 = vsel %vm3009, %v3002, %v3006
    %v3011 = vand.u32 2147483647, %v2971
    %vm3012 = vcmp.eq.f32.partialorder %v3011, 8.507059e+37
    %v3013 = vand.u32 %v2971, 2147483648
    %v3014 = vor.u32 1.1754944e-38, %v3013
    %v3015 = vsel %vm3012, %v3014, %v3010
    %v3016 = vmul.f32 1.0, %v3015
    %v3017 = vtanh.pop %v2959
    %v3018 = vmul.f32 %v3001, %v2631
    %v3019 = vmul.f32 %v2986, %v3017
    %v3020 = vadd.f32 %v3018, %v3019
    %v3021 = vtanh.pop %v3020
    %v3022 = vmul.f32 %v3016, %v3021
    %3023 = vmatpush.msra.mxu0 %v267
    %3024 = vmatpush.msra.mxu0 %v263
    %3025 = vmatpush.msra.mxu0 %v259
    %3026 = vmatpush.msra.mxu0 %v255
    %3027 = vmatpush.msra.mxu0 %v251
    %3028 = vmatpush.msra.mxu0 %v247
    %3029 = vmatpush.msra.mxu0 %v243
    %3030 = vmatpush.msra.mxu0 %v239
    %3031 = vmatpush.msra.mxu0 %v235
    %3032 = vmatpush.msra.mxu0 %v231
    %3033 = vmatpush.msra.mxu0 %v227
    %3034 = vmatpush.msra.mxu0 %v223
    %3035 = vmatpush.msra.mxu0 %v219
    %3036 = vmatpush.msra.mxu0 %v215
    %3037 = vmatpush.msra.mxu0 %v211
    %3038 = vmatpush.msra.mxu0 %v207
    %3039 = vmatmul.f32.gmra.mxu0 %v3022
    %v3040 = vpop.f32.mrf.mxu0
    %v3041 = vadd.f32 %v293, %v3040
    %3042 = vdwg.mxu0
    %3043 = vmatpush.msra.mxu0 %v268
    %3044 = vmatpush.msra.mxu0 %v264
    %3045 = vmatpush.msra.mxu0 %v260
    %3046 = vmatpush.msra.mxu0 %v256
    %3047 = vmatpush.msra.mxu0 %v252
    %3048 = vmatpush.msra.mxu0 %v248
    %3049 = vmatpush.msra.mxu0 %v244
    %3050 = vmatpush.msra.mxu0 %v240
    %3051 = vmatpush.msra.mxu0 %v236
    %3052 = vmatpush.msra.mxu0 %v232
    %3053 = vmatpush.msra.mxu0 %v228
    %3054 = vmatpush.msra.mxu0 %v224
    %3055 = vmatpush.msra.mxu0 %v220
    %3056 = vmatpush.msra.mxu0 %v216
    %3057 = vmatpush.msra.mxu0 %v212
    %3058 = vmatpush.msra.mxu0 %v208
    %3059 = vmatmul.f32.gmra.mxu0 %v3022
    %v3060 = vpop.f32.mrf.mxu0
    %v3061 = vadd.f32 %v294, %v3060
    %3062 = vdwg.mxu0
    %3063 = vmatpush.msra.mxu0 %v269
    %3064 = vmatpush.msra.mxu0 %v265
    %3065 = vmatpush.msra.mxu0 %v261
    %3066 = vmatpush.msra.mxu0 %v257
    %3067 = vmatpush.msra.mxu0 %v253
    %3068 = vmatpush.msra.mxu0 %v249
    %3069 = vmatpush.msra.mxu0 %v245
    %3070 = vmatpush.msra.mxu0 %v241
    %3071 = vmatpush.msra.mxu0 %v237
    %3072 = vmatpush.msra.mxu0 %v233
    %3073 = vmatpush.msra.mxu0 %v229
    %3074 = vmatpush.msra.mxu0 %v225
    %3075 = vmatpush.msra.mxu0 %v221
    %3076 = vmatpush.msra.mxu0 %v217
    %3077 = vmatpush.msra.mxu0 %v213
    %3078 = vmatpush.msra.mxu0 %v209
    %3079 = vmatmul.f32.gmra.mxu0 %v3022
    %v3080 = vpop.f32.mrf.mxu0
    %v3081 = vadd.f32 %v295, %v3080
    %3082 = vdwg.mxu0
    %3083 = vmatpush.msra.mxu0 %v270
    %3084 = vmatpush.msra.mxu0 %v266
    %3085 = vmatpush.msra.mxu0 %v262
    %3086 = vmatpush.msra.mxu0 %v258
    %3087 = vmatpush.msra.mxu0 %v254
    %3088 = vmatpush.msra.mxu0 %v250
    %3089 = vmatpush.msra.mxu0 %v246
    %3090 = vmatpush.msra.mxu0 %v242
    %3091 = vmatpush.msra.mxu0 %v238
    %3092 = vmatpush.msra.mxu0 %v234
    %3093 = vmatpush.msra.mxu0 %v230
    %3094 = vmatpush.msra.mxu0 %v226
    %3095 = vmatpush.msra.mxu0 %v222
    %3096 = vmatpush.msra.mxu0 %v218
    %3097 = vmatpush.msra.mxu0 %v214
    %3098 = vmatpush.msra.mxu0 %v210
    %3099 = vmatmul.f32.gmra.mxu0 %v3022
    %v3100 = vpop.f32.mrf.mxu0
    %v3101 = vadd.f32 %v296, %v3100
    %3102 = vdwg.mxu0
    %s3103 = scalar_lea.vmem %s0, 56
    %v3104 = vld [vmem:[%s3103] sm:$0xff]
    %3106 = vset.pattern.permute.xlu0 0
    %3107 = vperm.xlu0 %3106, %v3104
    %v3108 = vpop.permute.xlu0 %3107
    %v3110 = vmul.f32 %v3108, %v273
    %v3111 = vmul.f32 %v3108, %v274
    %v3112 = vmul.f32 %v3108, %v275
    %v3113 = vmul.f32 %v3108, %v276
    %v3114 = vadd.f32 %v3110, %v283
    %v3115 = vadd.f32 %v3111, %v284
    %v3116 = vadd.f32 %v3112, %v285
    %v3117 = vadd.f32 %v3113, %v286
    %3118 = vmatpush.msra.mxu0 %v139
    %3119 = vmatpush.msra.mxu0 %v135
    %3120 = vmatpush.msra.mxu0 %v131
    %3121 = vmatpush.msra.mxu0 %v127
    %3122 = vmatpush.msra.mxu0 %v123
    %3123 = vmatpush.msra.mxu0 %v119
    %3124 = vmatpush.msra.mxu0 %v115
    %3125 = vmatpush.msra.mxu0 %v111
    %3126 = vmatpush.msra.mxu0 %v107
    %3127 = vmatpush.msra.mxu0 %v103
    %3128 = vmatpush.msra.mxu0 %v99
    %3129 = vmatpush.msra.mxu0 %v95
    %3130 = vmatpush.msra.mxu0 %v91
    %3131 = vmatpush.msra.mxu0 %v87
    %3132 = vmatpush.msra.mxu0 %v83
    %3133 = vmatpush.msra.mxu0 %v79
    %3134 = vmatmul.f32.gmra.mxu0 %v2875
    %v3135 = vpop.f32.mrf.mxu0
    %v3136 = vadd.f32 0.0, %v3135
    %3137 = vdwg.mxu0
    %3138 = vmatpush.msra.mxu0 %v140
    %3139 = vmatpush.msra.mxu0 %v136
    %3140 = vmatpush.msra.mxu0 %v132
    %3141 = vmatpush.msra.mxu0 %v128
    %3142 = vmatpush.msra.mxu0 %v124
    %3143 = vmatpush.msra.mxu0 %v120
    %3144 = vmatpush.msra.mxu0 %v116
    %3145 = vmatpush.msra.mxu0 %v112
    %3146 = vmatpush.msra.mxu0 %v108
    %3147 = vmatpush.msra.mxu0 %v104
    %3148 = vmatpush.msra.mxu0 %v100
    %3149 = vmatpush.msra.mxu0 %v96
    %3150 = vmatpush.msra.mxu0 %v92
    %3151 = vmatpush.msra.mxu0 %v88
    %3152 = vmatpush.msra.mxu0 %v84
    %3153 = vmatpush.msra.mxu0 %v80
    %3154 = vmatmul.f32.gmra.mxu0 %v2875
    %v3155 = vpop.f32.mrf.mxu0
    %v3156 = vadd.f32 0.0, %v3155
    %3157 = vdwg.mxu0
    %3158 = vmatpush.msra.mxu0 %v141
    %3159 = vmatpush.msra.mxu0 %v137
    %3160 = vmatpush.msra.mxu0 %v133
    %3161 = vmatpush.msra.mxu0 %v129
    %3162 = vmatpush.msra.mxu0 %v125
    %3163 = vmatpush.msra.mxu0 %v121
    %3164 = vmatpush.msra.mxu0 %v117
    %3165 = vmatpush.msra.mxu0 %v113
    %3166 = vmatpush.msra.mxu0 %v109
    %3167 = vmatpush.msra.mxu0 %v105
    %3168 = vmatpush.msra.mxu0 %v101
    %3169 = vmatpush.msra.mxu0 %v97
    %3170 = vmatpush.msra.mxu0 %v93
    %3171 = vmatpush.msra.mxu0 %v89
    %3172 = vmatpush.msra.mxu0 %v85
    %3173 = vmatpush.msra.mxu0 %v81
    %3174 = vmatmul.f32.gmra.mxu0 %v2875
    %v3175 = vpop.f32.mrf.mxu0
    %v3176 = vadd.f32 0.0, %v3175
    %3177 = vdwg.mxu0
    %3178 = vmatpush.msra.mxu0 %v142
    %3179 = vmatpush.msra.mxu0 %v138
    %3180 = vmatpush.msra.mxu0 %v134
    %3181 = vmatpush.msra.mxu0 %v130
    %3182 = vmatpush.msra.mxu0 %v126
    %3183 = vmatpush.msra.mxu0 %v122
    %3184 = vmatpush.msra.mxu0 %v118
    %3185 = vmatpush.msra.mxu0 %v114
    %3186 = vmatpush.msra.mxu0 %v110
    %3187 = vmatpush.msra.mxu0 %v106
    %3188 = vmatpush.msra.mxu0 %v102
    %3189 = vmatpush.msra.mxu0 %v98
    %3190 = vmatpush.msra.mxu0 %v94
    %3191 = vmatpush.msra.mxu0 %v90
    %3192 = vmatpush.msra.mxu0 %v86
    %3193 = vmatpush.msra.mxu0 %v82
    %3194 = vmatmul.f32.gmra.mxu0 %v2875
    %v3195 = vpop.f32.mrf.mxu0
    %v3196 = vadd.f32 0.0, %v3195
    %3197 = vdwg.mxu0
    %v3198 = vadd.f32 %v3114, %v3136
    %v3199 = vadd.f32 %v3115, %v3156
    %v3200 = vadd.f32 %v3116, %v3176
    %v3201 = vadd.f32 %v3117, %v3196
    %v3202 = vxor.u32 %v3198, 2147483648
    %v3203 = vxor.u32 %v3199, 2147483648
    %v3204 = vxor.u32 %v3200, 2147483648
    %v3205 = vmul.f32 %v3202, 1.442695
    %v3206 = vpow.pop %v3205
    %v3207 = vmul.f32 %v3203, 1.442695
    %v3208 = vpow.pop %v3207
    %v3209 = vmul.f32 %v3204, 1.442695
    %v3210 = vpow.pop %v3209
    %v3211 = vadd.f32 %v3206, 1.0
    %v3212 = vadd.f32 %v3208, 1.0
    %v3213 = vadd.f32 %v3210, 1.0
    %v3214 = vrcp.pop %v3211
    %v3215 = vmul.f32 %v3211, %v3214
    %v3216 = vsub.f32 1.0, %v3215
    %v3217 = vmul.f32 %v3214, %v3216
    %v3218 = vadd.f32 %v3214, %v3217
    %vm3219 = vweird.f32 %v3211
    %vm3220 = vweird.f32 %v3214
    %vm3221 = vmor %vm3219, %vm3220
    %v3222 = vsel %vm3221, %v3214, %v3218
    %v3223 = vand.u32 2147483647, %v3211
    %vm3224 = vcmp.eq.f32.partialorder %v3223, 8.507059e+37
    %v3225 = vand.u32 %v3211, 2147483648
    %v3226 = vor.u32 1.1754944e-38, %v3225
    %v3227 = vsel %vm3224, %v3226, %v3222
    %v3228 = vmul.f32 1.0, %v3227
    %v3229 = vrcp.pop %v3212
    %v3230 = vmul.f32 %v3212, %v3229
    %v3231 = vsub.f32 1.0, %v3230
    %v3232 = vmul.f32 %v3229, %v3231
    %v3233 = vadd.f32 %v3229, %v3232
    %vm3234 = vweird.f32 %v3212
    %vm3235 = vweird.f32 %v3229
    %vm3236 = vmor %vm3234, %vm3235
    %v3237 = vsel %vm3236, %v3229, %v3233
    %v3238 = vand.u32 2147483647, %v3212
    %vm3239 = vcmp.eq.f32.partialorder %v3238, 8.507059e+37
    %v3240 = vand.u32 %v3212, 2147483648
    %v3241 = vor.u32 1.1754944e-38, %v3240
    %v3242 = vsel %vm3239, %v3241, %v3237
    %v3243 = vmul.f32 1.0, %v3242
    %v3244 = vrcp.pop %v3213
    %v3245 = vmul.f32 %v3213, %v3244
    %v3246 = vsub.f32 1.0, %v3245
    %v3247 = vmul.f32 %v3244, %v3246
    %v3248 = vadd.f32 %v3244, %v3247
    %vm3249 = vweird.f32 %v3213
    %vm3250 = vweird.f32 %v3244
    %vm3251 = vmor %vm3249, %vm3250
    %v3252 = vsel %vm3251, %v3244, %v3248
    %v3253 = vand.u32 2147483647, %v3213
    %vm3254 = vcmp.eq.f32.partialorder %v3253, 8.507059e+37
    %v3255 = vand.u32 %v3213, 2147483648
    %v3256 = vor.u32 1.1754944e-38, %v3255
    %v3257 = vsel %vm3254, %v3256, %v3252
    %v3258 = vmul.f32 1.0, %v3257
    %v3259 = vtanh.pop %v3201
    %v3260 = vmul.f32 %v3243, %v2873
    %v3261 = vmul.f32 %v3228, %v3259
    %v3262 = vadd.f32 %v3260, %v3261
    %v3263 = vtanh.pop %v3262
    %v3264 = vmul.f32 %v3258, %v3263
    %3265 = vmatpush.msra.mxu0 %v203
    %3266 = vmatpush.msra.mxu0 %v199
    %3267 = vmatpush.msra.mxu0 %v195
    %3268 = vmatpush.msra.mxu0 %v191
    %3269 = vmatpush.msra.mxu0 %v187
    %3270 = vmatpush.msra.mxu0 %v183
    %3271 = vmatpush.msra.mxu0 %v179
    %3272 = vmatpush.msra.mxu0 %v175
    %3273 = vmatpush.msra.mxu0 %v171
    %3274 = vmatpush.msra.mxu0 %v167
    %3275 = vmatpush.msra.mxu0 %v163
    %3276 = vmatpush.msra.mxu0 %v159
    %3277 = vmatpush.msra.mxu0 %v155
    %3278 = vmatpush.msra.mxu0 %v151
    %3279 = vmatpush.msra.mxu0 %v147
    %3280 = vmatpush.msra.mxu0 %v143
    %3281 = vmatmul.f32.gmra.mxu0 %v3264
    %v3282 = vpop.f32.mrf.mxu0
    %v3283 = vadd.f32 0.0, %v3282
    %3284 = vdwg.mxu0
    %3285 = vmatpush.msra.mxu0 %v204
    %3286 = vmatpush.msra.mxu0 %v200
    %3287 = vmatpush.msra.mxu0 %v196
    %3288 = vmatpush.msra.mxu0 %v192
    %3289 = vmatpush.msra.mxu0 %v188
    %3290 = vmatpush.msra.mxu0 %v184
    %3291 = vmatpush.msra.mxu0 %v180
    %3292 = vmatpush.msra.mxu0 %v176
    %3293 = vmatpush.msra.mxu0 %v172
    %3294 = vmatpush.msra.mxu0 %v168
    %3295 = vmatpush.msra.mxu0 %v164
    %3296 = vmatpush.msra.mxu0 %v160
    %3297 = vmatpush.msra.mxu0 %v156
    %3298 = vmatpush.msra.mxu0 %v152
    %3299 = vmatpush.msra.mxu0 %v148
    %3300 = vmatpush.msra.mxu0 %v144
    %3301 = vmatmul.f32.gmra.mxu0 %v3264
    %v3302 = vpop.f32.mrf.mxu0
    %v3303 = vadd.f32 0.0, %v3302
    %3304 = vdwg.mxu0
    %3305 = vmatpush.msra.mxu0 %v205
    %3306 = vmatpush.msra.mxu0 %v201
    %3307 = vmatpush.msra.mxu0 %v197
    %3308 = vmatpush.msra.mxu0 %v193
    %3309 = vmatpush.msra.mxu0 %v189
    %3310 = vmatpush.msra.mxu0 %v185
    %3311 = vmatpush.msra.mxu0 %v181
    %3312 = vmatpush.msra.mxu0 %v177
    %3313 = vmatpush.msra.mxu0 %v173
    %3314 = vmatpush.msra.mxu0 %v169
    %3315 = vmatpush.msra.mxu0 %v165
    %3316 = vmatpush.msra.mxu0 %v161
    %3317 = vmatpush.msra.mxu0 %v157
    %3318 = vmatpush.msra.mxu0 %v153
    %3319 = vmatpush.msra.mxu0 %v149
    %3320 = vmatpush.msra.mxu0 %v145
    %3321 = vmatmul.f32.gmra.mxu0 %v3264
    %v3322 = vpop.f32.mrf.mxu0
    %v3323 = vadd.f32 0.0, %v3322
    %3324 = vdwg.mxu0
    %3325 = vmatpush.msra.mxu0 %v206
    %3326 = vmatpush.msra.mxu0 %v202
    %3327 = vmatpush.msra.mxu0 %v198
    %3328 = vmatpush.msra.mxu0 %v194
    %3329 = vmatpush.msra.mxu0 %v190
    %3330 = vmatpush.msra.mxu0 %v186
    %3331 = vmatpush.msra.mxu0 %v182
    %3332 = vmatpush.msra.mxu0 %v178
    %3333 = vmatpush.msra.mxu0 %v174
    %3334 = vmatpush.msra.mxu0 %v170
    %3335 = vmatpush.msra.mxu0 %v166
    %3336 = vmatpush.msra.mxu0 %v162
    %3337 = vmatpush.msra.mxu0 %v158
    %3338 = vmatpush.msra.mxu0 %v154
    %3339 = vmatpush.msra.mxu0 %v150
    %3340 = vmatpush.msra.mxu0 %v146
    %3341 = vmatmul.f32.gmra.mxu0 %v3264
    %v3342 = vpop.f32.mrf.mxu0
    %v3343 = vadd.f32 0.0, %v3342
    %3344 = vdwg.mxu0
    %v3345 = vadd.f32 %v3041, %v3283
    %v3346 = vadd.f32 %v3061, %v3303
    %v3347 = vadd.f32 %v3081, %v3323
    %v3348 = vadd.f32 %v3101, %v3343
    %v3349 = vxor.u32 %v3345, 2147483648
    %v3350 = vxor.u32 %v3346, 2147483648
    %v3351 = vxor.u32 %v3347, 2147483648
    %v3352 = vmul.f32 %v3349, 1.442695
    %v3353 = vpow.pop %v3352
    %v3354 = vmul.f32 %v3350, 1.442695
    %v3355 = vpow.pop %v3354
    %v3356 = vmul.f32 %v3351, 1.442695
    %v3357 = vpow.pop %v3356
    %v3358 = vadd.f32 %v3353, 1.0
    %v3359 = vadd.f32 %v3355, 1.0
    %v3360 = vadd.f32 %v3357, 1.0
    %v3361 = vrcp.pop %v3358
    %v3362 = vmul.f32 %v3358, %v3361
    %v3363 = vsub.f32 1.0, %v3362
    %v3364 = vmul.f32 %v3361, %v3363
    %v3365 = vadd.f32 %v3361, %v3364
    %vm3366 = vweird.f32 %v3358
    %vm3367 = vweird.f32 %v3361
    %vm3368 = vmor %vm3366, %vm3367
    %v3369 = vsel %vm3368, %v3361, %v3365
    %v3370 = vand.u32 2147483647, %v3358
    %vm3371 = vcmp.eq.f32.partialorder %v3370, 8.507059e+37
    %v3372 = vand.u32 %v3358, 2147483648
    %v3373 = vor.u32 1.1754944e-38, %v3372
    %v3374 = vsel %vm3371, %v3373, %v3369
    %v3375 = vmul.f32 1.0, %v3374
    %v3376 = vrcp.pop %v3359
    %v3377 = vmul.f32 %v3359, %v3376
    %v3378 = vsub.f32 1.0, %v3377
    %v3379 = vmul.f32 %v3376, %v3378
    %v3380 = vadd.f32 %v3376, %v3379
    %vm3381 = vweird.f32 %v3359
    %vm3382 = vweird.f32 %v3376
    %vm3383 = vmor %vm3381, %vm3382
    %v3384 = vsel %vm3383, %v3376, %v3380
    %v3385 = vand.u32 2147483647, %v3359
    %vm3386 = vcmp.eq.f32.partialorder %v3385, 8.507059e+37
    %v3387 = vand.u32 %v3359, 2147483648
    %v3388 = vor.u32 1.1754944e-38, %v3387
    %v3389 = vsel %vm3386, %v3388, %v3384
    %v3390 = vmul.f32 1.0, %v3389
    %v3391 = vrcp.pop %v3360
    %v3392 = vmul.f32 %v3360, %v3391
    %v3393 = vsub.f32 1.0, %v3392
    %v3394 = vmul.f32 %v3391, %v3393
    %v3395 = vadd.f32 %v3391, %v3394
    %vm3396 = vweird.f32 %v3360
    %vm3397 = vweird.f32 %v3391
    %vm3398 = vmor %vm3396, %vm3397
    %v3399 = vsel %vm3398, %v3391, %v3395
    %v3400 = vand.u32 2147483647, %v3360
    %vm3401 = vcmp.eq.f32.partialorder %v3400, 8.507059e+37
    %v3402 = vand.u32 %v3360, 2147483648
    %v3403 = vor.u32 1.1754944e-38, %v3402
    %v3404 = vsel %vm3401, %v3403, %v3399
    %v3405 = vmul.f32 1.0, %v3404
    %v3406 = vtanh.pop %v3348
    %v3407 = vmul.f32 %v3390, %v3020
    %v3408 = vmul.f32 %v3375, %v3406
    %v3409 = vadd.f32 %v3407, %v3408
    %v3410 = vtanh.pop %v3409
    %v3411 = vmul.f32 %v3405, %v3410
    %v3412 = vld [vmem:[%s7] sm:$0xff]
    %v3413 = vld [vmem:[%s7 + $0x8] sm:$0xff]
    %v3414 = vld [vmem:[%s7 + $0x10] sm:$0xff]
    %v3415 = vld [vmem:[%s7 + $0x18] sm:$0xff]
    %v3416 = vld [vmem:[%s7 + $0x20] sm:$0xff]
    %v3417 = vld [vmem:[%s7 + $0x28] sm:$0xff]
    %v3418 = vld [vmem:[%s7 + $0x30] sm:$0xff]
    %v3419 = vld [vmem:[%s7 + $0x38] sm:$0xff]
    %v3420 = vld [vmem:[%s7 + $0x40] sm:$0xff]
    %v3421 = vld [vmem:[%s7 + $0x48] sm:$0xff]
    %v3422 = vld [vmem:[%s7 + $0x50] sm:$0xff]
    %v3423 = vld [vmem:[%s7 + $0x58] sm:$0xff]
    %v3424 = vld [vmem:[%s7 + $0x60] sm:$0xff]
    %v3425 = vld [vmem:[%s7 + $0x68] sm:$0xff]
    %v3426 = vld [vmem:[%s7 + $0x70] sm:$0xff]
    %v3427 = vld [vmem:[%s7 + $0x78] sm:$0xff]
    %v3428 = vld [vmem:[%s8] sm:$0x1]
    %v3430 = vperm.slane %v3428, 0
    %3432 = vmatpush.msra.mxu0 %v3427
    %3433 = vmatpush.msra.mxu0 %v3426
    %3434 = vmatpush.msra.mxu0 %v3425
    %3435 = vmatpush.msra.mxu0 %v3424
    %3436 = vmatpush.msra.mxu0 %v3423
    %3437 = vmatpush.msra.mxu0 %v3422
    %3438 = vmatpush.msra.mxu0 %v3421
    %3439 = vmatpush.msra.mxu0 %v3420
    %3440 = vmatpush.msra.mxu0 %v3419
    %3441 = vmatpush.msra.mxu0 %v3418
    %3442 = vmatpush.msra.mxu0 %v3417
    %3443 = vmatpush.msra.mxu0 %v3416
    %3444 = vmatpush.msra.mxu0 %v3415
    %3445 = vmatpush.msra.mxu0 %v3414
    %3446 = vmatpush.msra.mxu0 %v3413
    %3447 = vmatpush.msra.mxu0 %v3412
    %3448 = vmatmul.f32.gmra.mxu0 %v3411
    %v3449 = vpop.f32.mrf.mxu0
    %v3450 = vadd.f32 %v3430, %v3449
    %3451 = vdwg.mxu0
    %3452 = vst [vmem:[%s9] sm:$0xff] %v3450
    // Predicated region
    $region50: #{forward.1} parent=1 // pred_check
      _
    $region51: #{forward.1} parent=1 // pred_check_branch
      %3454 = sbr.rel (0) target = $region53
    $region52: #{forward.1} parent=1 // pred_region
      _
    $region53: #{forward.1} parent=1 // pred_fallthru
      _
    // Predicated region
    $region54: #{forward.1} parent=1 // pred_check
      _
    $region55: #{forward.1} parent=1 // pred_check_branch
      %3456 = sbr.rel (0) target = $region57
    $region56: #{forward.1} parent=1 // pred_region
      _
    $region57: #{forward.1} parent=1 // pred_fallthru
      _
    %3457 = vsyncpa [#allocation3], 1
    %3458 = vsyncpa [#allocation5], 1

</llo_original>
